<compile_context>
chip_gen: v5e
topology: v5e:2x2
jax: 0.10.0
libtpu: 0.0.40
codegen_flags: <defaults>
</compile_context>

<pallas_src>
import functools

import jax
import jax.numpy as jnp
from jax.experimental import pallas as pl
from jax.experimental.pallas import tpu as pltpu


# ----------------------------------------------------------------------------
# Fused kernel.
#   inputs : x2d, (w_ih, b, w_hh) * num_layers, w_att, b_att, w1, b1, w2, b2, w3, b3
#   output : out (B, 1)
#   scratch: gx_ref   (T*B, 8H) f32  — per-time input projections of the current layer
#            rows_ref (T*B, 2H) f32  — per-time bidirectional outputs of the current layer
#
#   x2d   : (T*B, F)  time-major rows (row = t*B + b), batch padded to a sublane multiple
#   w_ih  : (Fin, 8H) bf16, gate columns [i_f i_b f_f f_b o_f o_b g_f g_b]
#   b     : (1, 8H)   f32,  b_ih + b_hh in the same column order
#   w_hh  : (2H, 8H)  bf16, rows [h_f | h_b] feed only their own direction's columns
# ----------------------------------------------------------------------------
def _fused_kernel(T, B, H, num_layers, *refs):
    refs = list(refs)
    x_ref = refs[0]
    pos = 1
    layer_refs = []
    for _ in range(num_layers):
        layer_refs.append(tuple(refs[pos:pos + 3]))
        pos += 3
    (w_att_ref, b_att_ref, w1_ref, b1_ref,
     w2_ref, b2_ref, w3_ref, b3_ref) = refs[pos:pos + 8]
    out_ref = refs[pos + 8]
    gx_ref = refs[pos + 9]
    rows_ref = refs[pos + 10]

    G2, G4, G6, G8 = 2 * H, 4 * H, 6 * H, 8 * H

    # Hoisted once (JAX does not CSE broadcasts): lane c belongs to the forward direction
    # iff (c mod 2H) < H under the gate-type-grouped column layout.
    lane = jax.lax.broadcasted_iota(jnp.int32, (B, G8), 1)
    fwd_mask = (lane % G2) < H

    def run_layer(w_hh_ref):
        """Bidirectional recurrence, fully unrolled over T (static).

        State is fused across directions: c, h are (B, 2H) = [fwd | bwd] lanes.
        One (B, 2H) @ (2H, 8H) bf16 MXU dot per step drives both directions; the backward
        direction walks time in reverse purely via indexing (no [::-1] copies, no concats).
        """
        c = jnp.zeros((B, G2), jnp.float32)
        h = jnp.zeros((B, G2), jnp.float32)
        for s in range(T):
            t_f = s
            t_b = T - 1 - s
            # Mix x-projections: fwd gate columns from time t_f, bwd gate columns from time t_b.
            # Full-width VPU select, independent of h -> off the serial dependency chain.
            gx_f = gx_ref[t_f * B:(t_f + 1) * B, :]
            gx_b = gx_ref[t_b * B:(t_b + 1) * B, :]
            gx = jnp.where(fwd_mask, gx_f, gx_b)                               # (B, 8H)

            gates = gx + jnp.dot(h.astype(jnp.bfloat16), w_hh_ref[...],
                                 preferred_element_type=jnp.float32)           # (B, 8H)

            sg = jax.nn.sigmoid(gates[:, :G6])      # i/f/o columns only (6H wide)
            g = jnp.tanh(gates[:, G6:])             # g columns only      (2H wide)
            c = sg[:, G2:G4] * c + sg[:, :G2] * g   # (B, 2H), both directions at once
            h = sg[:, G4:G6] * jnp.tanh(c)          # (B, 2H) = [h_f | h_b]

            # Per-time bidirectional outputs (original time order). Stores are off the
            # critical recurrence chain; the scheduler overlaps them with the next dot.
            rows_ref[t_f * B:(t_f + 1) * B, :H] = h[:, :H]
            rows_ref[t_b * B:(t_b + 1) * B, H:] = h[:, H:]

    # ---- layer 1: one batched (T*B, F) @ (F, 8H) bf16 input projection, bias added once ----
    w_ih_ref, b_ref, w_hh_ref = layer_refs[0]
    gx_ref[...] = (jnp.dot(x_ref[...].astype(jnp.bfloat16), w_ih_ref[...],
                           preferred_element_type=jnp.float32) + b_ref[...])
    run_layer(w_hh_ref)

    # ---- deeper layers: projection batched on the rows slab (single dot), then recurrence ----
    for li in range(1, num_layers):
        w_ih_ref, b_ref, w_hh_ref = layer_refs[li]
        gx_ref[...] = (jnp.dot(rows_ref[...].astype(jnp.bfloat16), w_ih_ref[...],
                               preferred_element_type=jnp.float32) + b_ref[...])
        run_layer(w_hh_ref)
        # inter-layer dropout: identity in eval mode

    # ---- attention pooling over time: one batched score dot + unrolled softmax ----
    rows = rows_ref[...]                                                       # (T*B, 2H) f32
    scores = (jnp.dot(rows.astype(jnp.bfloat16), w_att_ref[...],
                      preferred_element_type=jnp.float32) + b_att_ref[...])    # (T*B, 1)
    cols = [scores[t * B:(t + 1) * B, :] for t in range(T)]                    # T x (B, 1)
    m = cols[0]
    for t in range(1, T):
        m = jnp.maximum(m, cols[t])
    es = [jnp.exp(cols[t] - m) for t in range(T)]
    denom = es[0]
    for t in range(1, T):
        denom = denom + es[t]
    inv = pl.reciprocal(denom, approx=True)                                    # EUP vrcp
    ctx = (es[0] * inv) * rows[0:B, :]
    for t in range(1, T):
        ctx = ctx + (es[t] * inv) * rows[t * B:(t + 1) * B, :]                 # (B, 2H)

    # ---- MLP head: fc1/fc2 carry folded eval-mode BatchNorm; dropout = identity ----
    h1 = jnp.maximum(
        jnp.dot(ctx.astype(jnp.bfloat16), w1_ref[...],
                preferred_element_type=jnp.float32) + b1_ref[...], 0.0)
    h2 = jnp.maximum(
        jnp.dot(h1.astype(jnp.bfloat16), w2_ref[...],
                preferred_element_type=jnp.float32) + b2_ref[...], 0.0)
    y = jnp.dot(h2.astype(jnp.bfloat16), w3_ref[...],
                preferred_element_type=jnp.float32) + b3_ref[...]
    out_ref[...] = jax.nn.sigmoid(y)


# ----------------------------------------------------------------------------
# Wrapper: pad batch to a sublane multiple, flatten to time-major 2-D rows, one pallas_call.
# ----------------------------------------------------------------------------
def lstm_network_forward(x, packed_layers, head):
    """x: (B, T, F) float32 -> (B, 1) probabilities."""
    B, T, F = x.shape
    H = packed_layers[0][2].shape[0] // 2           # w_hh is (2H, 8H)
    B_p = ((B + 7) // 8) * 8                        # pad batch to full sublane occupancy

    x_p = jnp.zeros((B_p, T, F), x.dtype).at[:B].set(x)
    x2d = jnp.transpose(x_p, (1, 0, 2)).reshape(T * B_p, F)   # tiny one-off XLA op

    flat = [x2d]
    for (w_ih, b, w_hh) in packed_layers:
        flat += [w_ih, b, w_hh]
    flat += list(head)

    vmem = pl.BlockSpec(memory_space=pltpu.MemorySpace.VMEM)
    kernel = functools.partial(_fused_kernel, T, B_p, H, len(packed_layers))
    out = pl.pallas_call(
        kernel,
        out_shape=jax.ShapeDtypeStruct((B_p, 1), jnp.float32),
        in_specs=[vmem] * len(flat),
        out_specs=vmem,
        scratch_shapes=[pltpu.VMEM((T * B_p, 8 * H), jnp.float32),   # gx slab (reused per layer)
                        pltpu.VMEM((T * B_p, 2 * H), jnp.float32)],  # bidirectional rows slab
    )(*flat)
    return out[:B]


# ----------------------------------------------------------------------------
# Parameters: PyTorch-native shapes, then host-side repack:
#   * transposes + gate-type-grouped column order [i_f i_b f_f f_b o_f o_b g_f g_b]
#   * block-structured recurrent matrix (rows [h_f | h_b] feed only their direction's columns)
#   * combined LSTM biases (b_ih + b_hh), eval-mode BatchNorm folded into fc1/fc2
#   * matmul weights stored as bf16 (MXU-native); biases stay f32
# ----------------------------------------------------------------------------
def _dense(key, shape, scale=0.1):
    return (scale * jax.random.normal(key, shape)).astype(jnp.float32)


def init_raw_params(key, input_size, hidden_size, num_layers=2):
    H = hidden_size
    D = 2 * H  # bidirectional
    ks = iter(jax.random.split(key, 8 * num_layers + 16))
    layers = []
    fin = input_size
    for _ in range(num_layers):
        layers.append(dict(
            w_ih_f=_dense(next(ks), (4 * H, fin)), w_hh_f=_dense(next(ks), (4 * H, H)),
            b_ih_f=jnp.zeros((4 * H,), jnp.float32), b_hh_f=jnp.zeros((4 * H,), jnp.float32),
            w_ih_b=_dense(next(ks), (4 * H, fin)), w_hh_b=_dense(next(ks), (4 * H, H)),
            b_ih_b=jnp.zeros((4 * H,), jnp.float32), b_hh_b=jnp.zeros((4 * H,), jnp.float32),
        ))
        fin = D
    head = dict(
        w_att=_dense(next(ks), (1, D)), b_att=jnp.zeros((1,), jnp.float32),
        w1=_dense(next(ks), (H, D)), b1=jnp.zeros((H,), jnp.float32),
        bn1_g=jnp.ones((H,), jnp.float32), bn1_b=jnp.zeros((H,), jnp.float32),
        bn1_m=jnp.zeros((H,), jnp.float32), bn1_v=jnp.ones((H,), jnp.float32),
        w2=_dense(next(ks), (32, H)), b2=jnp.zeros((32,), jnp.float32),
        bn2_g=jnp.ones((32,), jnp.float32), bn2_b=jnp.zeros((32,), jnp.float32),
        bn2_m=jnp.zeros((32,), jnp.float32), bn2_v=jnp.ones((32,), jnp.float32),
        w3=_dense(next(ks), (1, 32)), b3=jnp.zeros((1,), jnp.float32),
    )
    return dict(lstm=layers, head=head)


def pack_params(raw, eps=1e-5):
    packed_layers = []
    for lp in raw["lstm"]:
        H = lp["w_hh_f"].shape[1]
        # PyTorch row blocks are [i, f, g, o]; our column blocks are [i, f, o, g] (g last so
        # tanh columns are contiguous), each gate type as [fwd | bwd].
        order = (0, 1, 3, 2)

        def gblk(m, gi):
            return m[gi * H:(gi + 1) * H]

        ih_cols, b_cols = [], []
        bsum_f = lp["b_ih_f"] + lp["b_hh_f"]
        bsum_b = lp["b_ih_b"] + lp["b_hh_b"]
        for gi in order:
            ih_cols += [gblk(lp["w_ih_f"], gi).T, gblk(lp["w_ih_b"], gi).T]
            b_cols += [gblk(bsum_f, gi), gblk(bsum_b, gi)]
        w_ih = jnp.concatenate(ih_cols, axis=1).astype(jnp.bfloat16)           # (Fin, 8H)
        b = jnp.concatenate(b_cols)[None, :].astype(jnp.float32)               # (1, 8H)

        # recurrent weights: (2H, 8H), rows [h_f | h_b] -> own direction's gate columns only
        w_hh = jnp.zeros((2 * H, 8 * H), jnp.float32)
        for k, gi in enumerate(order):
            w_hh = w_hh.at[:H, (2 * k) * H:(2 * k + 1) * H].set(gblk(lp["w_hh_f"], gi).T)
            w_hh = w_hh.at[H:, (2 * k + 1) * H:(2 * k + 2) * H].set(gblk(lp["w_hh_b"], gi).T)
        packed_layers.append((w_ih, b, w_hh.astype(jnp.bfloat16)))

    hp = raw["head"]
    s1 = hp["bn1_g"] / jnp.sqrt(hp["bn1_v"] + eps)
    s2 = hp["bn2_g"] / jnp.sqrt(hp["bn2_v"] + eps)
    head = (
        hp["w_att"].T.astype(jnp.bfloat16),                        # (2H, 1)
        hp["b_att"][None, :].astype(jnp.float32),                  # (1, 1)
        (hp["w1"].T * s1[None, :]).astype(jnp.bfloat16),           # fc1 with BN1 folded
        ((hp["b1"] - hp["bn1_m"]) * s1 + hp["bn1_b"])[None, :].astype(jnp.float32),
        (hp["w2"].T * s2[None, :]).astype(jnp.bfloat16),           # fc2 with BN2 folded
        ((hp["b2"] - hp["bn2_m"]) * s2 + hp["bn2_b"])[None, :].astype(jnp.float32),
        hp["w3"].T.astype(jnp.bfloat16),                           # (32, 1)
        hp["b3"][None, :].astype(jnp.float32),                     # (1, 1)
    )
    return packed_layers, head


if __name__ == "__main__":
    B, T, F = 4, 8, 8          # batch, seq_len, input_size
    H = 32                     # hidden_size (4H = 128 lanes per direction)

    key = jax.random.PRNGKey(0)
    k_x, k_p = jax.random.split(key)
    x = jax.random.normal(k_x, (B, T, F), dtype=jnp.float32)

    raw = init_raw_params(k_p, input_size=F, hidden_size=H, num_layers=2)
    packed_layers, head = pack_params(raw)

    fwd = jax.jit(lstm_network_forward)
    y = fwd(x, packed_layers, head)
    y = jax.block_until_ready(y)

    assert y.shape == (B, 1), y.shape
    assert bool(jnp.all(jnp.isfinite(y)))
    assert bool(jnp.all((y >= 0.0) & (y <= 1.0)))
    print("KERNEL_OK")
</pallas_src>

<mosaic_0001>
module attributes {stable_mosaic.version = 11 : i64} {
  func.func @_fused_kernel(%arg0: memref<64x8xf32, #tpu.memory_space<vmem>>, %arg1: memref<8x256xbf16, #tpu.memory_space<vmem>>, %arg2: memref<1x256xf32, #tpu.memory_space<vmem>>, %arg3: memref<64x256xbf16, #tpu.memory_space<vmem>>, %arg4: memref<64x256xbf16, #tpu.memory_space<vmem>>, %arg5: memref<1x256xf32, #tpu.memory_space<vmem>>, %arg6: memref<64x256xbf16, #tpu.memory_space<vmem>>, %arg7: memref<64x1xbf16, #tpu.memory_space<vmem>>, %arg8: memref<1x1xf32, #tpu.memory_space<vmem>>, %arg9: memref<64x32xbf16, #tpu.memory_space<vmem>>, %arg10: memref<1x32xf32, #tpu.memory_space<vmem>>, %arg11: memref<32x32xbf16, #tpu.memory_space<vmem>>, %arg12: memref<1x32xf32, #tpu.memory_space<vmem>>, %arg13: memref<32x1xbf16, #tpu.memory_space<vmem>>, %arg14: memref<1x1xf32, #tpu.memory_space<vmem>>, %arg15: memref<8x1xf32, #tpu.memory_space<vmem>>, %arg16: memref<64x256xf32, #tpu.memory_space<vmem>>, %arg17: memref<64x64xf32, #tpu.memory_space<vmem>>) attributes {dimension_semantics = [], scalar_prefetch = 0 : i64, scratch_operands = 2 : i64, tpu.core_type = #tpu.core_type<tc>} {
    %0 = tpu.iota {dimensions = array<i32: 1>} : vector<8x256xi32>
    %c64_i32 = arith.constant 64 : i32
    %c0_i32 = arith.constant 0 : i32
    %1 = arith.cmpi eq, %c64_i32, %c0_i32 : i32
    %c1_i32 = arith.constant 1 : i32
    %2 = arith.select %1, %c1_i32, %c64_i32 : i32
    %3 = vector.broadcast %2 : i32 to vector<8x256xi32>
    %4 = arith.remsi %0, %3 : vector<8x256xi32>
    %c0_i32_0 = arith.constant 0 : i32
    %5 = vector.broadcast %c0_i32_0 : i32 to vector<8x256xi32>
    %6 = arith.cmpi ne, %4, %5 : vector<8x256xi32>
    %c0_i32_1 = arith.constant 0 : i32
    %7 = vector.broadcast %c0_i32_1 : i32 to vector<8x256xi32>
    %8 = arith.cmpi slt, %4, %7 : vector<8x256xi32>
    %c0_i32_2 = arith.constant 0 : i32
    %9 = arith.cmpi slt, %2, %c0_i32_2 : i32
    %10 = vector.broadcast %9 : i1 to vector<8x256xi1>
    %11 = vector.broadcast %10 : vector<8x256xi1> to vector<8x256xi1>
    %12 = arith.xori %8, %11 : vector<8x256xi1>
    %13 = arith.andi %12, %6 : vector<8x256xi1>
    %14 = vector.broadcast %2 : i32 to vector<8x256xi32>
    %15 = arith.addi %4, %14 : vector<8x256xi32>
    %16 = arith.select %13, %15, %4 : vector<8x256xi1>, vector<8x256xi32>
    %c32_i32 = arith.constant 32 : i32
    %17 = vector.broadcast %c32_i32 : i32 to vector<8x256xi32>
    %18 = arith.cmpi slt, %16, %17 : vector<8x256xi32>
    %c0 = arith.constant 0 : index
    %c0_3 = arith.constant 0 : index
    %19 = vector.load %arg0[%c0, %c0_3] : memref<64x8xf32, #tpu.memory_space<vmem>>, vector<64x8xf32>
    %20 = arith.truncf %19 : vector<64x8xf32> to vector<64x8xbf16>
    %c0_4 = arith.constant 0 : index
    %c0_5 = arith.constant 0 : index
    %21 = vector.load %arg1[%c0_4, %c0_5] : memref<8x256xbf16, #tpu.memory_space<vmem>>, vector<8x256xbf16>
    %cst = arith.constant dense<0.000000e+00> : vector<64x256xf32>
    %22 = tpu.matmul %20, %21, %cst {dimension_numbers = #tpu.dot_dimension_numbers<[1], [0], [0], [1], [0, 0, 1, 1], [], []>} : vector<64x8xbf16>, vector<8x256xbf16>, vector<64x256xf32> -> vector<64x256xf32>
    %c0_6 = arith.constant 0 : index
    %c0_7 = arith.constant 0 : index
    %23 = vector.load %arg2[%c0_6, %c0_7] : memref<1x256xf32, #tpu.memory_space<vmem>>, vector<1x256xf32>
    %24 = vector.broadcast %23 : vector<1x256xf32> to vector<64x256xf32>
    %25 = arith.addf %22, %24 : vector<64x256xf32>
    %c0_8 = arith.constant 0 : index
    %c0_9 = arith.constant 0 : index
    %26 = vector.load %arg16[%c0_8, %c0_9] : memref<64x256xf32, #tpu.memory_space<vmem>>, vector<64x256xf32>
    tpu.vector_store %arg16[%c0_8, %c0_9], %25 {strides = array<i32>} : memref<64x256xf32, #tpu.memory_space<vmem>>, vector<64x256xf32>,
    %cst_10 = arith.constant 0.000000e+00 : f32
    %27 = vector.broadcast %cst_10 : f32 to vector<8x64xf32>
    %cst_11 = arith.constant 0.000000e+00 : f32
    %28 = vector.broadcast %cst_11 : f32 to vector<8x64xf32>
    %c0_12 = arith.constant 0 : index
    %c0_13 = arith.constant 0 : index
    %29 = vector.load %arg16[%c0_12, %c0_13] : memref<64x256xf32, #tpu.memory_space<vmem>>, vector<8x256xf32>
    %c56 = arith.constant 56 : index
    %c0_14 = arith.constant 0 : index
    %30 = vector.load %arg16[%c56, %c0_14] : memref<64x256xf32, #tpu.memory_space<vmem>>, vector<8x256xf32>
    %31 = arith.select %18, %29, %30 : vector<8x256xi1>, vector<8x256xf32>
    %32 = arith.truncf %28 : vector<8x64xf32> to vector<8x64xbf16>
    %c0_15 = arith.constant 0 : index
    %c0_16 = arith.constant 0 : index
    %33 = vector.load %arg3[%c0_15, %c0_16] : memref<64x256xbf16, #tpu.memory_space<vmem>>, vector<64x256xbf16>
    %cst_17 = arith.constant dense<0.000000e+00> : vector<8x256xf32>
    %34 = tpu.matmul %32, %33, %cst_17 {dimension_numbers = #tpu.dot_dimension_numbers<[1], [0], [0], [1], [0, 0, 1, 1], [], []>} : vector<8x64xbf16>, vector<64x256xbf16>, vector<8x256xf32> -> vector<8x256xf32>
    %35 = arith.addf %31, %34 : vector<8x256xf32>
    %36 = vector.extract_strided_slice %35 {offsets = [0, 0], sizes = [8, 192], strides = [1, 1]} : vector<8x256xf32> to vector<8x192xf32>
    %37 = arith.negf %36 : vector<8x192xf32>
    %38 = math.exp %37 : vector<8x192xf32>
    %cst_18 = arith.constant 1.000000e+00 : f32
    %39 = vector.broadcast %cst_18 : f32 to vector<8x192xf32>
    %40 = arith.addf %39, %38 : vector<8x192xf32>
    %41 = arith.divf %39, %40 : vector<8x192xf32>
    %42 = vector.extract_strided_slice %35 {offsets = [0, 192], sizes = [8, 64], strides = [1, 1]} : vector<8x256xf32> to vector<8x64xf32>
    %43 = math.tanh %42 : vector<8x64xf32>
    %44 = vector.extract_strided_slice %41 {offsets = [0, 64], sizes = [8, 64], strides = [1, 1]} : vector<8x192xf32> to vector<8x64xf32>
    %45 = arith.mulf %44, %27 : vector<8x64xf32>
    %46 = vector.extract_strided_slice %41 {offsets = [0, 0], sizes = [8, 64], strides = [1, 1]} : vector<8x192xf32> to vector<8x64xf32>
    %47 = arith.mulf %46, %43 : vector<8x64xf32>
    %48 = arith.addf %45, %47 : vector<8x64xf32>
    %49 = vector.extract_strided_slice %41 {offsets = [0, 128], sizes = [8, 64], strides = [1, 1]} : vector<8x192xf32> to vector<8x64xf32>
    %50 = math.tanh %48 : vector<8x64xf32>
    %51 = arith.mulf %49, %50 : vector<8x64xf32>
    %52 = vector.extract_strided_slice %51 {offsets = [0, 0], sizes = [8, 32], strides = [1, 1]} : vector<8x64xf32> to vector<8x32xf32>
    %c0_19 = arith.constant 0 : index
    %c0_20 = arith.constant 0 : index
    %53 = vector.load %arg17[%c0_19, %c0_20] : memref<64x64xf32, #tpu.memory_space<vmem>>, vector<8x32xf32>
    tpu.vector_store %arg17[%c0_19, %c0_20], %52 {strides = array<i32>} : memref<64x64xf32, #tpu.memory_space<vmem>>, vector<8x32xf32>,
    %54 = vector.extract_strided_slice %51 {offsets = [0, 32], sizes = [8, 32], strides = [1, 1]} : vector<8x64xf32> to vector<8x32xf32>
    %c56_21 = arith.constant 56 : index
    %c32 = arith.constant 32 : index
    %55 = vector.load %arg17[%c56_21, %c32] : memref<64x64xf32, #tpu.memory_space<vmem>>, vector<8x32xf32>
    tpu.vector_store %arg17[%c56_21, %c32], %54 {strides = array<i32>} : memref<64x64xf32, #tpu.memory_space<vmem>>, vector<8x32xf32>,
    %c8 = arith.constant 8 : index
    %c0_22 = arith.constant 0 : index
    %56 = vector.load %arg16[%c8, %c0_22] : memref<64x256xf32, #tpu.memory_space<vmem>>, vector<8x256xf32>
    %c48 = arith.constant 48 : index
    %c0_23 = arith.constant 0 : index
    %57 = vector.load %arg16[%c48, %c0_23] : memref<64x256xf32, #tpu.memory_space<vmem>>, vector<8x256xf32>
    %58 = arith.select %18, %56, %57 : vector<8x256xi1>, vector<8x256xf32>
    %59 = arith.truncf %51 : vector<8x64xf32> to vector<8x64xbf16>
    %c0_24 = arith.constant 0 : index
    %c0_25 = arith.constant 0 : index
    %60 = vector.load %arg3[%c0_24, %c0_25] : memref<64x256xbf16, #tpu.memory_space<vmem>>, vector<64x256xbf16>
    %cst_26 = arith.constant dense<0.000000e+00> : vector<8x256xf32>
    %61 = tpu.matmul %59, %60, %cst_26 {dimension_numbers = #tpu.dot_dimension_numbers<[1], [0], [0], [1], [0, 0, 1, 1], [], []>} : vector<8x64xbf16>, vector<64x256xbf16>, vector<8x256xf32> -> vector<8x256xf32>
    %62 = arith.addf %58, %61 : vector<8x256xf32>
    %63 = vector.extract_strided_slice %62 {offsets = [0, 0], sizes = [8, 192], strides = [1, 1]} : vector<8x256xf32> to vector<8x192xf32>
    %64 = arith.negf %63 : vector<8x192xf32>
    %65 = math.exp %64 : vector<8x192xf32>
    %cst_27 = arith.constant 1.000000e+00 : f32
    %66 = vector.broadcast %cst_27 : f32 to vector<8x192xf32>
    %67 = arith.addf %66, %65 : vector<8x192xf32>
    %68 = arith.divf %66, %67 : vector<8x192xf32>
    %69 = vector.extract_strided_slice %62 {offsets = [0, 192], sizes = [8, 64], strides = [1, 1]} : vector<8x256xf32> to vector<8x64xf32>
    %70 = math.tanh %69 : vector<8x64xf32>
    %71 = vector.extract_strided_slice %68 {offsets = [0, 64], sizes = [8, 64], strides = [1, 1]} : vector<8x192xf32> to vector<8x64xf32>
    %72 = arith.mulf %71, %48 : vector<8x64xf32>
    %73 = vector.extract_strided_slice %68 {offsets = [0, 0], sizes = [8, 64], strides = [1, 1]} : vector<8x192xf32> to vector<8x64xf32>
    %74 = arith.mulf %73, %70 : vector<8x64xf32>
    %75 = arith.addf %72, %74 : vector<8x64xf32>
    %76 = vector.extract_strided_slice %68 {offsets = [0, 128], sizes = [8, 64], strides = [1, 1]} : vector<8x192xf32> to vector<8x64xf32>
    %77 = math.tanh %75 : vector<8x64xf32>
    %78 = arith.mulf %76, %77 : vector<8x64xf32>
    %79 = vector.extract_strided_slice %78 {offsets = [0, 0], sizes = [8, 32], strides = [1, 1]} : vector<8x64xf32> to vector<8x32xf32>
    %c8_28 = arith.constant 8 : index
    %c0_29 = arith.constant 0 : index
    %80 = vector.load %arg17[%c8_28, %c0_29] : memref<64x64xf32, #tpu.memory_space<vmem>>, vector<8x32xf32>
    tpu.vector_store %arg17[%c8_28, %c0_29], %79 {strides = array<i32>} : memref<64x64xf32, #tpu.memory_space<vmem>>, vector<8x32xf32>,
    %81 = vector.extract_strided_slice %78 {offsets = [0, 32], sizes = [8, 32], strides = [1, 1]} : vector<8x64xf32> to vector<8x32xf32>
    %c48_30 = arith.constant 48 : index
    %c32_31 = arith.constant 32 : index
    %82 = vector.load %arg17[%c48_30, %c32_31] : memref<64x64xf32, #tpu.memory_space<vmem>>, vector<8x32xf32>
    tpu.vector_store %arg17[%c48_30, %c32_31], %81 {strides = array<i32>} : memref<64x64xf32, #tpu.memory_space<vmem>>, vector<8x32xf32>,
    %c16 = arith.constant 16 : index
    %c0_32 = arith.constant 0 : index
    %83 = vector.load %arg16[%c16, %c0_32] : memref<64x256xf32, #tpu.memory_space<vmem>>, vector<8x256xf32>
    %c40 = arith.constant 40 : index
    %c0_33 = arith.constant 0 : index
    %84 = vector.load %arg16[%c40, %c0_33] : memref<64x256xf32, #tpu.memory_space<vmem>>, vector<8x256xf32>
    %85 = arith.select %18, %83, %84 : vector<8x256xi1>, vector<8x256xf32>
    %86 = arith.truncf %78 : vector<8x64xf32> to vector<8x64xbf16>
    %c0_34 = arith.constant 0 : index
    %c0_35 = arith.constant 0 : index
    %87 = vector.load %arg3[%c0_34, %c0_35] : memref<64x256xbf16, #tpu.memory_space<vmem>>, vector<64x256xbf16>
    %cst_36 = arith.constant dense<0.000000e+00> : vector<8x256xf32>
    %88 = tpu.matmul %86, %87, %cst_36 {dimension_numbers = #tpu.dot_dimension_numbers<[1], [0], [0], [1], [0, 0, 1, 1], [], []>} : vector<8x64xbf16>, vector<64x256xbf16>, vector<8x256xf32> -> vector<8x256xf32>
    %89 = arith.addf %85, %88 : vector<8x256xf32>
    %90 = vector.extract_strided_slice %89 {offsets = [0, 0], sizes = [8, 192], strides = [1, 1]} : vector<8x256xf32> to vector<8x192xf32>
    %91 = arith.negf %90 : vector<8x192xf32>
    %92 = math.exp %91 : vector<8x192xf32>
    %cst_37 = arith.constant 1.000000e+00 : f32
    %93 = vector.broadcast %cst_37 : f32 to vector<8x192xf32>
    %94 = arith.addf %93, %92 : vector<8x192xf32>
    %95 = arith.divf %93, %94 : vector<8x192xf32>
    %96 = vector.extract_strided_slice %89 {offsets = [0, 192], sizes = [8, 64], strides = [1, 1]} : vector<8x256xf32> to vector<8x64xf32>
    %97 = math.tanh %96 : vector<8x64xf32>
    %98 = vector.extract_strided_slice %95 {offsets = [0, 64], sizes = [8, 64], strides = [1, 1]} : vector<8x192xf32> to vector<8x64xf32>
    %99 = arith.mulf %98, %75 : vector<8x64xf32>
    %100 = vector.extract_strided_slice %95 {offsets = [0, 0], sizes = [8, 64], strides = [1, 1]} : vector<8x192xf32> to vector<8x64xf32>
    %101 = arith.mulf %100, %97 : vector<8x64xf32>
    %102 = arith.addf %99, %101 : vector<8x64xf32>
    %103 = vector.extract_strided_slice %95 {offsets = [0, 128], sizes = [8, 64], strides = [1, 1]} : vector<8x192xf32> to vector<8x64xf32>
    %104 = math.tanh %102 : vector<8x64xf32>
    %105 = arith.mulf %103, %104 : vector<8x64xf32>
    %106 = vector.extract_strided_slice %105 {offsets = [0, 0], sizes = [8, 32], strides = [1, 1]} : vector<8x64xf32> to vector<8x32xf32>
    %c16_38 = arith.constant 16 : index
    %c0_39 = arith.constant 0 : index
    %107 = vector.load %arg17[%c16_38, %c0_39] : memref<64x64xf32, #tpu.memory_space<vmem>>, vector<8x32xf32>
    tpu.vector_store %arg17[%c16_38, %c0_39], %106 {strides = array<i32>} : memref<64x64xf32, #tpu.memory_space<vmem>>, vector<8x32xf32>,
    %108 = vector.extract_strided_slice %105 {offsets = [0, 32], sizes = [8, 32], strides = [1, 1]} : vector<8x64xf32> to vector<8x32xf32>
    %c40_40 = arith.constant 40 : index
    %c32_41 = arith.constant 32 : index
    %109 = vector.load %arg17[%c40_40, %c32_41] : memref<64x64xf32, #tpu.memory_space<vmem>>, vector<8x32xf32>
    tpu.vector_store %arg17[%c40_40, %c32_41], %108 {strides = array<i32>} : memref<64x64xf32, #tpu.memory_space<vmem>>, vector<8x32xf32>,
    %c24 = arith.constant 24 : index
    %c0_42 = arith.constant 0 : index
    %110 = vector.load %arg16[%c24, %c0_42] : memref<64x256xf32, #tpu.memory_space<vmem>>, vector<8x256xf32>
    %c32_43 = arith.constant 32 : index
    %c0_44 = arith.constant 0 : index
    %111 = vector.load %arg16[%c32_43, %c0_44] : memref<64x256xf32, #tpu.memory_space<vmem>>, vector<8x256xf32>
    %112 = arith.select %18, %110, %111 : vector<8x256xi1>, vector<8x256xf32>
    %113 = arith.truncf %105 : vector<8x64xf32> to vector<8x64xbf16>
    %c0_45 = arith.constant 0 : index
    %c0_46 = arith.constant 0 : index
    %114 = vector.load %arg3[%c0_45, %c0_46] : memref<64x256xbf16, #tpu.memory_space<vmem>>, vector<64x256xbf16>
    %cst_47 = arith.constant dense<0.000000e+00> : vector<8x256xf32>
    %115 = tpu.matmul %113, %114, %cst_47 {dimension_numbers = #tpu.dot_dimension_numbers<[1], [0], [0], [1], [0, 0, 1, 1], [], []>} : vector<8x64xbf16>, vector<64x256xbf16>, vector<8x256xf32> -> vector<8x256xf32>
    %116 = arith.addf %112, %115 : vector<8x256xf32>
    %117 = vector.extract_strided_slice %116 {offsets = [0, 0], sizes = [8, 192], strides = [1, 1]} : vector<8x256xf32> to vector<8x192xf32>
    %118 = arith.negf %117 : vector<8x192xf32>
    %119 = math.exp %118 : vector<8x192xf32>
    %cst_48 = arith.constant 1.000000e+00 : f32
    %120 = vector.broadcast %cst_48 : f32 to vector<8x192xf32>
    %121 = arith.addf %120, %119 : vector<8x192xf32>
    %122 = arith.divf %120, %121 : vector<8x192xf32>
    %123 = vector.extract_strided_slice %116 {offsets = [0, 192], sizes = [8, 64], strides = [1, 1]} : vector<8x256xf32> to vector<8x64xf32>
    %124 = math.tanh %123 : vector<8x64xf32>
    %125 = vector.extract_strided_slice %122 {offsets = [0, 64], sizes = [8, 64], strides = [1, 1]} : vector<8x192xf32> to vector<8x64xf32>
    %126 = arith.mulf %125, %102 : vector<8x64xf32>
    %127 = vector.extract_strided_slice %122 {offsets = [0, 0], sizes = [8, 64], strides = [1, 1]} : vector<8x192xf32> to vector<8x64xf32>
    %128 = arith.mulf %127, %124 : vector<8x64xf32>
    %129 = arith.addf %126, %128 : vector<8x64xf32>
    %130 = vector.extract_strided_slice %122 {offsets = [0, 128], sizes = [8, 64], strides = [1, 1]} : vector<8x192xf32> to vector<8x64xf32>
    %131 = math.tanh %129 : vector<8x64xf32>
    %132 = arith.mulf %130, %131 : vector<8x64xf32>
    %133 = vector.extract_strided_slice %132 {offsets = [0, 0], sizes = [8, 32], strides = [1, 1]} : vector<8x64xf32> to vector<8x32xf32>
    %c24_49 = arith.constant 24 : index
    %c0_50 = arith.constant 0 : index
    %134 = vector.load %arg17[%c24_49, %c0_50] : memref<64x64xf32, #tpu.memory_space<vmem>>, vector<8x32xf32>
    tpu.vector_store %arg17[%c24_49, %c0_50], %133 {strides = array<i32>} : memref<64x64xf32, #tpu.memory_space<vmem>>, vector<8x32xf32>,
    %135 = vector.extract_strided_slice %132 {offsets = [0, 32], sizes = [8, 32], strides = [1, 1]} : vector<8x64xf32> to vector<8x32xf32>
    %c32_51 = arith.constant 32 : index
    %c32_52 = arith.constant 32 : index
    %136 = vector.load %arg17[%c32_51, %c32_52] : memref<64x64xf32, #tpu.memory_space<vmem>>, vector<8x32xf32>
    tpu.vector_store %arg17[%c32_51, %c32_52], %135 {strides = array<i32>} : memref<64x64xf32, #tpu.memory_space<vmem>>, vector<8x32xf32>,
    %c32_53 = arith.constant 32 : index
    %c0_54 = arith.constant 0 : index
    %137 = vector.load %arg16[%c32_53, %c0_54] : memref<64x256xf32, #tpu.memory_space<vmem>>, vector<8x256xf32>
    %c24_55 = arith.constant 24 : index
    %c0_56 = arith.constant 0 : index
    %138 = vector.load %arg16[%c24_55, %c0_56] : memref<64x256xf32, #tpu.memory_space<vmem>>, vector<8x256xf32>
    %139 = arith.select %18, %137, %138 : vector<8x256xi1>, vector<8x256xf32>
    %140 = arith.truncf %132 : vector<8x64xf32> to vector<8x64xbf16>
    %c0_57 = arith.constant 0 : index
    %c0_58 = arith.constant 0 : index
    %141 = vector.load %arg3[%c0_57, %c0_58] : memref<64x256xbf16, #tpu.memory_space<vmem>>, vector<64x256xbf16>
    %cst_59 = arith.constant dense<0.000000e+00> : vector<8x256xf32>
    %142 = tpu.matmul %140, %141, %cst_59 {dimension_numbers = #tpu.dot_dimension_numbers<[1], [0], [0], [1], [0, 0, 1, 1], [], []>} : vector<8x64xbf16>, vector<64x256xbf16>, vector<8x256xf32> -> vector<8x256xf32>
    %143 = arith.addf %139, %142 : vector<8x256xf32>
    %144 = vector.extract_strided_slice %143 {offsets = [0, 0], sizes = [8, 192], strides = [1, 1]} : vector<8x256xf32> to vector<8x192xf32>
    %145 = arith.negf %144 : vector<8x192xf32>
    %146 = math.exp %145 : vector<8x192xf32>
    %cst_60 = arith.constant 1.000000e+00 : f32
    %147 = vector.broadcast %cst_60 : f32 to vector<8x192xf32>
    %148 = arith.addf %147, %146 : vector<8x192xf32>
    %149 = arith.divf %147, %148 : vector<8x192xf32>
    %150 = vector.extract_strided_slice %143 {offsets = [0, 192], sizes = [8, 64], strides = [1, 1]} : vector<8x256xf32> to vector<8x64xf32>
    %151 = math.tanh %150 : vector<8x64xf32>
    %152 = vector.extract_strided_slice %149 {offsets = [0, 64], sizes = [8, 64], strides = [1, 1]} : vector<8x192xf32> to vector<8x64xf32>
    %153 = arith.mulf %152, %129 : vector<8x64xf32>
    %154 = vector.extract_strided_slice %149 {offsets = [0, 0], sizes = [8, 64], strides = [1, 1]} : vector<8x192xf32> to vector<8x64xf32>
    %155 = arith.mulf %154, %151 : vector<8x64xf32>
    %156 = arith.addf %153, %155 : vector<8x64xf32>
    %157 = vector.extract_strided_slice %149 {offsets = [0, 128], sizes = [8, 64], strides = [1, 1]} : vector<8x192xf32> to vector<8x64xf32>
    %158 = math.tanh %156 : vector<8x64xf32>
    %159 = arith.mulf %157, %158 : vector<8x64xf32>
    %160 = vector.extract_strided_slice %159 {offsets = [0, 0], sizes = [8, 32], strides = [1, 1]} : vector<8x64xf32> to vector<8x32xf32>
    %c32_61 = arith.constant 32 : index
    %c0_62 = arith.constant 0 : index
    %161 = vector.load %arg17[%c32_61, %c0_62] : memref<64x64xf32, #tpu.memory_space<vmem>>, vector<8x32xf32>
    tpu.vector_store %arg17[%c32_61, %c0_62], %160 {strides = array<i32>} : memref<64x64xf32, #tpu.memory_space<vmem>>, vector<8x32xf32>,
    %162 = vector.extract_strided_slice %159 {offsets = [0, 32], sizes = [8, 32], strides = [1, 1]} : vector<8x64xf32> to vector<8x32xf32>
    %c24_63 = arith.constant 24 : index
    %c32_64 = arith.constant 32 : index
    %163 = vector.load %arg17[%c24_63, %c32_64] : memref<64x64xf32, #tpu.memory_space<vmem>>, vector<8x32xf32>
    tpu.vector_store %arg17[%c24_63, %c32_64], %162 {strides = array<i32>} : memref<64x64xf32, #tpu.memory_space<vmem>>, vector<8x32xf32>,
    %c40_65 = arith.constant 40 : index
    %c0_66 = arith.constant 0 : index
    %164 = vector.load %arg16[%c40_65, %c0_66] : memref<64x256xf32, #tpu.memory_space<vmem>>, vector<8x256xf32>
    %c16_67 = arith.constant 16 : index
    %c0_68 = arith.constant 0 : index
    %165 = vector.load %arg16[%c16_67, %c0_68] : memref<64x256xf32, #tpu.memory_space<vmem>>, vector<8x256xf32>
    %166 = arith.select %18, %164, %165 : vector<8x256xi1>, vector<8x256xf32>
    %167 = arith.truncf %159 : vector<8x64xf32> to vector<8x64xbf16>
    %c0_69 = arith.constant 0 : index
    %c0_70 = arith.constant 0 : index
    %168 = vector.load %arg3[%c0_69, %c0_70] : memref<64x256xbf16, #tpu.memory_space<vmem>>, vector<64x256xbf16>
    %cst_71 = arith.constant dense<0.000000e+00> : vector<8x256xf32>
    %169 = tpu.matmul %167, %168, %cst_71 {dimension_numbers = #tpu.dot_dimension_numbers<[1], [0], [0], [1], [0, 0, 1, 1], [], []>} : vector<8x64xbf16>, vector<64x256xbf16>, vector<8x256xf32> -> vector<8x256xf32>
    %170 = arith.addf %166, %169 : vector<8x256xf32>
    %171 = vector.extract_strided_slice %170 {offsets = [0, 0], sizes = [8, 192], strides = [1, 1]} : vector<8x256xf32> to vector<8x192xf32>
    %172 = arith.negf %171 : vector<8x192xf32>
    %173 = math.exp %172 : vector<8x192xf32>
    %cst_72 = arith.constant 1.000000e+00 : f32
    %174 = vector.broadcast %cst_72 : f32 to vector<8x192xf32>
    %175 = arith.addf %174, %173 : vector<8x192xf32>
    %176 = arith.divf %174, %175 : vector<8x192xf32>
    %177 = vector.extract_strided_slice %170 {offsets = [0, 192], sizes = [8, 64], strides = [1, 1]} : vector<8x256xf32> to vector<8x64xf32>
    %178 = math.tanh %177 : vector<8x64xf32>
    %179 = vector.extract_strided_slice %176 {offsets = [0, 64], sizes = [8, 64], strides = [1, 1]} : vector<8x192xf32> to vector<8x64xf32>
    %180 = arith.mulf %179, %156 : vector<8x64xf32>
    %181 = vector.extract_strided_slice %176 {offsets = [0, 0], sizes = [8, 64], strides = [1, 1]} : vector<8x192xf32> to vector<8x64xf32>
    %182 = arith.mulf %181, %178 : vector<8x64xf32>
    %183 = arith.addf %180, %182 : vector<8x64xf32>
    %184 = vector.extract_strided_slice %176 {offsets = [0, 128], sizes = [8, 64], strides = [1, 1]} : vector<8x192xf32> to vector<8x64xf32>
    %185 = math.tanh %183 : vector<8x64xf32>
    %186 = arith.mulf %184, %185 : vector<8x64xf32>
    %187 = vector.extract_strided_slice %186 {offsets = [0, 0], sizes = [8, 32], strides = [1, 1]} : vector<8x64xf32> to vector<8x32xf32>
    %c40_73 = arith.constant 40 : index
    %c0_74 = arith.constant 0 : index
    %188 = vector.load %arg17[%c40_73, %c0_74] : memref<64x64xf32, #tpu.memory_space<vmem>>, vector<8x32xf32>
    tpu.vector_store %arg17[%c40_73, %c0_74], %187 {strides = array<i32>} : memref<64x64xf32, #tpu.memory_space<vmem>>, vector<8x32xf32>,
    %189 = vector.extract_strided_slice %186 {offsets = [0, 32], sizes = [8, 32], strides = [1, 1]} : vector<8x64xf32> to vector<8x32xf32>
    %c16_75 = arith.constant 16 : index
    %c32_76 = arith.constant 32 : index
    %190 = vector.load %arg17[%c16_75, %c32_76] : memref<64x64xf32, #tpu.memory_space<vmem>>, vector<8x32xf32>
    tpu.vector_store %arg17[%c16_75, %c32_76], %189 {strides = array<i32>} : memref<64x64xf32, #tpu.memory_space<vmem>>, vector<8x32xf32>,
    %c48_77 = arith.constant 48 : index
    %c0_78 = arith.constant 0 : index
    %191 = vector.load %arg16[%c48_77, %c0_78] : memref<64x256xf32, #tpu.memory_space<vmem>>, vector<8x256xf32>
    %c8_79 = arith.constant 8 : index
    %c0_80 = arith.constant 0 : index
    %192 = vector.load %arg16[%c8_79, %c0_80] : memref<64x256xf32, #tpu.memory_space<vmem>>, vector<8x256xf32>
    %193 = arith.select %18, %191, %192 : vector<8x256xi1>, vector<8x256xf32>
    %194 = arith.truncf %186 : vector<8x64xf32> to vector<8x64xbf16>
    %c0_81 = arith.constant 0 : index
    %c0_82 = arith.constant 0 : index
    %195 = vector.load %arg3[%c0_81, %c0_82] : memref<64x256xbf16, #tpu.memory_space<vmem>>, vector<64x256xbf16>
    %cst_83 = arith.constant dense<0.000000e+00> : vector<8x256xf32>
    %196 = tpu.matmul %194, %195, %cst_83 {dimension_numbers = #tpu.dot_dimension_numbers<[1], [0], [0], [1], [0, 0, 1, 1], [], []>} : vector<8x64xbf16>, vector<64x256xbf16>, vector<8x256xf32> -> vector<8x256xf32>
    %197 = arith.addf %193, %196 : vector<8x256xf32>
    %198 = vector.extract_strided_slice %197 {offsets = [0, 0], sizes = [8, 192], strides = [1, 1]} : vector<8x256xf32> to vector<8x192xf32>
    %199 = arith.negf %198 : vector<8x192xf32>
    %200 = math.exp %199 : vector<8x192xf32>
    %cst_84 = arith.constant 1.000000e+00 : f32
    %201 = vector.broadcast %cst_84 : f32 to vector<8x192xf32>
    %202 = arith.addf %201, %200 : vector<8x192xf32>
    %203 = arith.divf %201, %202 : vector<8x192xf32>
    %204 = vector.extract_strided_slice %197 {offsets = [0, 192], sizes = [8, 64], strides = [1, 1]} : vector<8x256xf32> to vector<8x64xf32>
    %205 = math.tanh %204 : vector<8x64xf32>
    %206 = vector.extract_strided_slice %203 {offsets = [0, 64], sizes = [8, 64], strides = [1, 1]} : vector<8x192xf32> to vector<8x64xf32>
    %207 = arith.mulf %206, %183 : vector<8x64xf32>
    %208 = vector.extract_strided_slice %203 {offsets = [0, 0], sizes = [8, 64], strides = [1, 1]} : vector<8x192xf32> to vector<8x64xf32>
    %209 = arith.mulf %208, %205 : vector<8x64xf32>
    %210 = arith.addf %207, %209 : vector<8x64xf32>
    %211 = vector.extract_strided_slice %203 {offsets = [0, 128], sizes = [8, 64], strides = [1, 1]} : vector<8x192xf32> to vector<8x64xf32>
    %212 = math.tanh %210 : vector<8x64xf32>
    %213 = arith.mulf %211, %212 : vector<8x64xf32>
    %214 = vector.extract_strided_slice %213 {offsets = [0, 0], sizes = [8, 32], strides = [1, 1]} : vector<8x64xf32> to vector<8x32xf32>
    %c48_85 = arith.constant 48 : index
    %c0_86 = arith.constant 0 : index
    %215 = vector.load %arg17[%c48_85, %c0_86] : memref<64x64xf32, #tpu.memory_space<vmem>>, vector<8x32xf32>
    tpu.vector_store %arg17[%c48_85, %c0_86], %214 {strides = array<i32>} : memref<64x64xf32, #tpu.memory_space<vmem>>, vector<8x32xf32>,
    %216 = vector.extract_strided_slice %213 {offsets = [0, 32], sizes = [8, 32], strides = [1, 1]} : vector<8x64xf32> to vector<8x32xf32>
    %c8_87 = arith.constant 8 : index
    %c32_88 = arith.constant 32 : index
    %217 = vector.load %arg17[%c8_87, %c32_88] : memref<64x64xf32, #tpu.memory_space<vmem>>, vector<8x32xf32>
    tpu.vector_store %arg17[%c8_87, %c32_88], %216 {strides = array<i32>} : memref<64x64xf32, #tpu.memory_space<vmem>>, vector<8x32xf32>,
    %c56_89 = arith.constant 56 : index
    %c0_90 = arith.constant 0 : index
    %218 = vector.load %arg16[%c56_89, %c0_90] : memref<64x256xf32, #tpu.memory_space<vmem>>, vector<8x256xf32>
    %c0_91 = arith.constant 0 : index
    %c0_92 = arith.constant 0 : index
    %219 = vector.load %arg16[%c0_91, %c0_92] : memref<64x256xf32, #tpu.memory_space<vmem>>, vector<8x256xf32>
    %220 = arith.select %18, %218, %219 : vector<8x256xi1>, vector<8x256xf32>
    %221 = arith.truncf %213 : vector<8x64xf32> to vector<8x64xbf16>
    %c0_93 = arith.constant 0 : index
    %c0_94 = arith.constant 0 : index
    %222 = vector.load %arg3[%c0_93, %c0_94] : memref<64x256xbf16, #tpu.memory_space<vmem>>, vector<64x256xbf16>
    %cst_95 = arith.constant dense<0.000000e+00> : vector<8x256xf32>
    %223 = tpu.matmul %221, %222, %cst_95 {dimension_numbers = #tpu.dot_dimension_numbers<[1], [0], [0], [1], [0, 0, 1, 1], [], []>} : vector<8x64xbf16>, vector<64x256xbf16>, vector<8x256xf32> -> vector<8x256xf32>
    %224 = arith.addf %220, %223 : vector<8x256xf32>
    %225 = vector.extract_strided_slice %224 {offsets = [0, 0], sizes = [8, 192], strides = [1, 1]} : vector<8x256xf32> to vector<8x192xf32>
    %226 = arith.negf %225 : vector<8x192xf32>
    %227 = math.exp %226 : vector<8x192xf32>
    %cst_96 = arith.constant 1.000000e+00 : f32
    %228 = vector.broadcast %cst_96 : f32 to vector<8x192xf32>
    %229 = arith.addf %228, %227 : vector<8x192xf32>
    %230 = arith.divf %228, %229 : vector<8x192xf32>
    %231 = vector.extract_strided_slice %224 {offsets = [0, 192], sizes = [8, 64], strides = [1, 1]} : vector<8x256xf32> to vector<8x64xf32>
    %232 = math.tanh %231 : vector<8x64xf32>
    %233 = vector.extract_strided_slice %230 {offsets = [0, 64], sizes = [8, 64], strides = [1, 1]} : vector<8x192xf32> to vector<8x64xf32>
    %234 = arith.mulf %233, %210 : vector<8x64xf32>
    %235 = vector.extract_strided_slice %230 {offsets = [0, 0], sizes = [8, 64], strides = [1, 1]} : vector<8x192xf32> to vector<8x64xf32>
    %236 = arith.mulf %235, %232 : vector<8x64xf32>
    %237 = arith.addf %234, %236 : vector<8x64xf32>
    %238 = vector.extract_strided_slice %230 {offsets = [0, 128], sizes = [8, 64], strides = [1, 1]} : vector<8x192xf32> to vector<8x64xf32>
    %239 = math.tanh %237 : vector<8x64xf32>
    %240 = arith.mulf %238, %239 : vector<8x64xf32>
    %241 = vector.extract_strided_slice %240 {offsets = [0, 0], sizes = [8, 32], strides = [1, 1]} : vector<8x64xf32> to vector<8x32xf32>
    %c56_97 = arith.constant 56 : index
    %c0_98 = arith.constant 0 : index
    %242 = vector.load %arg17[%c56_97, %c0_98] : memref<64x64xf32, #tpu.memory_space<vmem>>, vector<8x32xf32>
    tpu.vector_store %arg17[%c56_97, %c0_98], %241 {strides = array<i32>} : memref<64x64xf32, #tpu.memory_space<vmem>>, vector<8x32xf32>,
    %243 = vector.extract_strided_slice %240 {offsets = [0, 32], sizes = [8, 32], strides = [1, 1]} : vector<8x64xf32> to vector<8x32xf32>
    %c0_99 = arith.constant 0 : index
    %c32_100 = arith.constant 32 : index
    %244 = vector.load %arg17[%c0_99, %c32_100] : memref<64x64xf32, #tpu.memory_space<vmem>>, vector<8x32xf32>
    tpu.vector_store %arg17[%c0_99, %c32_100], %243 {strides = array<i32>} : memref<64x64xf32, #tpu.memory_space<vmem>>, vector<8x32xf32>,
    %c0_101 = arith.constant 0 : index
    %c0_102 = arith.constant 0 : index
    %245 = vector.load %arg17[%c0_101, %c0_102] : memref<64x64xf32, #tpu.memory_space<vmem>>, vector<64x64xf32>
    %246 = arith.truncf %245 : vector<64x64xf32> to vector<64x64xbf16>
    %c0_103 = arith.constant 0 : index
    %c0_104 = arith.constant 0 : index
    %247 = vector.load %arg4[%c0_103, %c0_104] : memref<64x256xbf16, #tpu.memory_space<vmem>>, vector<64x256xbf16>
    %cst_105 = arith.constant dense<0.000000e+00> : vector<64x256xf32>
    %248 = tpu.matmul %246, %247, %cst_105 {dimension_numbers = #tpu.dot_dimension_numbers<[1], [0], [0], [1], [0, 0, 1, 1], [], []>} : vector<64x64xbf16>, vector<64x256xbf16>, vector<64x256xf32> -> vector<64x256xf32>
    %c0_106 = arith.constant 0 : index
    %c0_107 = arith.constant 0 : index
    %249 = vector.load %arg5[%c0_106, %c0_107] : memref<1x256xf32, #tpu.memory_space<vmem>>, vector<1x256xf32>
    %250 = vector.broadcast %249 : vector<1x256xf32> to vector<64x256xf32>
    %251 = arith.addf %248, %250 : vector<64x256xf32>
    %c0_108 = arith.constant 0 : index
    %c0_109 = arith.constant 0 : index
    %252 = vector.load %arg16[%c0_108, %c0_109] : memref<64x256xf32, #tpu.memory_space<vmem>>, vector<64x256xf32>
    tpu.vector_store %arg16[%c0_108, %c0_109], %251 {strides = array<i32>} : memref<64x256xf32, #tpu.memory_space<vmem>>, vector<64x256xf32>,
    %cst_110 = arith.constant 0.000000e+00 : f32
    %253 = vector.broadcast %cst_110 : f32 to vector<8x64xf32>
    %cst_111 = arith.constant 0.000000e+00 : f32
    %254 = vector.broadcast %cst_111 : f32 to vector<8x64xf32>
    %c0_112 = arith.constant 0 : index
    %c0_113 = arith.constant 0 : index
    %255 = vector.load %arg16[%c0_112, %c0_113] : memref<64x256xf32, #tpu.memory_space<vmem>>, vector<8x256xf32>
    %c56_114 = arith.constant 56 : index
    %c0_115 = arith.constant 0 : index
    %256 = vector.load %arg16[%c56_114, %c0_115] : memref<64x256xf32, #tpu.memory_space<vmem>>, vector<8x256xf32>
    %257 = arith.select %18, %255, %256 : vector<8x256xi1>, vector<8x256xf32>
    %258 = arith.truncf %254 : vector<8x64xf32> to vector<8x64xbf16>
    %c0_116 = arith.constant 0 : index
    %c0_117 = arith.constant 0 : index
    %259 = vector.load %arg6[%c0_116, %c0_117] : memref<64x256xbf16, #tpu.memory_space<vmem>>, vector<64x256xbf16>
    %cst_118 = arith.constant dense<0.000000e+00> : vector<8x256xf32>
    %260 = tpu.matmul %258, %259, %cst_118 {dimension_numbers = #tpu.dot_dimension_numbers<[1], [0], [0], [1], [0, 0, 1, 1], [], []>} : vector<8x64xbf16>, vector<64x256xbf16>, vector<8x256xf32> -> vector<8x256xf32>
    %261 = arith.addf %257, %260 : vector<8x256xf32>
    %262 = vector.extract_strided_slice %261 {offsets = [0, 0], sizes = [8, 192], strides = [1, 1]} : vector<8x256xf32> to vector<8x192xf32>
    %263 = arith.negf %262 : vector<8x192xf32>
    %264 = math.exp %263 : vector<8x192xf32>
    %cst_119 = arith.constant 1.000000e+00 : f32
    %265 = vector.broadcast %cst_119 : f32 to vector<8x192xf32>
    %266 = arith.addf %265, %264 : vector<8x192xf32>
    %267 = arith.divf %265, %266 : vector<8x192xf32>
    %268 = vector.extract_strided_slice %261 {offsets = [0, 192], sizes = [8, 64], strides = [1, 1]} : vector<8x256xf32> to vector<8x64xf32>
    %269 = math.tanh %268 : vector<8x64xf32>
    %270 = vector.extract_strided_slice %267 {offsets = [0, 64], sizes = [8, 64], strides = [1, 1]} : vector<8x192xf32> to vector<8x64xf32>
    %271 = arith.mulf %270, %253 : vector<8x64xf32>
    %272 = vector.extract_strided_slice %267 {offsets = [0, 0], sizes = [8, 64], strides = [1, 1]} : vector<8x192xf32> to vector<8x64xf32>
    %273 = arith.mulf %272, %269 : vector<8x64xf32>
    %274 = arith.addf %271, %273 : vector<8x64xf32>
    %275 = vector.extract_strided_slice %267 {offsets = [0, 128], sizes = [8, 64], strides = [1, 1]} : vector<8x192xf32> to vector<8x64xf32>
    %276 = math.tanh %274 : vector<8x64xf32>
    %277 = arith.mulf %275, %276 : vector<8x64xf32>
    %278 = vector.extract_strided_slice %277 {offsets = [0, 0], sizes = [8, 32], strides = [1, 1]} : vector<8x64xf32> to vector<8x32xf32>
    %c0_120 = arith.constant 0 : index
    %c0_121 = arith.constant 0 : index
    %279 = vector.load %arg17[%c0_120, %c0_121] : memref<64x64xf32, #tpu.memory_space<vmem>>, vector<8x32xf32>
    tpu.vector_store %arg17[%c0_120, %c0_121], %278 {strides = array<i32>} : memref<64x64xf32, #tpu.memory_space<vmem>>, vector<8x32xf32>,
    %280 = vector.extract_strided_slice %277 {offsets = [0, 32], sizes = [8, 32], strides = [1, 1]} : vector<8x64xf32> to vector<8x32xf32>
    %c56_122 = arith.constant 56 : index
    %c32_123 = arith.constant 32 : index
    %281 = vector.load %arg17[%c56_122, %c32_123] : memref<64x64xf32, #tpu.memory_space<vmem>>, vector<8x32xf32>
    tpu.vector_store %arg17[%c56_122, %c32_123], %280 {strides = array<i32>} : memref<64x64xf32, #tpu.memory_space<vmem>>, vector<8x32xf32>,
    %c8_124 = arith.constant 8 : index
    %c0_125 = arith.constant 0 : index
    %282 = vector.load %arg16[%c8_124, %c0_125] : memref<64x256xf32, #tpu.memory_space<vmem>>, vector<8x256xf32>
    %c48_126 = arith.constant 48 : index
    %c0_127 = arith.constant 0 : index
    %283 = vector.load %arg16[%c48_126, %c0_127] : memref<64x256xf32, #tpu.memory_space<vmem>>, vector<8x256xf32>
    %284 = arith.select %18, %282, %283 : vector<8x256xi1>, vector<8x256xf32>
    %285 = arith.truncf %277 : vector<8x64xf32> to vector<8x64xbf16>
    %c0_128 = arith.constant 0 : index
    %c0_129 = arith.constant 0 : index
    %286 = vector.load %arg6[%c0_128, %c0_129] : memref<64x256xbf16, #tpu.memory_space<vmem>>, vector<64x256xbf16>
    %cst_130 = arith.constant dense<0.000000e+00> : vector<8x256xf32>
    %287 = tpu.matmul %285, %286, %cst_130 {dimension_numbers = #tpu.dot_dimension_numbers<[1], [0], [0], [1], [0, 0, 1, 1], [], []>} : vector<8x64xbf16>, vector<64x256xbf16>, vector<8x256xf32> -> vector<8x256xf32>
    %288 = arith.addf %284, %287 : vector<8x256xf32>
    %289 = vector.extract_strided_slice %288 {offsets = [0, 0], sizes = [8, 192], strides = [1, 1]} : vector<8x256xf32> to vector<8x192xf32>
    %290 = arith.negf %289 : vector<8x192xf32>
    %291 = math.exp %290 : vector<8x192xf32>
    %cst_131 = arith.constant 1.000000e+00 : f32
    %292 = vector.broadcast %cst_131 : f32 to vector<8x192xf32>
    %293 = arith.addf %292, %291 : vector<8x192xf32>
    %294 = arith.divf %292, %293 : vector<8x192xf32>
    %295 = vector.extract_strided_slice %288 {offsets = [0, 192], sizes = [8, 64], strides = [1, 1]} : vector<8x256xf32> to vector<8x64xf32>
    %296 = math.tanh %295 : vector<8x64xf32>
    %297 = vector.extract_strided_slice %294 {offsets = [0, 64], sizes = [8, 64], strides = [1, 1]} : vector<8x192xf32> to vector<8x64xf32>
    %298 = arith.mulf %297, %274 : vector<8x64xf32>
    %299 = vector.extract_strided_slice %294 {offsets = [0, 0], sizes = [8, 64], strides = [1, 1]} : vector<8x192xf32> to vector<8x64xf32>
    %300 = arith.mulf %299, %296 : vector<8x64xf32>
    %301 = arith.addf %298, %300 : vector<8x64xf32>
    %302 = vector.extract_strided_slice %294 {offsets = [0, 128], sizes = [8, 64], strides = [1, 1]} : vector<8x192xf32> to vector<8x64xf32>
    %303 = math.tanh %301 : vector<8x64xf32>
    %304 = arith.mulf %302, %303 : vector<8x64xf32>
    %305 = vector.extract_strided_slice %304 {offsets = [0, 0], sizes = [8, 32], strides = [1, 1]} : vector<8x64xf32> to vector<8x32xf32>
    %c8_132 = arith.constant 8 : index
    %c0_133 = arith.constant 0 : index
    %306 = vector.load %arg17[%c8_132, %c0_133] : memref<64x64xf32, #tpu.memory_space<vmem>>, vector<8x32xf32>
    tpu.vector_store %arg17[%c8_132, %c0_133], %305 {strides = array<i32>} : memref<64x64xf32, #tpu.memory_space<vmem>>, vector<8x32xf32>,
    %307 = vector.extract_strided_slice %304 {offsets = [0, 32], sizes = [8, 32], strides = [1, 1]} : vector<8x64xf32> to vector<8x32xf32>
    %c48_134 = arith.constant 48 : index
    %c32_135 = arith.constant 32 : index
    %308 = vector.load %arg17[%c48_134, %c32_135] : memref<64x64xf32, #tpu.memory_space<vmem>>, vector<8x32xf32>
    tpu.vector_store %arg17[%c48_134, %c32_135], %307 {strides = array<i32>} : memref<64x64xf32, #tpu.memory_space<vmem>>, vector<8x32xf32>,
    %c16_136 = arith.constant 16 : index
    %c0_137 = arith.constant 0 : index
    %309 = vector.load %arg16[%c16_136, %c0_137] : memref<64x256xf32, #tpu.memory_space<vmem>>, vector<8x256xf32>
    %c40_138 = arith.constant 40 : index
    %c0_139 = arith.constant 0 : index
    %310 = vector.load %arg16[%c40_138, %c0_139] : memref<64x256xf32, #tpu.memory_space<vmem>>, vector<8x256xf32>
    %311 = arith.select %18, %309, %310 : vector<8x256xi1>, vector<8x256xf32>
    %312 = arith.truncf %304 : vector<8x64xf32> to vector<8x64xbf16>
    %c0_140 = arith.constant 0 : index
    %c0_141 = arith.constant 0 : index
    %313 = vector.load %arg6[%c0_140, %c0_141] : memref<64x256xbf16, #tpu.memory_space<vmem>>, vector<64x256xbf16>
    %cst_142 = arith.constant dense<0.000000e+00> : vector<8x256xf32>
    %314 = tpu.matmul %312, %313, %cst_142 {dimension_numbers = #tpu.dot_dimension_numbers<[1], [0], [0], [1], [0, 0, 1, 1], [], []>} : vector<8x64xbf16>, vector<64x256xbf16>, vector<8x256xf32> -> vector<8x256xf32>
    %315 = arith.addf %311, %314 : vector<8x256xf32>
    %316 = vector.extract_strided_slice %315 {offsets = [0, 0], sizes = [8, 192], strides = [1, 1]} : vector<8x256xf32> to vector<8x192xf32>
    %317 = arith.negf %316 : vector<8x192xf32>
    %318 = math.exp %317 : vector<8x192xf32>
    %cst_143 = arith.constant 1.000000e+00 : f32
    %319 = vector.broadcast %cst_143 : f32 to vector<8x192xf32>
    %320 = arith.addf %319, %318 : vector<8x192xf32>
    %321 = arith.divf %319, %320 : vector<8x192xf32>
    %322 = vector.extract_strided_slice %315 {offsets = [0, 192], sizes = [8, 64], strides = [1, 1]} : vector<8x256xf32> to vector<8x64xf32>
    %323 = math.tanh %322 : vector<8x64xf32>
    %324 = vector.extract_strided_slice %321 {offsets = [0, 64], sizes = [8, 64], strides = [1, 1]} : vector<8x192xf32> to vector<8x64xf32>
    %325 = arith.mulf %324, %301 : vector<8x64xf32>
    %326 = vector.extract_strided_slice %321 {offsets = [0, 0], sizes = [8, 64], strides = [1, 1]} : vector<8x192xf32> to vector<8x64xf32>
    %327 = arith.mulf %326, %323 : vector<8x64xf32>
    %328 = arith.addf %325, %327 : vector<8x64xf32>
    %329 = vector.extract_strided_slice %321 {offsets = [0, 128], sizes = [8, 64], strides = [1, 1]} : vector<8x192xf32> to vector<8x64xf32>
    %330 = math.tanh %328 : vector<8x64xf32>
    %331 = arith.mulf %329, %330 : vector<8x64xf32>
    %332 = vector.extract_strided_slice %331 {offsets = [0, 0], sizes = [8, 32], strides = [1, 1]} : vector<8x64xf32> to vector<8x32xf32>
    %c16_144 = arith.constant 16 : index
    %c0_145 = arith.constant 0 : index
    %333 = vector.load %arg17[%c16_144, %c0_145] : memref<64x64xf32, #tpu.memory_space<vmem>>, vector<8x32xf32>
    tpu.vector_store %arg17[%c16_144, %c0_145], %332 {strides = array<i32>} : memref<64x64xf32, #tpu.memory_space<vmem>>, vector<8x32xf32>,
    %334 = vector.extract_strided_slice %331 {offsets = [0, 32], sizes = [8, 32], strides = [1, 1]} : vector<8x64xf32> to vector<8x32xf32>
    %c40_146 = arith.constant 40 : index
    %c32_147 = arith.constant 32 : index
    %335 = vector.load %arg17[%c40_146, %c32_147] : memref<64x64xf32, #tpu.memory_space<vmem>>, vector<8x32xf32>
    tpu.vector_store %arg17[%c40_146, %c32_147], %334 {strides = array<i32>} : memref<64x64xf32, #tpu.memory_space<vmem>>, vector<8x32xf32>,
    %c24_148 = arith.constant 24 : index
    %c0_149 = arith.constant 0 : index
    %336 = vector.load %arg16[%c24_148, %c0_149] : memref<64x256xf32, #tpu.memory_space<vmem>>, vector<8x256xf32>
    %c32_150 = arith.constant 32 : index
    %c0_151 = arith.constant 0 : index
    %337 = vector.load %arg16[%c32_150, %c0_151] : memref<64x256xf32, #tpu.memory_space<vmem>>, vector<8x256xf32>
    %338 = arith.select %18, %336, %337 : vector<8x256xi1>, vector<8x256xf32>
    %339 = arith.truncf %331 : vector<8x64xf32> to vector<8x64xbf16>
    %c0_152 = arith.constant 0 : index
    %c0_153 = arith.constant 0 : index
    %340 = vector.load %arg6[%c0_152, %c0_153] : memref<64x256xbf16, #tpu.memory_space<vmem>>, vector<64x256xbf16>
    %cst_154 = arith.constant dense<0.000000e+00> : vector<8x256xf32>
    %341 = tpu.matmul %339, %340, %cst_154 {dimension_numbers = #tpu.dot_dimension_numbers<[1], [0], [0], [1], [0, 0, 1, 1], [], []>} : vector<8x64xbf16>, vector<64x256xbf16>, vector<8x256xf32> -> vector<8x256xf32>
    %342 = arith.addf %338, %341 : vector<8x256xf32>
    %343 = vector.extract_strided_slice %342 {offsets = [0, 0], sizes = [8, 192], strides = [1, 1]} : vector<8x256xf32> to vector<8x192xf32>
    %344 = arith.negf %343 : vector<8x192xf32>
    %345 = math.exp %344 : vector<8x192xf32>
    %cst_155 = arith.constant 1.000000e+00 : f32
    %346 = vector.broadcast %cst_155 : f32 to vector<8x192xf32>
    %347 = arith.addf %346, %345 : vector<8x192xf32>
    %348 = arith.divf %346, %347 : vector<8x192xf32>
    %349 = vector.extract_strided_slice %342 {offsets = [0, 192], sizes = [8, 64], strides = [1, 1]} : vector<8x256xf32> to vector<8x64xf32>
    %350 = math.tanh %349 : vector<8x64xf32>
    %351 = vector.extract_strided_slice %348 {offsets = [0, 64], sizes = [8, 64], strides = [1, 1]} : vector<8x192xf32> to vector<8x64xf32>
    %352 = arith.mulf %351, %328 : vector<8x64xf32>
    %353 = vector.extract_strided_slice %348 {offsets = [0, 0], sizes = [8, 64], strides = [1, 1]} : vector<8x192xf32> to vector<8x64xf32>
    %354 = arith.mulf %353, %350 : vector<8x64xf32>
    %355 = arith.addf %352, %354 : vector<8x64xf32>
    %356 = vector.extract_strided_slice %348 {offsets = [0, 128], sizes = [8, 64], strides = [1, 1]} : vector<8x192xf32> to vector<8x64xf32>
    %357 = math.tanh %355 : vector<8x64xf32>
    %358 = arith.mulf %356, %357 : vector<8x64xf32>
    %359 = vector.extract_strided_slice %358 {offsets = [0, 0], sizes = [8, 32], strides = [1, 1]} : vector<8x64xf32> to vector<8x32xf32>
    %c24_156 = arith.constant 24 : index
    %c0_157 = arith.constant 0 : index
    %360 = vector.load %arg17[%c24_156, %c0_157] : memref<64x64xf32, #tpu.memory_space<vmem>>, vector<8x32xf32>
    tpu.vector_store %arg17[%c24_156, %c0_157], %359 {strides = array<i32>} : memref<64x64xf32, #tpu.memory_space<vmem>>, vector<8x32xf32>,
    %361 = vector.extract_strided_slice %358 {offsets = [0, 32], sizes = [8, 32], strides = [1, 1]} : vector<8x64xf32> to vector<8x32xf32>
    %c32_158 = arith.constant 32 : index
    %c32_159 = arith.constant 32 : index
    %362 = vector.load %arg17[%c32_158, %c32_159] : memref<64x64xf32, #tpu.memory_space<vmem>>, vector<8x32xf32>
    tpu.vector_store %arg17[%c32_158, %c32_159], %361 {strides = array<i32>} : memref<64x64xf32, #tpu.memory_space<vmem>>, vector<8x32xf32>,
    %c32_160 = arith.constant 32 : index
    %c0_161 = arith.constant 0 : index
    %363 = vector.load %arg16[%c32_160, %c0_161] : memref<64x256xf32, #tpu.memory_space<vmem>>, vector<8x256xf32>
    %c24_162 = arith.constant 24 : index
    %c0_163 = arith.constant 0 : index
    %364 = vector.load %arg16[%c24_162, %c0_163] : memref<64x256xf32, #tpu.memory_space<vmem>>, vector<8x256xf32>
    %365 = arith.select %18, %363, %364 : vector<8x256xi1>, vector<8x256xf32>
    %366 = arith.truncf %358 : vector<8x64xf32> to vector<8x64xbf16>
    %c0_164 = arith.constant 0 : index
    %c0_165 = arith.constant 0 : index
    %367 = vector.load %arg6[%c0_164, %c0_165] : memref<64x256xbf16, #tpu.memory_space<vmem>>, vector<64x256xbf16>
    %cst_166 = arith.constant dense<0.000000e+00> : vector<8x256xf32>
    %368 = tpu.matmul %366, %367, %cst_166 {dimension_numbers = #tpu.dot_dimension_numbers<[1], [0], [0], [1], [0, 0, 1, 1], [], []>} : vector<8x64xbf16>, vector<64x256xbf16>, vector<8x256xf32> -> vector<8x256xf32>
    %369 = arith.addf %365, %368 : vector<8x256xf32>
    %370 = vector.extract_strided_slice %369 {offsets = [0, 0], sizes = [8, 192], strides = [1, 1]} : vector<8x256xf32> to vector<8x192xf32>
    %371 = arith.negf %370 : vector<8x192xf32>
    %372 = math.exp %371 : vector<8x192xf32>
    %cst_167 = arith.constant 1.000000e+00 : f32
    %373 = vector.broadcast %cst_167 : f32 to vector<8x192xf32>
    %374 = arith.addf %373, %372 : vector<8x192xf32>
    %375 = arith.divf %373, %374 : vector<8x192xf32>
    %376 = vector.extract_strided_slice %369 {offsets = [0, 192], sizes = [8, 64], strides = [1, 1]} : vector<8x256xf32> to vector<8x64xf32>
    %377 = math.tanh %376 : vector<8x64xf32>
    %378 = vector.extract_strided_slice %375 {offsets = [0, 64], sizes = [8, 64], strides = [1, 1]} : vector<8x192xf32> to vector<8x64xf32>
    %379 = arith.mulf %378, %355 : vector<8x64xf32>
    %380 = vector.extract_strided_slice %375 {offsets = [0, 0], sizes = [8, 64], strides = [1, 1]} : vector<8x192xf32> to vector<8x64xf32>
    %381 = arith.mulf %380, %377 : vector<8x64xf32>
    %382 = arith.addf %379, %381 : vector<8x64xf32>
    %383 = vector.extract_strided_slice %375 {offsets = [0, 128], sizes = [8, 64], strides = [1, 1]} : vector<8x192xf32> to vector<8x64xf32>
    %384 = math.tanh %382 : vector<8x64xf32>
    %385 = arith.mulf %383, %384 : vector<8x64xf32>
    %386 = vector.extract_strided_slice %385 {offsets = [0, 0], sizes = [8, 32], strides = [1, 1]} : vector<8x64xf32> to vector<8x32xf32>
    %c32_168 = arith.constant 32 : index
    %c0_169 = arith.constant 0 : index
    %387 = vector.load %arg17[%c32_168, %c0_169] : memref<64x64xf32, #tpu.memory_space<vmem>>, vector<8x32xf32>
    tpu.vector_store %arg17[%c32_168, %c0_169], %386 {strides = array<i32>} : memref<64x64xf32, #tpu.memory_space<vmem>>, vector<8x32xf32>,
    %388 = vector.extract_strided_slice %385 {offsets = [0, 32], sizes = [8, 32], strides = [1, 1]} : vector<8x64xf32> to vector<8x32xf32>
    %c24_170 = arith.constant 24 : index
    %c32_171 = arith.constant 32 : index
    %389 = vector.load %arg17[%c24_170, %c32_171] : memref<64x64xf32, #tpu.memory_space<vmem>>, vector<8x32xf32>
    tpu.vector_store %arg17[%c24_170, %c32_171], %388 {strides = array<i32>} : memref<64x64xf32, #tpu.memory_space<vmem>>, vector<8x32xf32>,
    %c40_172 = arith.constant 40 : index
    %c0_173 = arith.constant 0 : index
    %390 = vector.load %arg16[%c40_172, %c0_173] : memref<64x256xf32, #tpu.memory_space<vmem>>, vector<8x256xf32>
    %c16_174 = arith.constant 16 : index
    %c0_175 = arith.constant 0 : index
    %391 = vector.load %arg16[%c16_174, %c0_175] : memref<64x256xf32, #tpu.memory_space<vmem>>, vector<8x256xf32>
    %392 = arith.select %18, %390, %391 : vector<8x256xi1>, vector<8x256xf32>
    %393 = arith.truncf %385 : vector<8x64xf32> to vector<8x64xbf16>
    %c0_176 = arith.constant 0 : index
    %c0_177 = arith.constant 0 : index
    %394 = vector.load %arg6[%c0_176, %c0_177] : memref<64x256xbf16, #tpu.memory_space<vmem>>, vector<64x256xbf16>
    %cst_178 = arith.constant dense<0.000000e+00> : vector<8x256xf32>
    %395 = tpu.matmul %393, %394, %cst_178 {dimension_numbers = #tpu.dot_dimension_numbers<[1], [0], [0], [1], [0, 0, 1, 1], [], []>} : vector<8x64xbf16>, vector<64x256xbf16>, vector<8x256xf32> -> vector<8x256xf32>
    %396 = arith.addf %392, %395 : vector<8x256xf32>
    %397 = vector.extract_strided_slice %396 {offsets = [0, 0], sizes = [8, 192], strides = [1, 1]} : vector<8x256xf32> to vector<8x192xf32>
    %398 = arith.negf %397 : vector<8x192xf32>
    %399 = math.exp %398 : vector<8x192xf32>
    %cst_179 = arith.constant 1.000000e+00 : f32
    %400 = vector.broadcast %cst_179 : f32 to vector<8x192xf32>
    %401 = arith.addf %400, %399 : vector<8x192xf32>
    %402 = arith.divf %400, %401 : vector<8x192xf32>
    %403 = vector.extract_strided_slice %396 {offsets = [0, 192], sizes = [8, 64], strides = [1, 1]} : vector<8x256xf32> to vector<8x64xf32>
    %404 = math.tanh %403 : vector<8x64xf32>
    %405 = vector.extract_strided_slice %402 {offsets = [0, 64], sizes = [8, 64], strides = [1, 1]} : vector<8x192xf32> to vector<8x64xf32>
    %406 = arith.mulf %405, %382 : vector<8x64xf32>
    %407 = vector.extract_strided_slice %402 {offsets = [0, 0], sizes = [8, 64], strides = [1, 1]} : vector<8x192xf32> to vector<8x64xf32>
    %408 = arith.mulf %407, %404 : vector<8x64xf32>
    %409 = arith.addf %406, %408 : vector<8x64xf32>
    %410 = vector.extract_strided_slice %402 {offsets = [0, 128], sizes = [8, 64], strides = [1, 1]} : vector<8x192xf32> to vector<8x64xf32>
    %411 = math.tanh %409 : vector<8x64xf32>
    %412 = arith.mulf %410, %411 : vector<8x64xf32>
    %413 = vector.extract_strided_slice %412 {offsets = [0, 0], sizes = [8, 32], strides = [1, 1]} : vector<8x64xf32> to vector<8x32xf32>
    %c40_180 = arith.constant 40 : index
    %c0_181 = arith.constant 0 : index
    %414 = vector.load %arg17[%c40_180, %c0_181] : memref<64x64xf32, #tpu.memory_space<vmem>>, vector<8x32xf32>
    tpu.vector_store %arg17[%c40_180, %c0_181], %413 {strides = array<i32>} : memref<64x64xf32, #tpu.memory_space<vmem>>, vector<8x32xf32>,
    %415 = vector.extract_strided_slice %412 {offsets = [0, 32], sizes = [8, 32], strides = [1, 1]} : vector<8x64xf32> to vector<8x32xf32>
    %c16_182 = arith.constant 16 : index
    %c32_183 = arith.constant 32 : index
    %416 = vector.load %arg17[%c16_182, %c32_183] : memref<64x64xf32, #tpu.memory_space<vmem>>, vector<8x32xf32>
    tpu.vector_store %arg17[%c16_182, %c32_183], %415 {strides = array<i32>} : memref<64x64xf32, #tpu.memory_space<vmem>>, vector<8x32xf32>,
    %c48_184 = arith.constant 48 : index
    %c0_185 = arith.constant 0 : index
    %417 = vector.load %arg16[%c48_184, %c0_185] : memref<64x256xf32, #tpu.memory_space<vmem>>, vector<8x256xf32>
    %c8_186 = arith.constant 8 : index
    %c0_187 = arith.constant 0 : index
    %418 = vector.load %arg16[%c8_186, %c0_187] : memref<64x256xf32, #tpu.memory_space<vmem>>, vector<8x256xf32>
    %419 = arith.select %18, %417, %418 : vector<8x256xi1>, vector<8x256xf32>
    %420 = arith.truncf %412 : vector<8x64xf32> to vector<8x64xbf16>
    %c0_188 = arith.constant 0 : index
    %c0_189 = arith.constant 0 : index
    %421 = vector.load %arg6[%c0_188, %c0_189] : memref<64x256xbf16, #tpu.memory_space<vmem>>, vector<64x256xbf16>
    %cst_190 = arith.constant dense<0.000000e+00> : vector<8x256xf32>
    %422 = tpu.matmul %420, %421, %cst_190 {dimension_numbers = #tpu.dot_dimension_numbers<[1], [0], [0], [1], [0, 0, 1, 1], [], []>} : vector<8x64xbf16>, vector<64x256xbf16>, vector<8x256xf32> -> vector<8x256xf32>
    %423 = arith.addf %419, %422 : vector<8x256xf32>
    %424 = vector.extract_strided_slice %423 {offsets = [0, 0], sizes = [8, 192], strides = [1, 1]} : vector<8x256xf32> to vector<8x192xf32>
    %425 = arith.negf %424 : vector<8x192xf32>
    %426 = math.exp %425 : vector<8x192xf32>
    %cst_191 = arith.constant 1.000000e+00 : f32
    %427 = vector.broadcast %cst_191 : f32 to vector<8x192xf32>
    %428 = arith.addf %427, %426 : vector<8x192xf32>
    %429 = arith.divf %427, %428 : vector<8x192xf32>
    %430 = vector.extract_strided_slice %423 {offsets = [0, 192], sizes = [8, 64], strides = [1, 1]} : vector<8x256xf32> to vector<8x64xf32>
    %431 = math.tanh %430 : vector<8x64xf32>
    %432 = vector.extract_strided_slice %429 {offsets = [0, 64], sizes = [8, 64], strides = [1, 1]} : vector<8x192xf32> to vector<8x64xf32>
    %433 = arith.mulf %432, %409 : vector<8x64xf32>
    %434 = vector.extract_strided_slice %429 {offsets = [0, 0], sizes = [8, 64], strides = [1, 1]} : vector<8x192xf32> to vector<8x64xf32>
    %435 = arith.mulf %434, %431 : vector<8x64xf32>
    %436 = arith.addf %433, %435 : vector<8x64xf32>
    %437 = vector.extract_strided_slice %429 {offsets = [0, 128], sizes = [8, 64], strides = [1, 1]} : vector<8x192xf32> to vector<8x64xf32>
    %438 = math.tanh %436 : vector<8x64xf32>
    %439 = arith.mulf %437, %438 : vector<8x64xf32>
    %440 = vector.extract_strided_slice %439 {offsets = [0, 0], sizes = [8, 32], strides = [1, 1]} : vector<8x64xf32> to vector<8x32xf32>
    %c48_192 = arith.constant 48 : index
    %c0_193 = arith.constant 0 : index
    %441 = vector.load %arg17[%c48_192, %c0_193] : memref<64x64xf32, #tpu.memory_space<vmem>>, vector<8x32xf32>
    tpu.vector_store %arg17[%c48_192, %c0_193], %440 {strides = array<i32>} : memref<64x64xf32, #tpu.memory_space<vmem>>, vector<8x32xf32>,
    %442 = vector.extract_strided_slice %439 {offsets = [0, 32], sizes = [8, 32], strides = [1, 1]} : vector<8x64xf32> to vector<8x32xf32>
    %c8_194 = arith.constant 8 : index
    %c32_195 = arith.constant 32 : index
    %443 = vector.load %arg17[%c8_194, %c32_195] : memref<64x64xf32, #tpu.memory_space<vmem>>, vector<8x32xf32>
    tpu.vector_store %arg17[%c8_194, %c32_195], %442 {strides = array<i32>} : memref<64x64xf32, #tpu.memory_space<vmem>>, vector<8x32xf32>,
    %c56_196 = arith.constant 56 : index
    %c0_197 = arith.constant 0 : index
    %444 = vector.load %arg16[%c56_196, %c0_197] : memref<64x256xf32, #tpu.memory_space<vmem>>, vector<8x256xf32>
    %c0_198 = arith.constant 0 : index
    %c0_199 = arith.constant 0 : index
    %445 = vector.load %arg16[%c0_198, %c0_199] : memref<64x256xf32, #tpu.memory_space<vmem>>, vector<8x256xf32>
    %446 = arith.select %18, %444, %445 : vector<8x256xi1>, vector<8x256xf32>
    %447 = arith.truncf %439 : vector<8x64xf32> to vector<8x64xbf16>
    %c0_200 = arith.constant 0 : index
    %c0_201 = arith.constant 0 : index
    %448 = vector.load %arg6[%c0_200, %c0_201] : memref<64x256xbf16, #tpu.memory_space<vmem>>, vector<64x256xbf16>
    %cst_202 = arith.constant dense<0.000000e+00> : vector<8x256xf32>
    %449 = tpu.matmul %447, %448, %cst_202 {dimension_numbers = #tpu.dot_dimension_numbers<[1], [0], [0], [1], [0, 0, 1, 1], [], []>} : vector<8x64xbf16>, vector<64x256xbf16>, vector<8x256xf32> -> vector<8x256xf32>
    %450 = arith.addf %446, %449 : vector<8x256xf32>
    %451 = vector.extract_strided_slice %450 {offsets = [0, 0], sizes = [8, 192], strides = [1, 1]} : vector<8x256xf32> to vector<8x192xf32>
    %452 = arith.negf %451 : vector<8x192xf32>
    %453 = math.exp %452 : vector<8x192xf32>
    %cst_203 = arith.constant 1.000000e+00 : f32
    %454 = vector.broadcast %cst_203 : f32 to vector<8x192xf32>
    %455 = arith.addf %454, %453 : vector<8x192xf32>
    %456 = arith.divf %454, %455 : vector<8x192xf32>
    %457 = vector.extract_strided_slice %450 {offsets = [0, 192], sizes = [8, 64], strides = [1, 1]} : vector<8x256xf32> to vector<8x64xf32>
    %458 = math.tanh %457 : vector<8x64xf32>
    %459 = vector.extract_strided_slice %456 {offsets = [0, 64], sizes = [8, 64], strides = [1, 1]} : vector<8x192xf32> to vector<8x64xf32>
    %460 = arith.mulf %459, %436 : vector<8x64xf32>
    %461 = vector.extract_strided_slice %456 {offsets = [0, 0], sizes = [8, 64], strides = [1, 1]} : vector<8x192xf32> to vector<8x64xf32>
    %462 = arith.mulf %461, %458 : vector<8x64xf32>
    %463 = arith.addf %460, %462 : vector<8x64xf32>
    %464 = vector.extract_strided_slice %456 {offsets = [0, 128], sizes = [8, 64], strides = [1, 1]} : vector<8x192xf32> to vector<8x64xf32>
    %465 = math.tanh %463 : vector<8x64xf32>
    %466 = arith.mulf %464, %465 : vector<8x64xf32>
    %467 = vector.extract_strided_slice %466 {offsets = [0, 0], sizes = [8, 32], strides = [1, 1]} : vector<8x64xf32> to vector<8x32xf32>
    %c56_204 = arith.constant 56 : index
    %c0_205 = arith.constant 0 : index
    %468 = vector.load %arg17[%c56_204, %c0_205] : memref<64x64xf32, #tpu.memory_space<vmem>>, vector<8x32xf32>
    tpu.vector_store %arg17[%c56_204, %c0_205], %467 {strides = array<i32>} : memref<64x64xf32, #tpu.memory_space<vmem>>, vector<8x32xf32>,
    %469 = vector.extract_strided_slice %466 {offsets = [0, 32], sizes = [8, 32], strides = [1, 1]} : vector<8x64xf32> to vector<8x32xf32>
    %c0_206 = arith.constant 0 : index
    %c32_207 = arith.constant 32 : index
    %470 = vector.load %arg17[%c0_206, %c32_207] : memref<64x64xf32, #tpu.memory_space<vmem>>, vector<8x32xf32>
    tpu.vector_store %arg17[%c0_206, %c32_207], %469 {strides = array<i32>} : memref<64x64xf32, #tpu.memory_space<vmem>>, vector<8x32xf32>,
    %c0_208 = arith.constant 0 : index
    %c0_209 = arith.constant 0 : index
    %471 = vector.load %arg17[%c0_208, %c0_209] : memref<64x64xf32, #tpu.memory_space<vmem>>, vector<64x64xf32>
    %472 = arith.truncf %471 : vector<64x64xf32> to vector<64x64xbf16>
    %c0_210 = arith.constant 0 : index
    %c0_211 = arith.constant 0 : index
    %473 = vector.load %arg7[%c0_210, %c0_211] : memref<64x1xbf16, #tpu.memory_space<vmem>>, vector<64x1xbf16>
    %cst_212 = arith.constant dense<0.000000e+00> : vector<64x1xf32>
    %474 = tpu.matmul %472, %473, %cst_212 {dimension_numbers = #tpu.dot_dimension_numbers<[1], [0], [0], [1], [0, 0, 1, 1], [], []>} : vector<64x64xbf16>, vector<64x1xbf16>, vector<64x1xf32> -> vector<64x1xf32>
    %c0_213 = arith.constant 0 : index
    %c0_214 = arith.constant 0 : index
    %475 = vector.load %arg8[%c0_213, %c0_214] : memref<1x1xf32, #tpu.memory_space<vmem>>, vector<1x1xf32>
    %476 = vector.broadcast %475 : vector<1x1xf32> to vector<64x1xf32>
    %477 = arith.addf %474, %476 : vector<64x1xf32>
    %478 = vector.extract_strided_slice %477 {offsets = [0, 0], sizes = [8, 1], strides = [1, 1]} : vector<64x1xf32> to vector<8x1xf32>
    %479 = vector.extract_strided_slice %477 {offsets = [8, 0], sizes = [8, 1], strides = [1, 1]} : vector<64x1xf32> to vector<8x1xf32>
    %480 = vector.extract_strided_slice %477 {offsets = [16, 0], sizes = [8, 1], strides = [1, 1]} : vector<64x1xf32> to vector<8x1xf32>
    %481 = vector.extract_strided_slice %477 {offsets = [24, 0], sizes = [8, 1], strides = [1, 1]} : vector<64x1xf32> to vector<8x1xf32>
    %482 = vector.extract_strided_slice %477 {offsets = [32, 0], sizes = [8, 1], strides = [1, 1]} : vector<64x1xf32> to vector<8x1xf32>
    %483 = vector.extract_strided_slice %477 {offsets = [40, 0], sizes = [8, 1], strides = [1, 1]} : vector<64x1xf32> to vector<8x1xf32>
    %484 = vector.extract_strided_slice %477 {offsets = [48, 0], sizes = [8, 1], strides = [1, 1]} : vector<64x1xf32> to vector<8x1xf32>
    %485 = vector.extract_strided_slice %477 {offsets = [56, 0], sizes = [8, 1], strides = [1, 1]} : vector<64x1xf32> to vector<8x1xf32>
    %486 = arith.maximumf %478, %479 : vector<8x1xf32>
    %487 = arith.maximumf %486, %480 : vector<8x1xf32>
    %488 = arith.maximumf %487, %481 : vector<8x1xf32>
    %489 = arith.maximumf %488, %482 : vector<8x1xf32>
    %490 = arith.maximumf %489, %483 : vector<8x1xf32>
    %491 = arith.maximumf %490, %484 : vector<8x1xf32>
    %492 = arith.maximumf %491, %485 : vector<8x1xf32>
    %493 = arith.subf %478, %492 : vector<8x1xf32>
    %494 = math.exp %493 : vector<8x1xf32>
    %495 = arith.subf %479, %492 : vector<8x1xf32>
    %496 = math.exp %495 : vector<8x1xf32>
    %497 = arith.subf %480, %492 : vector<8x1xf32>
    %498 = math.exp %497 : vector<8x1xf32>
    %499 = arith.subf %481, %492 : vector<8x1xf32>
    %500 = math.exp %499 : vector<8x1xf32>
    %501 = arith.subf %482, %492 : vector<8x1xf32>
    %502 = math.exp %501 : vector<8x1xf32>
    %503 = arith.subf %483, %492 : vector<8x1xf32>
    %504 = math.exp %503 : vector<8x1xf32>
    %505 = arith.subf %484, %492 : vector<8x1xf32>
    %506 = math.exp %505 : vector<8x1xf32>
    %507 = arith.subf %485, %492 : vector<8x1xf32>
    %508 = math.exp %507 : vector<8x1xf32>
    %509 = arith.addf %494, %496 : vector<8x1xf32>
    %510 = arith.addf %509, %498 : vector<8x1xf32>
    %511 = arith.addf %510, %500 : vector<8x1xf32>
    %512 = arith.addf %511, %502 : vector<8x1xf32>
    %513 = arith.addf %512, %504 : vector<8x1xf32>
    %514 = arith.addf %513, %506 : vector<8x1xf32>
    %515 = arith.addf %514, %508 : vector<8x1xf32>
    %516 = tpu.reciprocal %515 {approx = true} : vector<8x1xf32> -> vector<8x1xf32>
    %517 = arith.mulf %494, %516 : vector<8x1xf32>
    %518 = vector.extract_strided_slice %471 {offsets = [0, 0], sizes = [8, 64], strides = [1, 1]} : vector<64x64xf32> to vector<8x64xf32>
    %519 = vector.broadcast %517 : vector<8x1xf32> to vector<8x64xf32>
    %520 = arith.mulf %519, %518 : vector<8x64xf32>
    %521 = arith.mulf %496, %516 : vector<8x1xf32>
    %522 = vector.extract_strided_slice %471 {offsets = [8, 0], sizes = [8, 64], strides = [1, 1]} : vector<64x64xf32> to vector<8x64xf32>
    %523 = vector.broadcast %521 : vector<8x1xf32> to vector<8x64xf32>
    %524 = arith.mulf %523, %522 : vector<8x64xf32>
    %525 = arith.addf %520, %524 : vector<8x64xf32>
    %526 = arith.mulf %498, %516 : vector<8x1xf32>
    %527 = vector.extract_strided_slice %471 {offsets = [16, 0], sizes = [8, 64], strides = [1, 1]} : vector<64x64xf32> to vector<8x64xf32>
    %528 = vector.broadcast %526 : vector<8x1xf32> to vector<8x64xf32>
    %529 = arith.mulf %528, %527 : vector<8x64xf32>
    %530 = arith.addf %525, %529 : vector<8x64xf32>
    %531 = arith.mulf %500, %516 : vector<8x1xf32>
    %532 = vector.extract_strided_slice %471 {offsets = [24, 0], sizes = [8, 64], strides = [1, 1]} : vector<64x64xf32> to vector<8x64xf32>
    %533 = vector.broadcast %531 : vector<8x1xf32> to vector<8x64xf32>
    %534 = arith.mulf %533, %532 : vector<8x64xf32>
    %535 = arith.addf %530, %534 : vector<8x64xf32>
    %536 = arith.mulf %502, %516 : vector<8x1xf32>
    %537 = vector.extract_strided_slice %471 {offsets = [32, 0], sizes = [8, 64], strides = [1, 1]} : vector<64x64xf32> to vector<8x64xf32>
    %538 = vector.broadcast %536 : vector<8x1xf32> to vector<8x64xf32>
    %539 = arith.mulf %538, %537 : vector<8x64xf32>
    %540 = arith.addf %535, %539 : vector<8x64xf32>
    %541 = arith.mulf %504, %516 : vector<8x1xf32>
    %542 = vector.extract_strided_slice %471 {offsets = [40, 0], sizes = [8, 64], strides = [1, 1]} : vector<64x64xf32> to vector<8x64xf32>
    %543 = vector.broadcast %541 : vector<8x1xf32> to vector<8x64xf32>
    %544 = arith.mulf %543, %542 : vector<8x64xf32>
    %545 = arith.addf %540, %544 : vector<8x64xf32>
    %546 = arith.mulf %506, %516 : vector<8x1xf32>
    %547 = vector.extract_strided_slice %471 {offsets = [48, 0], sizes = [8, 64], strides = [1, 1]} : vector<64x64xf32> to vector<8x64xf32>
    %548 = vector.broadcast %546 : vector<8x1xf32> to vector<8x64xf32>
    %549 = arith.mulf %548, %547 : vector<8x64xf32>
    %550 = arith.addf %545, %549 : vector<8x64xf32>
    %551 = arith.mulf %508, %516 : vector<8x1xf32>
    %552 = vector.extract_strided_slice %471 {offsets = [56, 0], sizes = [8, 64], strides = [1, 1]} : vector<64x64xf32> to vector<8x64xf32>
    %553 = vector.broadcast %551 : vector<8x1xf32> to vector<8x64xf32>
    %554 = arith.mulf %553, %552 : vector<8x64xf32>
    %555 = arith.addf %550, %554 : vector<8x64xf32>
    %556 = arith.truncf %555 : vector<8x64xf32> to vector<8x64xbf16>
    %c0_215 = arith.constant 0 : index
    %c0_216 = arith.constant 0 : index
    %557 = vector.load %arg9[%c0_215, %c0_216] : memref<64x32xbf16, #tpu.memory_space<vmem>>, vector<64x32xbf16>
    %cst_217 = arith.constant dense<0.000000e+00> : vector<8x32xf32>
    %558 = tpu.matmul %556, %557, %cst_217 {dimension_numbers = #tpu.dot_dimension_numbers<[1], [0], [0], [1], [0, 0, 1, 1], [], []>} : vector<8x64xbf16>, vector<64x32xbf16>, vector<8x32xf32> -> vector<8x32xf32>
    %c0_218 = arith.constant 0 : index
    %c0_219 = arith.constant 0 : index
    %559 = vector.load %arg10[%c0_218, %c0_219] : memref<1x32xf32, #tpu.memory_space<vmem>>, vector<1x32xf32>
    %560 = vector.broadcast %559 : vector<1x32xf32> to vector<8x32xf32>
    %561 = arith.addf %558, %560 : vector<8x32xf32>
    %cst_220 = arith.constant 0.000000e+00 : f32
    %562 = vector.broadcast %cst_220 : f32 to vector<8x32xf32>
    %563 = arith.maximumf %561, %562 : vector<8x32xf32>
    %564 = arith.truncf %563 : vector<8x32xf32> to vector<8x32xbf16>
    %c0_221 = arith.constant 0 : index
    %c0_222 = arith.constant 0 : index
    %565 = vector.load %arg11[%c0_221, %c0_222] : memref<32x32xbf16, #tpu.memory_space<vmem>>, vector<32x32xbf16>
    %cst_223 = arith.constant dense<0.000000e+00> : vector<8x32xf32>
    %566 = tpu.matmul %564, %565, %cst_223 {dimension_numbers = #tpu.dot_dimension_numbers<[1], [0], [0], [1], [0, 0, 1, 1], [], []>} : vector<8x32xbf16>, vector<32x32xbf16>, vector<8x32xf32> -> vector<8x32xf32>
    %c0_224 = arith.constant 0 : index
    %c0_225 = arith.constant 0 : index
    %567 = vector.load %arg12[%c0_224, %c0_225] : memref<1x32xf32, #tpu.memory_space<vmem>>, vector<1x32xf32>
    %568 = vector.broadcast %567 : vector<1x32xf32> to vector<8x32xf32>
    %569 = arith.addf %566, %568 : vector<8x32xf32>
    %cst_226 = arith.constant 0.000000e+00 : f32
    %570 = vector.broadcast %cst_226 : f32 to vector<8x32xf32>
    %571 = arith.maximumf %569, %570 : vector<8x32xf32>
    %572 = arith.truncf %571 : vector<8x32xf32> to vector<8x32xbf16>
    %c0_227 = arith.constant 0 : index
    %c0_228 = arith.constant 0 : index
    %573 = vector.load %arg13[%c0_227, %c0_228] : memref<32x1xbf16, #tpu.memory_space<vmem>>, vector<32x1xbf16>
    %cst_229 = arith.constant dense<0.000000e+00> : vector<8x1xf32>
    %574 = tpu.matmul %572, %573, %cst_229 {dimension_numbers = #tpu.dot_dimension_numbers<[1], [0], [0], [1], [0, 0, 1, 1], [], []>} : vector<8x32xbf16>, vector<32x1xbf16>, vector<8x1xf32> -> vector<8x1xf32>
    %c0_230 = arith.constant 0 : index
    %c0_231 = arith.constant 0 : index
    %575 = vector.load %arg14[%c0_230, %c0_231] : memref<1x1xf32, #tpu.memory_space<vmem>>, vector<1x1xf32>
    %576 = vector.broadcast %575 : vector<1x1xf32> to vector<8x1xf32>
    %577 = arith.addf %574, %576 : vector<8x1xf32>
    %578 = arith.negf %577 : vector<8x1xf32>
    %579 = math.exp %578 : vector<8x1xf32>
    %cst_232 = arith.constant 1.000000e+00 : f32
    %580 = vector.broadcast %cst_232 : f32 to vector<8x1xf32>
    %581 = arith.addf %580, %579 : vector<8x1xf32>
    %582 = arith.divf %580, %581 : vector<8x1xf32>
    %c0_233 = arith.constant 0 : index
    %c0_234 = arith.constant 0 : index
    %583 = vector.load %arg15[%c0_233, %c0_234] : memref<8x1xf32, #tpu.memory_space<vmem>>, vector<8x1xf32>
    tpu.vector_store %arg15[%c0_233, %c0_234], %582 {strides = array<i32>} : memref<8x1xf32, #tpu.memory_space<vmem>>, vector<8x1xf32>,
    return
  }
}

</mosaic_0001>

<llo_original>
// kernel: lstm_network_forward.1
$region0: #{lstm_network_forward.1}
  #allocation0 [shape = 'u32[]', space=smem, size = 0x4, offset = 0x4, fixed_abs, tag = 'smem constant byte address 0x4 - core index']
  #allocation1 [shape = 'u32[72,128]{1,0:T(1,128)}', space=vmem, size = 0x9000, scoped, tag = 'internal scratch']
  #allocation2 [shape = 'f32[64,256]{1,0:T(8,128)}', space=vmem, size = 0x10000, scoped, tag = 'scratch operand']
  #allocation3 [shape = 'f32[64,64]{1,0:T(8,128)}', space=vmem, size = 0x8000, scoped, tag = 'scratch operand']
  #allocation4 [shape = 'f32[1,1]{1,0:T(1,128)S(1)}', space=vmem, size = 0x200, scoped, tag = 'scoped memory for lstm_network_forward.1']
  #allocation5 [shape = 'f32[1,1]{1,0:T(1,128)S(1)}', space=vmem, size = 0x200, scoped, tag = 'scoped memory for lstm_network_forward.1']
  %s0 = inlined_call_operand.vmem [shape: f32[64,8], index: 0, kind: input, shape index: {}]
  %s1 = inlined_call_operand.vmem [shape: bf16[8,256], index: 1, kind: input, shape index: {}]
  %s2 = inlined_call_operand.vmem [shape: f32[1,256], index: 2, kind: input, shape index: {}]
  %s3 = inlined_call_operand.vmem [shape: bf16[64,256], index: 3, kind: input, shape index: {}]
  %s4 = inlined_call_operand.vmem [shape: bf16[64,256], index: 4, kind: input, shape index: {}]
  %s5 = inlined_call_operand.vmem [shape: f32[1,256], index: 5, kind: input, shape index: {}]
  %s6 = inlined_call_operand.vmem [shape: bf16[64,256], index: 6, kind: input, shape index: {}]
  %s7 = inlined_call_operand.vmem [shape: bf16[64,1], index: 7, kind: input, shape index: {}]
  %s8 = inlined_call_operand.<no memory space> [shape: f32[1,1], index: 8, kind: input, shape index: {}]
  %s9 = inlined_call_operand.vmem [shape: bf16[64,32], index: 9, kind: input, shape index: {}]
  %s10 = inlined_call_operand.vmem [shape: f32[1,32], index: 10, kind: input, shape index: {}]
  %s11 = inlined_call_operand.vmem [shape: bf16[32,32], index: 11, kind: input, shape index: {}]
  %s12 = inlined_call_operand.vmem [shape: f32[1,32], index: 12, kind: input, shape index: {}]
  %s13 = inlined_call_operand.vmem [shape: bf16[32,1], index: 13, kind: input, shape index: {}]
  %s14 = inlined_call_operand.<no memory space> [shape: f32[1,1], index: 14, kind: input, shape index: {}]
  %s15 = inlined_call_operand.vmem [shape: f32[8,1], index: 15, kind: output, shape index: {}]
  %s16 = sld [smem:[#allocation0]]
  $region70: #{lstm_network_forward.1} parent=0
    _
  %s18 = ssub.s32 1, %s16
  %s19 = scalar_select 0, %s18, %s16
  %v20 = vstv %s8
  %21 = vst [vmem:[#allocation4] sm:$0x1] %v20
  %v22 = vstv %s14
  %23 = vst [vmem:[#allocation5] sm:$0x1] %v22
  // Predicated region
  $region2: #{lstm_network_forward.1} parent=0 // pred_check
    _
  $region3: #{lstm_network_forward.1} parent=0 // pred_check_branch
    %25 = sbr.rel (0) target = $region5
  $region4: #{lstm_network_forward.1} parent=0 // pred_region
    _
  $region5: #{lstm_network_forward.1} parent=0 // pred_fallthru
    _
  // Predicated region
  $region6: #{lstm_network_forward.1} parent=0 // pred_check
    _
  $region7: #{lstm_network_forward.1} parent=0 // pred_check_branch
    %27 = sbr.rel (0) target = $region9
  $region8: #{lstm_network_forward.1} parent=0 // pred_region
    _
  $region9: #{lstm_network_forward.1} parent=0 // pred_fallthru
    _
  // Predicated region
  $region10: #{lstm_network_forward.1} parent=0 // pred_check
    _
  $region11: #{lstm_network_forward.1} parent=0 // pred_check_branch
    %29 = sbr.rel (0) target = $region13
  $region12: #{lstm_network_forward.1} parent=0 // pred_region
    _
  $region13: #{lstm_network_forward.1} parent=0 // pred_fallthru
    _
  // Predicated region
  $region14: #{lstm_network_forward.1} parent=0 // pred_check
    _
  $region15: #{lstm_network_forward.1} parent=0 // pred_check_branch
    %31 = sbr.rel (0) target = $region17
  $region16: #{lstm_network_forward.1} parent=0 // pred_region
    _
  $region17: #{lstm_network_forward.1} parent=0 // pred_fallthru
    _
  // Predicated region
  $region18: #{lstm_network_forward.1} parent=0 // pred_check
    _
  $region19: #{lstm_network_forward.1} parent=0 // pred_check_branch
    %33 = sbr.rel (0) target = $region21
  $region20: #{lstm_network_forward.1} parent=0 // pred_region
    _
  $region21: #{lstm_network_forward.1} parent=0 // pred_fallthru
    _
  // Predicated region
  $region22: #{lstm_network_forward.1} parent=0 // pred_check
    _
  $region23: #{lstm_network_forward.1} parent=0 // pred_check_branch
    %35 = sbr.rel (0) target = $region25
  $region24: #{lstm_network_forward.1} parent=0 // pred_region
    _
  $region25: #{lstm_network_forward.1} parent=0 // pred_fallthru
    _
  // Predicated region
  $region26: #{lstm_network_forward.1} parent=0 // pred_check
    _
  $region27: #{lstm_network_forward.1} parent=0 // pred_check_branch
    %37 = sbr.rel (0) target = $region29
  $region28: #{lstm_network_forward.1} parent=0 // pred_region
    _
  $region29: #{lstm_network_forward.1} parent=0 // pred_fallthru
    _
  // Predicated region
  $region30: #{lstm_network_forward.1} parent=0 // pred_check
    _
  $region31: #{lstm_network_forward.1} parent=0 // pred_check_branch
    %39 = sbr.rel (0) target = $region33
  $region32: #{lstm_network_forward.1} parent=0 // pred_region
    _
  $region33: #{lstm_network_forward.1} parent=0 // pred_fallthru
    _
  // Predicated region
  $region34: #{lstm_network_forward.1} parent=0 // pred_check
    _
  $region35: #{lstm_network_forward.1} parent=0 // pred_check_branch
    %41 = sbr.rel (0) target = $region37
  $region36: #{lstm_network_forward.1} parent=0 // pred_region
    _
  $region37: #{lstm_network_forward.1} parent=0 // pred_fallthru
    _
  // Predicated region
  $region38: #{lstm_network_forward.1} parent=0 // pred_check
    _
  $region39: #{lstm_network_forward.1} parent=0 // pred_check_branch
    %43 = sbr.rel (0) target = $region41
  $region40: #{lstm_network_forward.1} parent=0 // pred_region
    _
  $region41: #{lstm_network_forward.1} parent=0 // pred_fallthru
    _
  // Predicated region
  $region42: #{lstm_network_forward.1} parent=0 // pred_check
    _
  $region43: #{lstm_network_forward.1} parent=0 // pred_check_branch
    %45 = sbr.rel (0) target = $region45
  $region44: #{lstm_network_forward.1} parent=0 // pred_region
    _
  $region45: #{lstm_network_forward.1} parent=0 // pred_fallthru
    _
  // Predicated region
  $region46: #{lstm_network_forward.1} parent=0 // pred_check
    _
  $region47: #{lstm_network_forward.1} parent=0 // pred_check_branch
    %47 = sbr.rel (0) target = $region49
  $region48: #{lstm_network_forward.1} parent=0 // pred_region
    _
  $region49: #{lstm_network_forward.1} parent=0 // pred_fallthru
    _
  // Predicated region
  $region50: #{lstm_network_forward.1} parent=0 // pred_check
    _
  $region51: #{lstm_network_forward.1} parent=0 // pred_check_branch
    %49 = sbr.rel (0) target = $region53
  $region52: #{lstm_network_forward.1} parent=0 // pred_region
    _
  $region53: #{lstm_network_forward.1} parent=0 // pred_fallthru
    _
  // Predicated region
  $region54: #{lstm_network_forward.1} parent=0 // pred_check
    _
  $region55: #{lstm_network_forward.1} parent=0 // pred_check_branch
    %51 = sbr.rel (0) target = $region57
  $region56: #{lstm_network_forward.1} parent=0 // pred_region
    _
  $region57: #{lstm_network_forward.1} parent=0 // pred_fallthru
    _
  // Predicated region
  $region58: #{lstm_network_forward.1} parent=0 // pred_check
    _
  $region59: #{lstm_network_forward.1} parent=0 // pred_check_branch
    %53 = sbr.rel (0) target = $region61
  $region60: #{lstm_network_forward.1} parent=0 // pred_region
    _
  $region61: #{lstm_network_forward.1} parent=0 // pred_fallthru
    _
  %v55 = vlaneseq
  %v56 = vand.u32 %v55, 127
  %v57 = vadd.s32 %v56, 128
  %vm58 = vcmp.lt.s32.totalorder %v56, 0
  %v59 = vsub.s32 0, %v56
  %v60 = vsel %vm58, %v59, %v56
  %v61 = vshrl.u32 %v60, 6
  %v62 = vand.u32 %v60, 63
  %v63 = vsub.s32 0, %v62
  %v64 = vsel %vm58, %v63, %v62
  %vm65 = vcmp.lt.s32.totalorder %v57, 0
  %v66 = vsub.s32 0, %v57
  %v67 = vsel %vm65, %v66, %v57
  %v68 = vshrl.u32 %v67, 6
  %v69 = vand.u32 %v67, 63
  %v70 = vsub.s32 0, %v69
  %v71 = vsel %vm65, %v70, %v69
  %vm72 = vcmp.ne.s32.totalorder %v64, 0
  %vm73 = vcmp.ne.s32.totalorder %v71, 0
  %vm74 = vcmp.lt.s32.totalorder %v64, 0
  %vm75 = vcmp.lt.s32.totalorder %v71, 0
  %vm76 = vmand %vm74, %vm72
  %vm77 = vmand %vm75, %vm73
  %v78 = vadd.s32 %v64, 64
  %v79 = vadd.s32 %v71, 64
  %v80 = vsel %vm76, %v78, %v64
  %v81 = vsel %vm77, %v79, %v71
  %vm82 = vcmp.lt.s32.totalorder %v80, 32
  %vm83 = vcmp.lt.s32.totalorder %v81, 32
  %v84 = vld [vmem:[%s0] sm:$0xff]
  %v85 = vld [vmem:[%s0 + $0x8] sm:$0xff]
  %v86 = vld [vmem:[%s0 + $0x10] sm:$0xff]
  %v87 = vld [vmem:[%s0 + $0x18] sm:$0xff]
  %v88 = vld [vmem:[%s0 + $0x20] sm:$0xff]
  %v89 = vld [vmem:[%s0 + $0x28] sm:$0xff]
  %v90 = vld [vmem:[%s0 + $0x30] sm:$0xff]
  %v91 = vld [vmem:[%s0 + $0x38] sm:$0xff]
  %v92 = vpack.c.bf16 %v85, %v84
  %v93 = vpack.c.bf16 %v87, %v86
  %v94 = vpack.c.bf16 %v89, %v88
  %v95 = vpack.c.bf16 %v91, %v90
  %v96 = vld [vmem:[%s1] sm:$0xff]
  %v97 = vld [vmem:[%s2] sm:$0x3]
  %v99 = vperm.slane %v97, 0
  %v100 = vperm.slane %v97, 1
  %v104 = vunpack.c.l.b16 %v96
  %v105 = vunpack.c.h.b16 %v96
  %v106 = vpack.c.b16 %v104, %v104
  %v107 = vpack.c.b16 %v105, %v105
  %vm108 = vcmask 64512
  %v110 = vsel %vm108, %v92, 0
  %v113 = vsel %vm108, %v93, 0
  %v116 = vsel %vm108, %v94, 0
  %v119 = vsel %vm108, %v95, 0
  %vm121 = vcmask 1043456
  %v123 = vsel %vm121, %v106, 0
  %v126 = vsel %vm121, %v107, 0
  %128 = vmatpush.bf16.msra.mxu0 0
  %129 = vmatpush.bf16.msra.mxu0 0
  %130 = vmatpush.bf16.msra.mxu0 0
  %131 = vmatpush.bf16.msra.mxu0 0
  %132 = vmatpush.bf16.msra.mxu0 0
  %133 = vmatpush.bf16.msra.mxu0 0
  %134 = vmatpush.bf16.msra.mxu0 0
  %135 = vmatpush.bf16.msra.mxu0 %v123
  %136 = vmatmul.bf16.gmra.mxu0 %v110
  %v137 = vpop.f32.mrf.mxu0
  %v138 = vadd.f32 %v99, %v137
  %v139 = vpop.f32.mrf.mxu0
  %v140 = vadd.f32 %v99, %v139
  %141 = vmatmul.bf16.gmra.mxu0 %v113
  %v142 = vpop.f32.mrf.mxu0
  %v143 = vadd.f32 %v99, %v142
  %v144 = vpop.f32.mrf.mxu0
  %v145 = vadd.f32 %v99, %v144
  %146 = vmatmul.bf16.gmra.mxu0 %v116
  %v147 = vpop.f32.mrf.mxu0
  %v148 = vadd.f32 %v99, %v147
  %v149 = vpop.f32.mrf.mxu0
  %v150 = vadd.f32 %v99, %v149
  %151 = vmatmul.bf16.gmra.mxu0 %v119
  %v152 = vpop.f32.mrf.mxu0
  %v153 = vadd.f32 %v99, %v152
  %v154 = vpop.f32.mrf.mxu0
  %v155 = vadd.f32 %v99, %v154
  %156 = vdwg.mxu0
  %157 = vmatpush.bf16.msra.mxu0 0
  %158 = vmatpush.bf16.msra.mxu0 0
  %159 = vmatpush.bf16.msra.mxu0 0
  %160 = vmatpush.bf16.msra.mxu0 0
  %161 = vmatpush.bf16.msra.mxu0 0
  %162 = vmatpush.bf16.msra.mxu0 0
  %163 = vmatpush.bf16.msra.mxu0 0
  %164 = vmatpush.bf16.msra.mxu0 %v126
  %165 = vmatmul.bf16.gmra.mxu0 %v110
  %v166 = vpop.f32.mrf.mxu0
  %v167 = vadd.f32 %v100, %v166
  %v168 = vpop.f32.mrf.mxu0
  %v169 = vadd.f32 %v100, %v168
  %170 = vmatmul.bf16.gmra.mxu0 %v113
  %v171 = vpop.f32.mrf.mxu0
  %v172 = vadd.f32 %v100, %v171
  %v173 = vpop.f32.mrf.mxu0
  %v174 = vadd.f32 %v100, %v173
  %175 = vmatmul.bf16.gmra.mxu0 %v116
  %v176 = vpop.f32.mrf.mxu0
  %v177 = vadd.f32 %v100, %v176
  %v178 = vpop.f32.mrf.mxu0
  %v179 = vadd.f32 %v100, %v178
  %180 = vmatmul.bf16.gmra.mxu0 %v119
  %v181 = vpop.f32.mrf.mxu0
  %v182 = vadd.f32 %v100, %v181
  %v183 = vpop.f32.mrf.mxu0
  %v184 = vadd.f32 %v100, %v183
  %185 = vdwg.mxu0
  %186 = vst [vmem:[#allocation2] sm:$0xff] %v138
  %187 = vst [vmem:[#allocation2 + $0x8] sm:$0xff] %v167
  %188 = vst [vmem:[#allocation2 + $0x10] sm:$0xff] %v140
  %189 = vst [vmem:[#allocation2 + $0x18] sm:$0xff] %v169
  %190 = vst [vmem:[#allocation2 + $0x20] sm:$0xff] %v143
  %191 = vst [vmem:[#allocation2 + $0x28] sm:$0xff] %v172
  %192 = vst [vmem:[#allocation2 + $0x30] sm:$0xff] %v145
  %193 = vst [vmem:[#allocation2 + $0x38] sm:$0xff] %v174
  %194 = vst [vmem:[#allocation2 + $0x40] sm:$0xff] %v148
  %195 = vst [vmem:[#allocation2 + $0x48] sm:$0xff] %v177
  %196 = vst [vmem:[#allocation2 + $0x50] sm:$0xff] %v150
  %197 = vst [vmem:[#allocation2 + $0x58] sm:$0xff] %v179
  %198 = vst [vmem:[#allocation2 + $0x60] sm:$0xff] %v153
  %199 = vst [vmem:[#allocation2 + $0x68] sm:$0xff] %v182
  %200 = vst [vmem:[#allocation2 + $0x70] sm:$0xff] %v155
  %201 = vst [vmem:[#allocation2 + $0x78] sm:$0xff] %v184
  %v202 = vld [vmem:[#allocation2] sm:$0xff]
  %v203 = vld [vmem:[#allocation2 + $0x8] sm:$0xff]
  %v204 = vld [vmem:[#allocation2 + $0x70] sm:$0xff]
  %v205 = vld [vmem:[#allocation2 + $0x78] sm:$0xff]
  %v206 = vsel %vm82, %v202, %v204
  %v207 = vsel %vm83, %v203, %v205
  %v208 = vld [vmem:[%s3] sm:$0xff]
  %v209 = vld [vmem:[%s3 + $0x8] sm:$0xff]
  %v210 = vld [vmem:[%s3 + $0x10] sm:$0xff]
  %v211 = vld [vmem:[%s3 + $0x18] sm:$0xff]
  %v212 = vld [vmem:[%s3 + $0x20] sm:$0xff]
  %v213 = vld [vmem:[%s3 + $0x28] sm:$0xff]
  %v214 = vld [vmem:[%s3 + $0x30] sm:$0xff]
  %v215 = vld [vmem:[%s3 + $0x38] sm:$0xff]
  %v224 = vunpack.c.l.b16 %v208
  %v225 = vunpack.c.h.b16 %v208
  %v226 = vunpack.c.l.b16 %v209
  %v227 = vunpack.c.h.b16 %v209
  %v228 = vunpack.c.l.b16 %v210
  %v229 = vunpack.c.h.b16 %v210
  %v230 = vunpack.c.l.b16 %v211
  %v231 = vunpack.c.h.b16 %v211
  %v232 = vunpack.c.l.b16 %v212
  %v233 = vunpack.c.h.b16 %v212
  %v234 = vunpack.c.l.b16 %v213
  %v235 = vunpack.c.h.b16 %v213
  %v236 = vunpack.c.l.b16 %v214
  %v237 = vunpack.c.h.b16 %v214
  %v238 = vunpack.c.l.b16 %v215
  %v239 = vunpack.c.h.b16 %v215
  %v240 = vpack.c.b16 %v226, %v224
  %v241 = vpack.c.b16 %v227, %v225
  %v242 = vpack.c.b16 %v230, %v228
  %v243 = vpack.c.b16 %v231, %v229
  %v244 = vpack.c.b16 %v234, %v232
  %v245 = vpack.c.b16 %v235, %v233
  %v246 = vpack.c.b16 %v238, %v236
  %v247 = vpack.c.b16 %v239, %v237
  %vm256 = vcmask 523264
  %v258 = vsel %vm256, 0, 0
  %260 = vmatpush.bf16.msra.mxu0 0
  %261 = vmatpush.bf16.msra.mxu0 0
  %262 = vmatpush.bf16.msra.mxu0 0
  %263 = vmatpush.bf16.msra.mxu0 0
  %264 = vmatpush.bf16.msra.mxu0 %v246
  %265 = vmatpush.bf16.msra.mxu0 %v244
  %266 = vmatpush.bf16.msra.mxu0 %v242
  %267 = vmatpush.bf16.msra.mxu0 %v240
  %268 = vmatmul.bf16.gmra.mxu0 %v258
  %v269 = vpop.f32.mrf.mxu0
  %v270 = vadd.f32 0.0, %v269
  %v271 = vpop.f32.mrf.mxu0
  %272 = vdwg.mxu0
  %273 = vmatpush.bf16.msra.mxu0 0
  %274 = vmatpush.bf16.msra.mxu0 0
  %275 = vmatpush.bf16.msra.mxu0 0
  %276 = vmatpush.bf16.msra.mxu0 0
  %277 = vmatpush.bf16.msra.mxu0 %v247
  %278 = vmatpush.bf16.msra.mxu0 %v245
  %279 = vmatpush.bf16.msra.mxu0 %v243
  %280 = vmatpush.bf16.msra.mxu0 %v241
  %281 = vmatmul.bf16.gmra.mxu0 %v258
  %v282 = vpop.f32.mrf.mxu0
  %v283 = vadd.f32 0.0, %v282
  %v284 = vpop.f32.mrf.mxu0
  %285 = vdwg.mxu0
  %v286 = vadd.f32 %v206, %v270
  %v287 = vadd.f32 %v207, %v283
  %v288 = vxor.u32 %v286, 2147483648
  %v289 = vxor.u32 %v287, 2147483648
  %v290 = vmul.f32 %v288, 1.442695
  %v291 = vpow.pop %v290
  %v292 = vmul.f32 %v289, 1.442695
  %v293 = vpow.pop %v292
  %v294 = vadd.f32 %v291, 1.0
  %v295 = vadd.f32 %v293, 1.0
  %v296 = vrcp.pop %v294
  %v297 = vmul.f32 %v294, %v296
  %v298 = vsub.f32 1.0, %v297
  %v299 = vmul.f32 %v296, %v298
  %v300 = vadd.f32 %v296, %v299
  %vm301 = vweird.f32 %v294
  %vm302 = vweird.f32 %v296
  %vm303 = vmor %vm301, %vm302
  %v304 = vsel %vm303, %v296, %v300
  %v305 = vand.u32 2147483647, %v294
  %vm306 = vcmp.eq.f32.partialorder %v305, 8.507059e+37
  %v307 = vand.u32 %v294, 2147483648
  %v308 = vor.u32 1.1754944e-38, %v307
  %v309 = vsel %vm306, %v308, %v304
  %v310 = vmul.f32 1.0, %v309
  %v311 = vrcp.pop %v295
  %v312 = vmul.f32 %v295, %v311
  %v313 = vsub.f32 1.0, %v312
  %v314 = vmul.f32 %v311, %v313
  %v315 = vadd.f32 %v311, %v314
  %vm316 = vweird.f32 %v295
  %vm317 = vweird.f32 %v311
  %vm318 = vmor %vm316, %vm317
  %v319 = vsel %vm318, %v311, %v315
  %v320 = vand.u32 2147483647, %v295
  %vm321 = vcmp.eq.f32.partialorder %v320, 8.507059e+37
  %v322 = vand.u32 %v295, 2147483648
  %v323 = vor.u32 1.1754944e-38, %v322
  %v324 = vsel %vm321, %v323, %v319
  %v325 = vmul.f32 1.0, %v324
  %v326 = vtanh.pop %v287
  %v327 = vmul.f32 %v310, 0.0
  %329 = vrot.lane.b32.xlu0 %v326, 64
  %v330 = vpop.permute.xlu0 %329
  %v332 = vmul.f32 %v310, %v330
  %334 = vrot.lane.b32.xlu0 %v332, 64
  %v335 = vpop.permute.xlu0 %334
  %v337 = vadd.f32 %v327, %v335
  %v338 = vtanh.pop %v337
  %340 = vrot.lane.b32.xlu0 %v338, 64
  %v341 = vpop.permute.xlu0 %340
  %v343 = vmul.f32 %v325, %v341
  %vm344 = vcmask 261120
  %345 = vst.msk [vmem:[#allocation3] sm:$0xff] %vm344, %v343
  %vm346 = vcmask 523520
  %347 = vst.msk [vmem:[#allocation3 + $0x38] sm:$0xff] %vm346, %v343
  %v348 = vld [vmem:[#allocation2 + $0x10] sm:$0xff]
  %v349 = vld [vmem:[#allocation2 + $0x18] sm:$0xff]
  %v350 = vld [vmem:[#allocation2 + $0x60] sm:$0xff]
  %v351 = vld [vmem:[#allocation2 + $0x68] sm:$0xff]
  %v352 = vsel %vm82, %v348, %v350
  %v353 = vsel %vm83, %v349, %v351
  %v354 = vpack.c.bf16 %v343, %v343
  %v355 = vld [vmem:[%s3] sm:$0xff]
  %v356 = vld [vmem:[%s3 + $0x8] sm:$0xff]
  %v357 = vld [vmem:[%s3 + $0x10] sm:$0xff]
  %v358 = vld [vmem:[%s3 + $0x18] sm:$0xff]
  %v359 = vld [vmem:[%s3 + $0x20] sm:$0xff]
  %v360 = vld [vmem:[%s3 + $0x28] sm:$0xff]
  %v361 = vld [vmem:[%s3 + $0x30] sm:$0xff]
  %v362 = vld [vmem:[%s3 + $0x38] sm:$0xff]
  %v371 = vunpack.c.l.b16 %v355
  %v372 = vunpack.c.h.b16 %v355
  %v373 = vunpack.c.l.b16 %v356
  %v374 = vunpack.c.h.b16 %v356
  %v375 = vunpack.c.l.b16 %v357
  %v376 = vunpack.c.h.b16 %v357
  %v377 = vunpack.c.l.b16 %v358
  %v378 = vunpack.c.h.b16 %v358
  %v379 = vunpack.c.l.b16 %v359
  %v380 = vunpack.c.h.b16 %v359
  %v381 = vunpack.c.l.b16 %v360
  %v382 = vunpack.c.h.b16 %v360
  %v383 = vunpack.c.l.b16 %v361
  %v384 = vunpack.c.h.b16 %v361
  %v385 = vunpack.c.l.b16 %v362
  %v386 = vunpack.c.h.b16 %v362
  %v387 = vpack.c.b16 %v373, %v371
  %v388 = vpack.c.b16 %v374, %v372
  %v389 = vpack.c.b16 %v377, %v375
  %v390 = vpack.c.b16 %v378, %v376
  %v391 = vpack.c.b16 %v381, %v379
  %v392 = vpack.c.b16 %v382, %v380
  %v393 = vpack.c.b16 %v385, %v383
  %v394 = vpack.c.b16 %v386, %v384
  %v404 = vsel %vm256, %v354, 0
  %406 = vmatpush.bf16.msra.mxu0 0
  %407 = vmatpush.bf16.msra.mxu0 0
  %408 = vmatpush.bf16.msra.mxu0 0
  %409 = vmatpush.bf16.msra.mxu0 0
  %410 = vmatpush.bf16.msra.mxu0 %v393
  %411 = vmatpush.bf16.msra.mxu0 %v391
  %412 = vmatpush.bf16.msra.mxu0 %v389
  %413 = vmatpush.bf16.msra.mxu0 %v387
  %414 = vmatmul.bf16.gmra.mxu0 %v404
  %v415 = vpop.f32.mrf.mxu0
  %v416 = vadd.f32 0.0, %v415
  %v417 = vpop.f32.mrf.mxu0
  %418 = vdwg.mxu0
  %419 = vmatpush.bf16.msra.mxu0 0
  %420 = vmatpush.bf16.msra.mxu0 0
  %421 = vmatpush.bf16.msra.mxu0 0
  %422 = vmatpush.bf16.msra.mxu0 0
  %423 = vmatpush.bf16.msra.mxu0 %v394
  %424 = vmatpush.bf16.msra.mxu0 %v392
  %425 = vmatpush.bf16.msra.mxu0 %v390
  %426 = vmatpush.bf16.msra.mxu0 %v388
  %427 = vmatmul.bf16.gmra.mxu0 %v404
  %v428 = vpop.f32.mrf.mxu0
  %v429 = vadd.f32 0.0, %v428
  %v430 = vpop.f32.mrf.mxu0
  %431 = vdwg.mxu0
  %v432 = vadd.f32 %v352, %v416
  %v433 = vadd.f32 %v353, %v429
  %v434 = vxor.u32 %v432, 2147483648
  %v435 = vxor.u32 %v433, 2147483648
  %v436 = vmul.f32 %v434, 1.442695
  %v437 = vpow.pop %v436
  %v438 = vmul.f32 %v435, 1.442695
  %v439 = vpow.pop %v438
  %v440 = vadd.f32 %v437, 1.0
  %v441 = vadd.f32 %v439, 1.0
  %v442 = vrcp.pop %v440
  %v443 = vmul.f32 %v440, %v442
  %v444 = vsub.f32 1.0, %v443
  %v445 = vmul.f32 %v442, %v444
  %v446 = vadd.f32 %v442, %v445
  %vm447 = vweird.f32 %v440
  %vm448 = vweird.f32 %v442
  %vm449 = vmor %vm447, %vm448
  %v450 = vsel %vm449, %v442, %v446
  %v451 = vand.u32 2147483647, %v440
  %vm452 = vcmp.eq.f32.partialorder %v451, 8.507059e+37
  %v453 = vand.u32 %v440, 2147483648
  %v454 = vor.u32 1.1754944e-38, %v453
  %v455 = vsel %vm452, %v454, %v450
  %v456 = vmul.f32 1.0, %v455
  %v457 = vrcp.pop %v441
  %v458 = vmul.f32 %v441, %v457
  %v459 = vsub.f32 1.0, %v458
  %v460 = vmul.f32 %v457, %v459
  %v461 = vadd.f32 %v457, %v460
  %vm462 = vweird.f32 %v441
  %vm463 = vweird.f32 %v457
  %vm464 = vmor %vm462, %vm463
  %v465 = vsel %vm464, %v457, %v461
  %v466 = vand.u32 2147483647, %v441
  %vm467 = vcmp.eq.f32.partialorder %v466, 8.507059e+37
  %v468 = vand.u32 %v441, 2147483648
  %v469 = vor.u32 1.1754944e-38, %v468
  %v470 = vsel %vm467, %v469, %v465
  %v471 = vmul.f32 1.0, %v470
  %v472 = vtanh.pop %v433
  %v473 = vmul.f32 %v456, %v337
  %475 = vrot.lane.b32.xlu0 %v472, 64
  %v476 = vpop.permute.xlu0 %475
  %v478 = vmul.f32 %v456, %v476
  %480 = vrot.lane.b32.xlu0 %v478, 64
  %v481 = vpop.permute.xlu0 %480
  %v483 = vadd.f32 %v473, %v481
  %v484 = vtanh.pop %v483
  %486 = vrot.lane.b32.xlu0 %v484, 64
  %v487 = vpop.permute.xlu0 %486
  %v489 = vmul.f32 %v471, %v487
  %490 = vst.msk [vmem:[#allocation3 + $0x8] sm:$0xff] %vm344, %v489
  %491 = vst.msk [vmem:[#allocation3 + $0x30] sm:$0xff] %vm346, %v489
  %v492 = vld [vmem:[#allocation2 + $0x20] sm:$0xff]
  %v493 = vld [vmem:[#allocation2 + $0x28] sm:$0xff]
  %v494 = vld [vmem:[#allocation2 + $0x50] sm:$0xff]
  %v495 = vld [vmem:[#allocation2 + $0x58] sm:$0xff]
  %v496 = vsel %vm82, %v492, %v494
  %v497 = vsel %vm83, %v493, %v495
  %v498 = vpack.c.bf16 %v489, %v489
  %v499 = vld [vmem:[%s3] sm:$0xff]
  %v500 = vld [vmem:[%s3 + $0x8] sm:$0xff]
  %v501 = vld [vmem:[%s3 + $0x10] sm:$0xff]
  %v502 = vld [vmem:[%s3 + $0x18] sm:$0xff]
  %v503 = vld [vmem:[%s3 + $0x20] sm:$0xff]
  %v504 = vld [vmem:[%s3 + $0x28] sm:$0xff]
  %v505 = vld [vmem:[%s3 + $0x30] sm:$0xff]
  %v506 = vld [vmem:[%s3 + $0x38] sm:$0xff]
  %v515 = vunpack.c.l.b16 %v499
  %v516 = vunpack.c.h.b16 %v499
  %v517 = vunpack.c.l.b16 %v500
  %v518 = vunpack.c.h.b16 %v500
  %v519 = vunpack.c.l.b16 %v501
  %v520 = vunpack.c.h.b16 %v501
  %v521 = vunpack.c.l.b16 %v502
  %v522 = vunpack.c.h.b16 %v502
  %v523 = vunpack.c.l.b16 %v503
  %v524 = vunpack.c.h.b16 %v503
  %v525 = vunpack.c.l.b16 %v504
  %v526 = vunpack.c.h.b16 %v504
  %v527 = vunpack.c.l.b16 %v505
  %v528 = vunpack.c.h.b16 %v505
  %v529 = vunpack.c.l.b16 %v506
  %v530 = vunpack.c.h.b16 %v506
  %v531 = vpack.c.b16 %v517, %v515
  %v532 = vpack.c.b16 %v518, %v516
  %v533 = vpack.c.b16 %v521, %v519
  %v534 = vpack.c.b16 %v522, %v520
  %v535 = vpack.c.b16 %v525, %v523
  %v536 = vpack.c.b16 %v526, %v524
  %v537 = vpack.c.b16 %v529, %v527
  %v538 = vpack.c.b16 %v530, %v528
  %v548 = vsel %vm256, %v498, 0
  %550 = vmatpush.bf16.msra.mxu0 0
  %551 = vmatpush.bf16.msra.mxu0 0
  %552 = vmatpush.bf16.msra.mxu0 0
  %553 = vmatpush.bf16.msra.mxu0 0
  %554 = vmatpush.bf16.msra.mxu0 %v537
  %555 = vmatpush.bf16.msra.mxu0 %v535
  %556 = vmatpush.bf16.msra.mxu0 %v533
  %557 = vmatpush.bf16.msra.mxu0 %v531
  %558 = vmatmul.bf16.gmra.mxu0 %v548
  %v559 = vpop.f32.mrf.mxu0
  %v560 = vadd.f32 0.0, %v559
  %v561 = vpop.f32.mrf.mxu0
  %562 = vdwg.mxu0
  %563 = vmatpush.bf16.msra.mxu0 0
  %564 = vmatpush.bf16.msra.mxu0 0
  %565 = vmatpush.bf16.msra.mxu0 0
  %566 = vmatpush.bf16.msra.mxu0 0
  %567 = vmatpush.bf16.msra.mxu0 %v538
  %568 = vmatpush.bf16.msra.mxu0 %v536
  %569 = vmatpush.bf16.msra.mxu0 %v534
  %570 = vmatpush.bf16.msra.mxu0 %v532
  %571 = vmatmul.bf16.gmra.mxu0 %v548
  %v572 = vpop.f32.mrf.mxu0
  %v573 = vadd.f32 0.0, %v572
  %v574 = vpop.f32.mrf.mxu0
  %575 = vdwg.mxu0
  %v576 = vadd.f32 %v496, %v560
  %v577 = vadd.f32 %v497, %v573
  %v578 = vxor.u32 %v576, 2147483648
  %v579 = vxor.u32 %v577, 2147483648
  %v580 = vmul.f32 %v578, 1.442695
  %v581 = vpow.pop %v580
  %v582 = vmul.f32 %v579, 1.442695
  %v583 = vpow.pop %v582
  %v584 = vadd.f32 %v581, 1.0
  %v585 = vadd.f32 %v583, 1.0
  %v586 = vrcp.pop %v584
  %v587 = vmul.f32 %v584, %v586
  %v588 = vsub.f32 1.0, %v587
  %v589 = vmul.f32 %v586, %v588
  %v590 = vadd.f32 %v586, %v589
  %vm591 = vweird.f32 %v584
  %vm592 = vweird.f32 %v586
  %vm593 = vmor %vm591, %vm592
  %v594 = vsel %vm593, %v586, %v590
  %v595 = vand.u32 2147483647, %v584
  %vm596 = vcmp.eq.f32.partialorder %v595, 8.507059e+37
  %v597 = vand.u32 %v584, 2147483648
  %v598 = vor.u32 1.1754944e-38, %v597
  %v599 = vsel %vm596, %v598, %v594
  %v600 = vmul.f32 1.0, %v599
  %v601 = vrcp.pop %v585
  %v602 = vmul.f32 %v585, %v601
  %v603 = vsub.f32 1.0, %v602
  %v604 = vmul.f32 %v601, %v603
  %v605 = vadd.f32 %v601, %v604
  %vm606 = vweird.f32 %v585
  %vm607 = vweird.f32 %v601
  %vm608 = vmor %vm606, %vm607
  %v609 = vsel %vm608, %v601, %v605
  %v610 = vand.u32 2147483647, %v585
  %vm611 = vcmp.eq.f32.partialorder %v610, 8.507059e+37
  %v612 = vand.u32 %v585, 2147483648
  %v613 = vor.u32 1.1754944e-38, %v612
  %v614 = vsel %vm611, %v613, %v609
  %v615 = vmul.f32 1.0, %v614
  %v616 = vtanh.pop %v577
  %v617 = vmul.f32 %v600, %v483
  %619 = vrot.lane.b32.xlu0 %v616, 64
  %v620 = vpop.permute.xlu0 %619
  %v622 = vmul.f32 %v600, %v620
  %624 = vrot.lane.b32.xlu0 %v622, 64
  %v625 = vpop.permute.xlu0 %624
  %v627 = vadd.f32 %v617, %v625
  %v628 = vtanh.pop %v627
  %630 = vrot.lane.b32.xlu0 %v628, 64
  %v631 = vpop.permute.xlu0 %630
  %v633 = vmul.f32 %v615, %v631
  %634 = vst.msk [vmem:[#allocation3 + $0x10] sm:$0xff] %vm344, %v633
  %635 = vst.msk [vmem:[#allocation3 + $0x28] sm:$0xff] %vm346, %v633
  %v636 = vld [vmem:[#allocation2 + $0x30] sm:$0xff]
  %v637 = vld [vmem:[#allocation2 + $0x38] sm:$0xff]
  %v638 = vld [vmem:[#allocation2 + $0x40] sm:$0xff]
  %v639 = vld [vmem:[#allocation2 + $0x48] sm:$0xff]
  %v640 = vsel %vm82, %v636, %v638
  %v641 = vsel %vm83, %v637, %v639
  %v642 = vpack.c.bf16 %v633, %v633
  %v643 = vld [vmem:[%s3] sm:$0xff]
  %v644 = vld [vmem:[%s3 + $0x8] sm:$0xff]
  %v645 = vld [vmem:[%s3 + $0x10] sm:$0xff]
  %v646 = vld [vmem:[%s3 + $0x18] sm:$0xff]
  %v647 = vld [vmem:[%s3 + $0x20] sm:$0xff]
  %v648 = vld [vmem:[%s3 + $0x28] sm:$0xff]
  %v649 = vld [vmem:[%s3 + $0x30] sm:$0xff]
  %v650 = vld [vmem:[%s3 + $0x38] sm:$0xff]
  %v659 = vunpack.c.l.b16 %v643
  %v660 = vunpack.c.h.b16 %v643
  %v661 = vunpack.c.l.b16 %v644
  %v662 = vunpack.c.h.b16 %v644
  %v663 = vunpack.c.l.b16 %v645
  %v664 = vunpack.c.h.b16 %v645
  %v665 = vunpack.c.l.b16 %v646
  %v666 = vunpack.c.h.b16 %v646
  %v667 = vunpack.c.l.b16 %v647
  %v668 = vunpack.c.h.b16 %v647
  %v669 = vunpack.c.l.b16 %v648
  %v670 = vunpack.c.h.b16 %v648
  %v671 = vunpack.c.l.b16 %v649
  %v672 = vunpack.c.h.b16 %v649
  %v673 = vunpack.c.l.b16 %v650
  %v674 = vunpack.c.h.b16 %v650
  %v675 = vpack.c.b16 %v661, %v659
  %v676 = vpack.c.b16 %v662, %v660
  %v677 = vpack.c.b16 %v665, %v663
  %v678 = vpack.c.b16 %v666, %v664
  %v679 = vpack.c.b16 %v669, %v667
  %v680 = vpack.c.b16 %v670, %v668
  %v681 = vpack.c.b16 %v673, %v671
  %v682 = vpack.c.b16 %v674, %v672
  %v692 = vsel %vm256, %v642, 0
  %694 = vmatpush.bf16.msra.mxu0 0
  %695 = vmatpush.bf16.msra.mxu0 0
  %696 = vmatpush.bf16.msra.mxu0 0
  %697 = vmatpush.bf16.msra.mxu0 0
  %698 = vmatpush.bf16.msra.mxu0 %v681
  %699 = vmatpush.bf16.msra.mxu0 %v679
  %700 = vmatpush.bf16.msra.mxu0 %v677
  %701 = vmatpush.bf16.msra.mxu0 %v675
  %702 = vmatmul.bf16.gmra.mxu0 %v692
  %v703 = vpop.f32.mrf.mxu0
  %v704 = vadd.f32 0.0, %v703
  %v705 = vpop.f32.mrf.mxu0
  %706 = vdwg.mxu0
  %707 = vmatpush.bf16.msra.mxu0 0
  %708 = vmatpush.bf16.msra.mxu0 0
  %709 = vmatpush.bf16.msra.mxu0 0
  %710 = vmatpush.bf16.msra.mxu0 0
  %711 = vmatpush.bf16.msra.mxu0 %v682
  %712 = vmatpush.bf16.msra.mxu0 %v680
  %713 = vmatpush.bf16.msra.mxu0 %v678
  %714 = vmatpush.bf16.msra.mxu0 %v676
  %715 = vmatmul.bf16.gmra.mxu0 %v692
  %v716 = vpop.f32.mrf.mxu0
  %v717 = vadd.f32 0.0, %v716
  %v718 = vpop.f32.mrf.mxu0
  %719 = vdwg.mxu0
  %v720 = vadd.f32 %v640, %v704
  %v721 = vadd.f32 %v641, %v717
  %v722 = vxor.u32 %v720, 2147483648
  %v723 = vxor.u32 %v721, 2147483648
  %v724 = vmul.f32 %v722, 1.442695
  %v725 = vpow.pop %v724
  %v726 = vmul.f32 %v723, 1.442695
  %v727 = vpow.pop %v726
  %v728 = vadd.f32 %v725, 1.0
  %v729 = vadd.f32 %v727, 1.0
  %v730 = vrcp.pop %v728
  %v731 = vmul.f32 %v728, %v730
  %v732 = vsub.f32 1.0, %v731
  %v733 = vmul.f32 %v730, %v732
  %v734 = vadd.f32 %v730, %v733
  %vm735 = vweird.f32 %v728
  %vm736 = vweird.f32 %v730
  %vm737 = vmor %vm735, %vm736
  %v738 = vsel %vm737, %v730, %v734
  %v739 = vand.u32 2147483647, %v728
  %vm740 = vcmp.eq.f32.partialorder %v739, 8.507059e+37
  %v741 = vand.u32 %v728, 2147483648
  %v742 = vor.u32 1.1754944e-38, %v741
  %v743 = vsel %vm740, %v742, %v738
  %v744 = vmul.f32 1.0, %v743
  %v745 = vrcp.pop %v729
  %v746 = vmul.f32 %v729, %v745
  %v747 = vsub.f32 1.0, %v746
  %v748 = vmul.f32 %v745, %v747
  %v749 = vadd.f32 %v745, %v748
  %vm750 = vweird.f32 %v729
  %vm751 = vweird.f32 %v745
  %vm752 = vmor %vm750, %vm751
  %v753 = vsel %vm752, %v745, %v749
  %v754 = vand.u32 2147483647, %v729
  %vm755 = vcmp.eq.f32.partialorder %v754, 8.507059e+37
  %v756 = vand.u32 %v729, 2147483648
  %v757 = vor.u32 1.1754944e-38, %v756
  %v758 = vsel %vm755, %v757, %v753
  %v759 = vmul.f32 1.0, %v758
  %v760 = vtanh.pop %v721
  %v761 = vmul.f32 %v744, %v627
  %763 = vrot.lane.b32.xlu0 %v760, 64
  %v764 = vpop.permute.xlu0 %763
  %v766 = vmul.f32 %v744, %v764
  %768 = vrot.lane.b32.xlu0 %v766, 64
  %v769 = vpop.permute.xlu0 %768
  %v771 = vadd.f32 %v761, %v769
  %v772 = vtanh.pop %v771
  %774 = vrot.lane.b32.xlu0 %v772, 64
  %v775 = vpop.permute.xlu0 %774
  %v777 = vmul.f32 %v759, %v775
  %778 = vst.msk [vmem:[#allocation3 + $0x18] sm:$0xff] %vm344, %v777
  %779 = vst.msk [vmem:[#allocation3 + $0x20] sm:$0xff] %vm346, %v777
  %v780 = vld [vmem:[#allocation2 + $0x40] sm:$0xff]
  %v781 = vld [vmem:[#allocation2 + $0x48] sm:$0xff]
  %v782 = vld [vmem:[#allocation2 + $0x30] sm:$0xff]
  %v783 = vld [vmem:[#allocation2 + $0x38] sm:$0xff]
  %v784 = vsel %vm82, %v780, %v782
  %v785 = vsel %vm83, %v781, %v783
  %v786 = vpack.c.bf16 %v777, %v777
  %v787 = vld [vmem:[%s3] sm:$0xff]
  %v788 = vld [vmem:[%s3 + $0x8] sm:$0xff]
  %v789 = vld [vmem:[%s3 + $0x10] sm:$0xff]
  %v790 = vld [vmem:[%s3 + $0x18] sm:$0xff]
  %v791 = vld [vmem:[%s3 + $0x20] sm:$0xff]
  %v792 = vld [vmem:[%s3 + $0x28] sm:$0xff]
  %v793 = vld [vmem:[%s3 + $0x30] sm:$0xff]
  %v794 = vld [vmem:[%s3 + $0x38] sm:$0xff]
  %v803 = vunpack.c.l.b16 %v787
  %v804 = vunpack.c.h.b16 %v787
  %v805 = vunpack.c.l.b16 %v788
  %v806 = vunpack.c.h.b16 %v788
  %v807 = vunpack.c.l.b16 %v789
  %v808 = vunpack.c.h.b16 %v789
  %v809 = vunpack.c.l.b16 %v790
  %v810 = vunpack.c.h.b16 %v790
  %v811 = vunpack.c.l.b16 %v791
  %v812 = vunpack.c.h.b16 %v791
  %v813 = vunpack.c.l.b16 %v792
  %v814 = vunpack.c.h.b16 %v792
  %v815 = vunpack.c.l.b16 %v793
  %v816 = vunpack.c.h.b16 %v793
  %v817 = vunpack.c.l.b16 %v794
  %v818 = vunpack.c.h.b16 %v794
  %v819 = vpack.c.b16 %v805, %v803
  %v820 = vpack.c.b16 %v806, %v804
  %v821 = vpack.c.b16 %v809, %v807
  %v822 = vpack.c.b16 %v810, %v808
  %v823 = vpack.c.b16 %v813, %v811
  %v824 = vpack.c.b16 %v814, %v812
  %v825 = vpack.c.b16 %v817, %v815
  %v826 = vpack.c.b16 %v818, %v816
  %v836 = vsel %vm256, %v786, 0
  %838 = vmatpush.bf16.msra.mxu0 0
  %839 = vmatpush.bf16.msra.mxu0 0
  %840 = vmatpush.bf16.msra.mxu0 0
  %841 = vmatpush.bf16.msra.mxu0 0
  %842 = vmatpush.bf16.msra.mxu0 %v825
  %843 = vmatpush.bf16.msra.mxu0 %v823
  %844 = vmatpush.bf16.msra.mxu0 %v821
  %845 = vmatpush.bf16.msra.mxu0 %v819
  %846 = vmatmul.bf16.gmra.mxu0 %v836
  %v847 = vpop.f32.mrf.mxu0
  %v848 = vadd.f32 0.0, %v847
  %v849 = vpop.f32.mrf.mxu0
  %850 = vdwg.mxu0
  %851 = vmatpush.bf16.msra.mxu0 0
  %852 = vmatpush.bf16.msra.mxu0 0
  %853 = vmatpush.bf16.msra.mxu0 0
  %854 = vmatpush.bf16.msra.mxu0 0
  %855 = vmatpush.bf16.msra.mxu0 %v826
  %856 = vmatpush.bf16.msra.mxu0 %v824
  %857 = vmatpush.bf16.msra.mxu0 %v822
  %858 = vmatpush.bf16.msra.mxu0 %v820
  %859 = vmatmul.bf16.gmra.mxu0 %v836
  %v860 = vpop.f32.mrf.mxu0
  %v861 = vadd.f32 0.0, %v860
  %v862 = vpop.f32.mrf.mxu0
  %863 = vdwg.mxu0
  %v864 = vadd.f32 %v784, %v848
  %v865 = vadd.f32 %v785, %v861
  %v866 = vxor.u32 %v864, 2147483648
  %v867 = vxor.u32 %v865, 2147483648
  %v868 = vmul.f32 %v866, 1.442695
  %v869 = vpow.pop %v868
  %v870 = vmul.f32 %v867, 1.442695
  %v871 = vpow.pop %v870
  %v872 = vadd.f32 %v869, 1.0
  %v873 = vadd.f32 %v871, 1.0
  %v874 = vrcp.pop %v872
  %v875 = vmul.f32 %v872, %v874
  %v876 = vsub.f32 1.0, %v875
  %v877 = vmul.f32 %v874, %v876
  %v878 = vadd.f32 %v874, %v877
  %vm879 = vweird.f32 %v872
  %vm880 = vweird.f32 %v874
  %vm881 = vmor %vm879, %vm880
  %v882 = vsel %vm881, %v874, %v878
  %v883 = vand.u32 2147483647, %v872
  %vm884 = vcmp.eq.f32.partialorder %v883, 8.507059e+37
  %v885 = vand.u32 %v872, 2147483648
  %v886 = vor.u32 1.1754944e-38, %v885
  %v887 = vsel %vm884, %v886, %v882
  %v888 = vmul.f32 1.0, %v887
  %v889 = vrcp.pop %v873
  %v890 = vmul.f32 %v873, %v889
  %v891 = vsub.f32 1.0, %v890
  %v892 = vmul.f32 %v889, %v891
  %v893 = vadd.f32 %v889, %v892
  %vm894 = vweird.f32 %v873
  %vm895 = vweird.f32 %v889
  %vm896 = vmor %vm894, %vm895
  %v897 = vsel %vm896, %v889, %v893
  %v898 = vand.u32 2147483647, %v873
  %vm899 = vcmp.eq.f32.partialorder %v898, 8.507059e+37
  %v900 = vand.u32 %v873, 2147483648
  %v901 = vor.u32 1.1754944e-38, %v900
  %v902 = vsel %vm899, %v901, %v897
  %v903 = vmul.f32 1.0, %v902
  %v904 = vtanh.pop %v865
  %v905 = vmul.f32 %v888, %v771
  %907 = vrot.lane.b32.xlu0 %v904, 64
  %v908 = vpop.permute.xlu0 %907
  %v910 = vmul.f32 %v888, %v908
  %912 = vrot.lane.b32.xlu0 %v910, 64
  %v913 = vpop.permute.xlu0 %912
  %v915 = vadd.f32 %v905, %v913
  %v916 = vtanh.pop %v915
  %918 = vrot.lane.b32.xlu0 %v916, 64
  %v919 = vpop.permute.xlu0 %918
  %v921 = vmul.f32 %v903, %v919
  %922 = vst.msk [vmem:[#allocation3 + $0x20] sm:$0xff] %vm344, %v921
  %923 = vst.msk [vmem:[#allocation3 + $0x18] sm:$0xff] %vm346, %v921
  %v924 = vld [vmem:[#allocation2 + $0x50] sm:$0xff]
  %v925 = vld [vmem:[#allocation2 + $0x58] sm:$0xff]
  %v926 = vld [vmem:[#allocation2 + $0x20] sm:$0xff]
  %v927 = vld [vmem:[#allocation2 + $0x28] sm:$0xff]
  %v928 = vsel %vm82, %v924, %v926
  %v929 = vsel %vm83, %v925, %v927
  %v930 = vpack.c.bf16 %v921, %v921
  %v931 = vld [vmem:[%s3] sm:$0xff]
  %v932 = vld [vmem:[%s3 + $0x8] sm:$0xff]
  %v933 = vld [vmem:[%s3 + $0x10] sm:$0xff]
  %v934 = vld [vmem:[%s3 + $0x18] sm:$0xff]
  %v935 = vld [vmem:[%s3 + $0x20] sm:$0xff]
  %v936 = vld [vmem:[%s3 + $0x28] sm:$0xff]
  %v937 = vld [vmem:[%s3 + $0x30] sm:$0xff]
  %v938 = vld [vmem:[%s3 + $0x38] sm:$0xff]
  %v947 = vunpack.c.l.b16 %v931
  %v948 = vunpack.c.h.b16 %v931
  %v949 = vunpack.c.l.b16 %v932
  %v950 = vunpack.c.h.b16 %v932
  %v951 = vunpack.c.l.b16 %v933
  %v952 = vunpack.c.h.b16 %v933
  %v953 = vunpack.c.l.b16 %v934
  %v954 = vunpack.c.h.b16 %v934
  %v955 = vunpack.c.l.b16 %v935
  %v956 = vunpack.c.h.b16 %v935
  %v957 = vunpack.c.l.b16 %v936
  %v958 = vunpack.c.h.b16 %v936
  %v959 = vunpack.c.l.b16 %v937
  %v960 = vunpack.c.h.b16 %v937
  %v961 = vunpack.c.l.b16 %v938
  %v962 = vunpack.c.h.b16 %v938
  %v963 = vpack.c.b16 %v949, %v947
  %v964 = vpack.c.b16 %v950, %v948
  %v965 = vpack.c.b16 %v953, %v951
  %v966 = vpack.c.b16 %v954, %v952
  %v967 = vpack.c.b16 %v957, %v955
  %v968 = vpack.c.b16 %v958, %v956
  %v969 = vpack.c.b16 %v961, %v959
  %v970 = vpack.c.b16 %v962, %v960
  %v980 = vsel %vm256, %v930, 0
  %982 = vmatpush.bf16.msra.mxu0 0
  %983 = vmatpush.bf16.msra.mxu0 0
  %984 = vmatpush.bf16.msra.mxu0 0
  %985 = vmatpush.bf16.msra.mxu0 0
  %986 = vmatpush.bf16.msra.mxu0 %v969
  %987 = vmatpush.bf16.msra.mxu0 %v967
  %988 = vmatpush.bf16.msra.mxu0 %v965
  %989 = vmatpush.bf16.msra.mxu0 %v963
  %990 = vmatmul.bf16.gmra.mxu0 %v980
  %v991 = vpop.f32.mrf.mxu0
  %v992 = vadd.f32 0.0, %v991
  %v993 = vpop.f32.mrf.mxu0
  %994 = vdwg.mxu0
  %995 = vmatpush.bf16.msra.mxu0 0
  %996 = vmatpush.bf16.msra.mxu0 0
  %997 = vmatpush.bf16.msra.mxu0 0
  %998 = vmatpush.bf16.msra.mxu0 0
  %999 = vmatpush.bf16.msra.mxu0 %v970
  %1000 = vmatpush.bf16.msra.mxu0 %v968
  %1001 = vmatpush.bf16.msra.mxu0 %v966
  %1002 = vmatpush.bf16.msra.mxu0 %v964
  %1003 = vmatmul.bf16.gmra.mxu0 %v980
  %v1004 = vpop.f32.mrf.mxu0
  %v1005 = vadd.f32 0.0, %v1004
  %v1006 = vpop.f32.mrf.mxu0
  %1007 = vdwg.mxu0
  %v1008 = vadd.f32 %v928, %v992
  %v1009 = vadd.f32 %v929, %v1005
  %v1010 = vxor.u32 %v1008, 2147483648
  %v1011 = vxor.u32 %v1009, 2147483648
  %v1012 = vmul.f32 %v1010, 1.442695
  %v1013 = vpow.pop %v1012
  %v1014 = vmul.f32 %v1011, 1.442695
  %v1015 = vpow.pop %v1014
  %v1016 = vadd.f32 %v1013, 1.0
  %v1017 = vadd.f32 %v1015, 1.0
  %v1018 = vrcp.pop %v1016
  %v1019 = vmul.f32 %v1016, %v1018
  %v1020 = vsub.f32 1.0, %v1019
  %v1021 = vmul.f32 %v1018, %v1020
  %v1022 = vadd.f32 %v1018, %v1021
  %vm1023 = vweird.f32 %v1016
  %vm1024 = vweird.f32 %v1018
  %vm1025 = vmor %vm1023, %vm1024
  %v1026 = vsel %vm1025, %v1018, %v1022
  %v1027 = vand.u32 2147483647, %v1016
  %vm1028 = vcmp.eq.f32.partialorder %v1027, 8.507059e+37
  %v1029 = vand.u32 %v1016, 2147483648
  %v1030 = vor.u32 1.1754944e-38, %v1029
  %v1031 = vsel %vm1028, %v1030, %v1026
  %v1032 = vmul.f32 1.0, %v1031
  %v1033 = vrcp.pop %v1017
  %v1034 = vmul.f32 %v1017, %v1033
  %v1035 = vsub.f32 1.0, %v1034
  %v1036 = vmul.f32 %v1033, %v1035
  %v1037 = vadd.f32 %v1033, %v1036
  %vm1038 = vweird.f32 %v1017
  %vm1039 = vweird.f32 %v1033
  %vm1040 = vmor %vm1038, %vm1039
  %v1041 = vsel %vm1040, %v1033, %v1037
  %v1042 = vand.u32 2147483647, %v1017
  %vm1043 = vcmp.eq.f32.partialorder %v1042, 8.507059e+37
  %v1044 = vand.u32 %v1017, 2147483648
  %v1045 = vor.u32 1.1754944e-38, %v1044
  %v1046 = vsel %vm1043, %v1045, %v1041
  %v1047 = vmul.f32 1.0, %v1046
  %v1048 = vtanh.pop %v1009
  %v1049 = vmul.f32 %v1032, %v915
  %1051 = vrot.lane.b32.xlu0 %v1048, 64
  %v1052 = vpop.permute.xlu0 %1051
  %v1054 = vmul.f32 %v1032, %v1052
  %1056 = vrot.lane.b32.xlu0 %v1054, 64
  %v1057 = vpop.permute.xlu0 %1056
  %v1059 = vadd.f32 %v1049, %v1057
  %v1060 = vtanh.pop %v1059
  %1062 = vrot.lane.b32.xlu0 %v1060, 64
  %v1063 = vpop.permute.xlu0 %1062
  %v1065 = vmul.f32 %v1047, %v1063
  %1066 = vst.msk [vmem:[#allocation3 + $0x28] sm:$0xff] %vm344, %v1065
  %1067 = vst.msk [vmem:[#allocation3 + $0x10] sm:$0xff] %vm346, %v1065
  %v1068 = vld [vmem:[#allocation2 + $0x60] sm:$0xff]
  %v1069 = vld [vmem:[#allocation2 + $0x68] sm:$0xff]
  %v1070 = vld [vmem:[#allocation2 + $0x10] sm:$0xff]
  %v1071 = vld [vmem:[#allocation2 + $0x18] sm:$0xff]
  %v1072 = vsel %vm82, %v1068, %v1070
  %v1073 = vsel %vm83, %v1069, %v1071
  %v1074 = vpack.c.bf16 %v1065, %v1065
  %v1075 = vld [vmem:[%s3] sm:$0xff]
  %v1076 = vld [vmem:[%s3 + $0x8] sm:$0xff]
  %v1077 = vld [vmem:[%s3 + $0x10] sm:$0xff]
  %v1078 = vld [vmem:[%s3 + $0x18] sm:$0xff]
  %v1079 = vld [vmem:[%s3 + $0x20] sm:$0xff]
  %v1080 = vld [vmem:[%s3 + $0x28] sm:$0xff]
  %v1081 = vld [vmem:[%s3 + $0x30] sm:$0xff]
  %v1082 = vld [vmem:[%s3 + $0x38] sm:$0xff]
  %v1091 = vunpack.c.l.b16 %v1075
  %v1092 = vunpack.c.h.b16 %v1075
  %v1093 = vunpack.c.l.b16 %v1076
  %v1094 = vunpack.c.h.b16 %v1076
  %v1095 = vunpack.c.l.b16 %v1077
  %v1096 = vunpack.c.h.b16 %v1077
  %v1097 = vunpack.c.l.b16 %v1078
  %v1098 = vunpack.c.h.b16 %v1078
  %v1099 = vunpack.c.l.b16 %v1079
  %v1100 = vunpack.c.h.b16 %v1079
  %v1101 = vunpack.c.l.b16 %v1080
  %v1102 = vunpack.c.h.b16 %v1080
  %v1103 = vunpack.c.l.b16 %v1081
  %v1104 = vunpack.c.h.b16 %v1081
  %v1105 = vunpack.c.l.b16 %v1082
  %v1106 = vunpack.c.h.b16 %v1082
  %v1107 = vpack.c.b16 %v1093, %v1091
  %v1108 = vpack.c.b16 %v1094, %v1092
  %v1109 = vpack.c.b16 %v1097, %v1095
  %v1110 = vpack.c.b16 %v1098, %v1096
  %v1111 = vpack.c.b16 %v1101, %v1099
  %v1112 = vpack.c.b16 %v1102, %v1100
  %v1113 = vpack.c.b16 %v1105, %v1103
  %v1114 = vpack.c.b16 %v1106, %v1104
  %v1124 = vsel %vm256, %v1074, 0
  %1126 = vmatpush.bf16.msra.mxu0 0
  %1127 = vmatpush.bf16.msra.mxu0 0
  %1128 = vmatpush.bf16.msra.mxu0 0
  %1129 = vmatpush.bf16.msra.mxu0 0
  %1130 = vmatpush.bf16.msra.mxu0 %v1113
  %1131 = vmatpush.bf16.msra.mxu0 %v1111
  %1132 = vmatpush.bf16.msra.mxu0 %v1109
  %1133 = vmatpush.bf16.msra.mxu0 %v1107
  %1134 = vmatmul.bf16.gmra.mxu0 %v1124
  %v1135 = vpop.f32.mrf.mxu0
  %v1136 = vadd.f32 0.0, %v1135
  %v1137 = vpop.f32.mrf.mxu0
  %1138 = vdwg.mxu0
  %1139 = vmatpush.bf16.msra.mxu0 0
  %1140 = vmatpush.bf16.msra.mxu0 0
  %1141 = vmatpush.bf16.msra.mxu0 0
  %1142 = vmatpush.bf16.msra.mxu0 0
  %1143 = vmatpush.bf16.msra.mxu0 %v1114
  %1144 = vmatpush.bf16.msra.mxu0 %v1112
  %1145 = vmatpush.bf16.msra.mxu0 %v1110
  %1146 = vmatpush.bf16.msra.mxu0 %v1108
  %1147 = vmatmul.bf16.gmra.mxu0 %v1124
  %v1148 = vpop.f32.mrf.mxu0
  %v1149 = vadd.f32 0.0, %v1148
  %v1150 = vpop.f32.mrf.mxu0
  %1151 = vdwg.mxu0
  %v1152 = vadd.f32 %v1072, %v1136
  %v1153 = vadd.f32 %v1073, %v1149
  %v1154 = vxor.u32 %v1152, 2147483648
  %v1155 = vxor.u32 %v1153, 2147483648
  %v1156 = vmul.f32 %v1154, 1.442695
  %v1157 = vpow.pop %v1156
  %v1158 = vmul.f32 %v1155, 1.442695
  %v1159 = vpow.pop %v1158
  %v1160 = vadd.f32 %v1157, 1.0
  %v1161 = vadd.f32 %v1159, 1.0
  %v1162 = vrcp.pop %v1160
  %v1163 = vmul.f32 %v1160, %v1162
  %v1164 = vsub.f32 1.0, %v1163
  %v1165 = vmul.f32 %v1162, %v1164
  %v1166 = vadd.f32 %v1162, %v1165
  %vm1167 = vweird.f32 %v1160
  %vm1168 = vweird.f32 %v1162
  %vm1169 = vmor %vm1167, %vm1168
  %v1170 = vsel %vm1169, %v1162, %v1166
  %v1171 = vand.u32 2147483647, %v1160
  %vm1172 = vcmp.eq.f32.partialorder %v1171, 8.507059e+37
  %v1173 = vand.u32 %v1160, 2147483648
  %v1174 = vor.u32 1.1754944e-38, %v1173
  %v1175 = vsel %vm1172, %v1174, %v1170
  %v1176 = vmul.f32 1.0, %v1175
  %v1177 = vrcp.pop %v1161
  %v1178 = vmul.f32 %v1161, %v1177
  %v1179 = vsub.f32 1.0, %v1178
  %v1180 = vmul.f32 %v1177, %v1179
  %v1181 = vadd.f32 %v1177, %v1180
  %vm1182 = vweird.f32 %v1161
  %vm1183 = vweird.f32 %v1177
  %vm1184 = vmor %vm1182, %vm1183
  %v1185 = vsel %vm1184, %v1177, %v1181
  %v1186 = vand.u32 2147483647, %v1161
  %vm1187 = vcmp.eq.f32.partialorder %v1186, 8.507059e+37
  %v1188 = vand.u32 %v1161, 2147483648
  %v1189 = vor.u32 1.1754944e-38, %v1188
  %v1190 = vsel %vm1187, %v1189, %v1185
  %v1191 = vmul.f32 1.0, %v1190
  %v1192 = vtanh.pop %v1153
  %v1193 = vmul.f32 %v1176, %v1059
  %1195 = vrot.lane.b32.xlu0 %v1192, 64
  %v1196 = vpop.permute.xlu0 %1195
  %v1198 = vmul.f32 %v1176, %v1196
  %1200 = vrot.lane.b32.xlu0 %v1198, 64
  %v1201 = vpop.permute.xlu0 %1200
  %v1203 = vadd.f32 %v1193, %v1201
  %v1204 = vtanh.pop %v1203
  %1206 = vrot.lane.b32.xlu0 %v1204, 64
  %v1207 = vpop.permute.xlu0 %1206
  %v1209 = vmul.f32 %v1191, %v1207
  %1210 = vst.msk [vmem:[#allocation3 + $0x30] sm:$0xff] %vm344, %v1209
  %1211 = vst.msk [vmem:[#allocation3 + $0x8] sm:$0xff] %vm346, %v1209
  %v1212 = vld [vmem:[#allocation2 + $0x70] sm:$0xff]
  %v1213 = vld [vmem:[#allocation2 + $0x78] sm:$0xff]
  %v1214 = vld [vmem:[#allocation2] sm:$0xff]
  %v1215 = vld [vmem:[#allocation2 + $0x8] sm:$0xff]
  %v1216 = vsel %vm82, %v1212, %v1214
  %v1217 = vsel %vm83, %v1213, %v1215
  %v1218 = vpack.c.bf16 %v1209, %v1209
  %v1219 = vld [vmem:[%s3] sm:$0xff]
  %v1220 = vld [vmem:[%s3 + $0x8] sm:$0xff]
  %v1221 = vld [vmem:[%s3 + $0x10] sm:$0xff]
  %v1222 = vld [vmem:[%s3 + $0x18] sm:$0xff]
  %v1223 = vld [vmem:[%s3 + $0x20] sm:$0xff]
  %v1224 = vld [vmem:[%s3 + $0x28] sm:$0xff]
  %v1225 = vld [vmem:[%s3 + $0x30] sm:$0xff]
  %v1226 = vld [vmem:[%s3 + $0x38] sm:$0xff]
  %v1235 = vunpack.c.l.b16 %v1219
  %v1236 = vunpack.c.h.b16 %v1219
  %v1237 = vunpack.c.l.b16 %v1220
  %v1238 = vunpack.c.h.b16 %v1220
  %v1239 = vunpack.c.l.b16 %v1221
  %v1240 = vunpack.c.h.b16 %v1221
  %v1241 = vunpack.c.l.b16 %v1222
  %v1242 = vunpack.c.h.b16 %v1222
  %v1243 = vunpack.c.l.b16 %v1223
  %v1244 = vunpack.c.h.b16 %v1223
  %v1245 = vunpack.c.l.b16 %v1224
  %v1246 = vunpack.c.h.b16 %v1224
  %v1247 = vunpack.c.l.b16 %v1225
  %v1248 = vunpack.c.h.b16 %v1225
  %v1249 = vunpack.c.l.b16 %v1226
  %v1250 = vunpack.c.h.b16 %v1226
  %v1251 = vpack.c.b16 %v1237, %v1235
  %v1252 = vpack.c.b16 %v1238, %v1236
  %v1253 = vpack.c.b16 %v1241, %v1239
  %v1254 = vpack.c.b16 %v1242, %v1240
  %v1255 = vpack.c.b16 %v1245, %v1243
  %v1256 = vpack.c.b16 %v1246, %v1244
  %v1257 = vpack.c.b16 %v1249, %v1247
  %v1258 = vpack.c.b16 %v1250, %v1248
  %v1268 = vsel %vm256, %v1218, 0
  %1270 = vmatpush.bf16.msra.mxu0 0
  %1271 = vmatpush.bf16.msra.mxu0 0
  %1272 = vmatpush.bf16.msra.mxu0 0
  %1273 = vmatpush.bf16.msra.mxu0 0
  %1274 = vmatpush.bf16.msra.mxu0 %v1257
  %1275 = vmatpush.bf16.msra.mxu0 %v1255
  %1276 = vmatpush.bf16.msra.mxu0 %v1253
  %1277 = vmatpush.bf16.msra.mxu0 %v1251
  %1278 = vmatmul.bf16.gmra.mxu0 %v1268
  %v1279 = vpop.f32.mrf.mxu0
  %v1280 = vadd.f32 0.0, %v1279
  %v1281 = vpop.f32.mrf.mxu0
  %1282 = vdwg.mxu0
  %1283 = vmatpush.bf16.msra.mxu0 0
  %1284 = vmatpush.bf16.msra.mxu0 0
  %1285 = vmatpush.bf16.msra.mxu0 0
  %1286 = vmatpush.bf16.msra.mxu0 0
  %1287 = vmatpush.bf16.msra.mxu0 %v1258
  %1288 = vmatpush.bf16.msra.mxu0 %v1256
  %1289 = vmatpush.bf16.msra.mxu0 %v1254
  %1290 = vmatpush.bf16.msra.mxu0 %v1252
  %1291 = vmatmul.bf16.gmra.mxu0 %v1268
  %v1292 = vpop.f32.mrf.mxu0
  %v1293 = vadd.f32 0.0, %v1292
  %v1294 = vpop.f32.mrf.mxu0
  %1295 = vdwg.mxu0
  %v1296 = vadd.f32 %v1216, %v1280
  %v1297 = vadd.f32 %v1217, %v1293
  %v1298 = vxor.u32 %v1296, 2147483648
  %v1299 = vxor.u32 %v1297, 2147483648
  %v1300 = vmul.f32 %v1298, 1.442695
  %v1301 = vpow.pop %v1300
  %v1302 = vmul.f32 %v1299, 1.442695
  %v1303 = vpow.pop %v1302
  %v1304 = vadd.f32 %v1301, 1.0
  %v1305 = vadd.f32 %v1303, 1.0
  %v1306 = vrcp.pop %v1304
  %v1307 = vmul.f32 %v1304, %v1306
  %v1308 = vsub.f32 1.0, %v1307
  %v1309 = vmul.f32 %v1306, %v1308
  %v1310 = vadd.f32 %v1306, %v1309
  %vm1311 = vweird.f32 %v1304
  %vm1312 = vweird.f32 %v1306
  %vm1313 = vmor %vm1311, %vm1312
  %v1314 = vsel %vm1313, %v1306, %v1310
  %v1315 = vand.u32 2147483647, %v1304
  %vm1316 = vcmp.eq.f32.partialorder %v1315, 8.507059e+37
  %v1317 = vand.u32 %v1304, 2147483648
  %v1318 = vor.u32 1.1754944e-38, %v1317
  %v1319 = vsel %vm1316, %v1318, %v1314
  %v1320 = vmul.f32 1.0, %v1319
  %v1321 = vrcp.pop %v1305
  %v1322 = vmul.f32 %v1305, %v1321
  %v1323 = vsub.f32 1.0, %v1322
  %v1324 = vmul.f32 %v1321, %v1323
  %v1325 = vadd.f32 %v1321, %v1324
  %vm1326 = vweird.f32 %v1305
  %vm1327 = vweird.f32 %v1321
  %vm1328 = vmor %vm1326, %vm1327
  %v1329 = vsel %vm1328, %v1321, %v1325
  %v1330 = vand.u32 2147483647, %v1305
  %vm1331 = vcmp.eq.f32.partialorder %v1330, 8.507059e+37
  %v1332 = vand.u32 %v1305, 2147483648
  %v1333 = vor.u32 1.1754944e-38, %v1332
  %v1334 = vsel %vm1331, %v1333, %v1329
  %v1335 = vmul.f32 1.0, %v1334
  %v1336 = vtanh.pop %v1297
  %v1337 = vmul.f32 %v1320, %v1203
  %1339 = vrot.lane.b32.xlu0 %v1336, 64
  %v1340 = vpop.permute.xlu0 %1339
  %v1342 = vmul.f32 %v1320, %v1340
  %1344 = vrot.lane.b32.xlu0 %v1342, 64
  %v1345 = vpop.permute.xlu0 %1344
  %v1347 = vadd.f32 %v1337, %v1345
  %v1348 = vtanh.pop %v1347
  %1350 = vrot.lane.b32.xlu0 %v1348, 64
  %v1351 = vpop.permute.xlu0 %1350
  %v1353 = vmul.f32 %v1335, %v1351
  %1354 = vst.msk [vmem:[#allocation3 + $0x38] sm:$0xff] %vm344, %v1353
  %1355 = vst.msk [vmem:[#allocation3] sm:$0xff] %vm346, %v1353
  %v1356 = vld [vmem:[#allocation3] sm:$0xff]
  %v1357 = vld [vmem:[#allocation3 + $0x8] sm:$0xff]
  %v1358 = vld [vmem:[#allocation3 + $0x10] sm:$0xff]
  %v1359 = vld [vmem:[#allocation3 + $0x18] sm:$0xff]
  %v1360 = vld [vmem:[#allocation3 + $0x20] sm:$0xff]
  %v1361 = vld [vmem:[#allocation3 + $0x28] sm:$0xff]
  %v1362 = vld [vmem:[#allocation3 + $0x30] sm:$0xff]
  %v1363 = vld [vmem:[#allocation3 + $0x38] sm:$0xff]
  %v1364 = vpack.c.bf16 %v1357, %v1356
  %v1365 = vpack.c.bf16 %v1359, %v1358
  %v1366 = vpack.c.bf16 %v1361, %v1360
  %v1367 = vpack.c.bf16 %v1363, %v1362
  %v1368 = vld [vmem:[%s4] sm:$0xff]
  %v1369 = vld [vmem:[%s4 + $0x8] sm:$0xff]
  %v1370 = vld [vmem:[%s4 + $0x10] sm:$0xff]
  %v1371 = vld [vmem:[%s4 + $0x18] sm:$0xff]
  %v1372 = vld [vmem:[%s4 + $0x20] sm:$0xff]
  %v1373 = vld [vmem:[%s4 + $0x28] sm:$0xff]
  %v1374 = vld [vmem:[%s4 + $0x30] sm:$0xff]
  %v1375 = vld [vmem:[%s4 + $0x38] sm:$0xff]
  %v1376 = vld [vmem:[%s5] sm:$0x3]
  %v1378 = vperm.slane %v1376, 0
  %v1379 = vperm.slane %v1376, 1
  %v1390 = vunpack.c.l.b16 %v1368
  %v1391 = vunpack.c.h.b16 %v1368
  %v1392 = vunpack.c.l.b16 %v1369
  %v1393 = vunpack.c.h.b16 %v1369
  %v1394 = vunpack.c.l.b16 %v1370
  %v1395 = vunpack.c.h.b16 %v1370
  %v1396 = vunpack.c.l.b16 %v1371
  %v1397 = vunpack.c.h.b16 %v1371
  %v1398 = vunpack.c.l.b16 %v1372
  %v1399 = vunpack.c.h.b16 %v1372
  %v1400 = vunpack.c.l.b16 %v1373
  %v1401 = vunpack.c.h.b16 %v1373
  %v1402 = vunpack.c.l.b16 %v1374
  %v1403 = vunpack.c.h.b16 %v1374
  %v1404 = vunpack.c.l.b16 %v1375
  %v1405 = vunpack.c.h.b16 %v1375
  %v1406 = vpack.c.b16 %v1392, %v1390
  %v1407 = vpack.c.b16 %v1393, %v1391
  %v1408 = vpack.c.b16 %v1396, %v1394
  %v1409 = vpack.c.b16 %v1397, %v1395
  %v1410 = vpack.c.b16 %v1400, %v1398
  %v1411 = vpack.c.b16 %v1401, %v1399
  %v1412 = vpack.c.b16 %v1404, %v1402
  %v1413 = vpack.c.b16 %v1405, %v1403
  %v1423 = vsel %vm256, %v1364, 0
  %v1426 = vsel %vm256, %v1365, 0
  %v1429 = vsel %vm256, %v1366, 0
  %v1432 = vsel %vm256, %v1367, 0
  %1434 = vmatpush.bf16.msra.mxu0 0
  %1435 = vmatpush.bf16.msra.mxu0 0
  %1436 = vmatpush.bf16.msra.mxu0 0
  %1437 = vmatpush.bf16.msra.mxu0 0
  %1438 = vmatpush.bf16.msra.mxu0 %v1412
  %1439 = vmatpush.bf16.msra.mxu0 %v1410
  %1440 = vmatpush.bf16.msra.mxu0 %v1408
  %1441 = vmatpush.bf16.msra.mxu0 %v1406
  %1442 = vmatmul.bf16.gmra.mxu0 %v1423
  %v1443 = vpop.f32.mrf.mxu0
  %v1444 = vadd.f32 %v1378, %v1443
  %v1445 = vpop.f32.mrf.mxu0
  %v1446 = vadd.f32 %v1378, %v1445
  %1447 = vmatmul.bf16.gmra.mxu0 %v1426
  %v1448 = vpop.f32.mrf.mxu0
  %v1449 = vadd.f32 %v1378, %v1448
  %v1450 = vpop.f32.mrf.mxu0
  %v1451 = vadd.f32 %v1378, %v1450
  %1452 = vmatmul.bf16.gmra.mxu0 %v1429
  %v1453 = vpop.f32.mrf.mxu0
  %v1454 = vadd.f32 %v1378, %v1453
  %v1455 = vpop.f32.mrf.mxu0
  %v1456 = vadd.f32 %v1378, %v1455
  %1457 = vmatmul.bf16.gmra.mxu0 %v1432
  %v1458 = vpop.f32.mrf.mxu0
  %v1459 = vadd.f32 %v1378, %v1458
  %v1460 = vpop.f32.mrf.mxu0
  %v1461 = vadd.f32 %v1378, %v1460
  %1462 = vdwg.mxu0
  %1463 = vmatpush.bf16.msra.mxu0 0
  %1464 = vmatpush.bf16.msra.mxu0 0
  %1465 = vmatpush.bf16.msra.mxu0 0
  %1466 = vmatpush.bf16.msra.mxu0 0
  %1467 = vmatpush.bf16.msra.mxu0 %v1413
  %1468 = vmatpush.bf16.msra.mxu0 %v1411
  %1469 = vmatpush.bf16.msra.mxu0 %v1409
  %1470 = vmatpush.bf16.msra.mxu0 %v1407
  %1471 = vmatmul.bf16.gmra.mxu0 %v1423
  %v1472 = vpop.f32.mrf.mxu0
  %v1473 = vadd.f32 %v1379, %v1472
  %v1474 = vpop.f32.mrf.mxu0
  %v1475 = vadd.f32 %v1379, %v1474
  %1476 = vmatmul.bf16.gmra.mxu0 %v1426
  %v1477 = vpop.f32.mrf.mxu0
  %v1478 = vadd.f32 %v1379, %v1477
  %v1479 = vpop.f32.mrf.mxu0
  %v1480 = vadd.f32 %v1379, %v1479
  %1481 = vmatmul.bf16.gmra.mxu0 %v1429
  %v1482 = vpop.f32.mrf.mxu0
  %v1483 = vadd.f32 %v1379, %v1482
  %v1484 = vpop.f32.mrf.mxu0
  %v1485 = vadd.f32 %v1379, %v1484
  %1486 = vmatmul.bf16.gmra.mxu0 %v1432
  %v1487 = vpop.f32.mrf.mxu0
  %v1488 = vadd.f32 %v1379, %v1487
  %v1489 = vpop.f32.mrf.mxu0
  %v1490 = vadd.f32 %v1379, %v1489
  %1491 = vdwg.mxu0
  %1492 = vst [vmem:[#allocation2] sm:$0xff] %v1444
  %1493 = vst [vmem:[#allocation2 + $0x8] sm:$0xff] %v1473
  %1494 = vst [vmem:[#allocation2 + $0x10] sm:$0xff] %v1446
  %1495 = vst [vmem:[#allocation2 + $0x18] sm:$0xff] %v1475
  %1496 = vst [vmem:[#allocation2 + $0x20] sm:$0xff] %v1449
  %1497 = vst [vmem:[#allocation2 + $0x28] sm:$0xff] %v1478
  %1498 = vst [vmem:[#allocation2 + $0x30] sm:$0xff] %v1451
  %1499 = vst [vmem:[#allocation2 + $0x38] sm:$0xff] %v1480
  %1500 = vst [vmem:[#allocation2 + $0x40] sm:$0xff] %v1454
  %1501 = vst [vmem:[#allocation2 + $0x48] sm:$0xff] %v1483
  %1502 = vst [vmem:[#allocation2 + $0x50] sm:$0xff] %v1456
  %1503 = vst [vmem:[#allocation2 + $0x58] sm:$0xff] %v1485
  %1504 = vst [vmem:[#allocation2 + $0x60] sm:$0xff] %v1459
  %1505 = vst [vmem:[#allocation2 + $0x68] sm:$0xff] %v1488
  %1506 = vst [vmem:[#allocation2 + $0x70] sm:$0xff] %v1461
  %1507 = vst [vmem:[#allocation2 + $0x78] sm:$0xff] %v1490
  %v1508 = vld [vmem:[#allocation2] sm:$0xff]
  %v1509 = vld [vmem:[#allocation2 + $0x8] sm:$0xff]
  %v1510 = vld [vmem:[#allocation2 + $0x70] sm:$0xff]
  %v1511 = vld [vmem:[#allocation2 + $0x78] sm:$0xff]
  %v1512 = vsel %vm82, %v1508, %v1510
  %v1513 = vsel %vm83, %v1509, %v1511
  %v1514 = vld [vmem:[%s6] sm:$0xff]
  %v1515 = vld [vmem:[%s6 + $0x8] sm:$0xff]
  %v1516 = vld [vmem:[%s6 + $0x10] sm:$0xff]
  %v1517 = vld [vmem:[%s6 + $0x18] sm:$0xff]
  %v1518 = vld [vmem:[%s6 + $0x20] sm:$0xff]
  %v1519 = vld [vmem:[%s6 + $0x28] sm:$0xff]
  %v1520 = vld [vmem:[%s6 + $0x30] sm:$0xff]
  %v1521 = vld [vmem:[%s6 + $0x38] sm:$0xff]
  %v1530 = vunpack.c.l.b16 %v1514
  %v1531 = vunpack.c.h.b16 %v1514
  %v1532 = vunpack.c.l.b16 %v1515
  %v1533 = vunpack.c.h.b16 %v1515
  %v1534 = vunpack.c.l.b16 %v1516
  %v1535 = vunpack.c.h.b16 %v1516
  %v1536 = vunpack.c.l.b16 %v1517
  %v1537 = vunpack.c.h.b16 %v1517
  %v1538 = vunpack.c.l.b16 %v1518
  %v1539 = vunpack.c.h.b16 %v1518
  %v1540 = vunpack.c.l.b16 %v1519
  %v1541 = vunpack.c.h.b16 %v1519
  %v1542 = vunpack.c.l.b16 %v1520
  %v1543 = vunpack.c.h.b16 %v1520
  %v1544 = vunpack.c.l.b16 %v1521
  %v1545 = vunpack.c.h.b16 %v1521
  %v1546 = vpack.c.b16 %v1532, %v1530
  %v1547 = vpack.c.b16 %v1533, %v1531
  %v1548 = vpack.c.b16 %v1536, %v1534
  %v1549 = vpack.c.b16 %v1537, %v1535
  %v1550 = vpack.c.b16 %v1540, %v1538
  %v1551 = vpack.c.b16 %v1541, %v1539
  %v1552 = vpack.c.b16 %v1544, %v1542
  %v1553 = vpack.c.b16 %v1545, %v1543
  %1562 = vmatpush.bf16.msra.mxu0 0
  %1563 = vmatpush.bf16.msra.mxu0 0
  %1564 = vmatpush.bf16.msra.mxu0 0
  %1565 = vmatpush.bf16.msra.mxu0 0
  %1566 = vmatpush.bf16.msra.mxu0 %v1552
  %1567 = vmatpush.bf16.msra.mxu0 %v1550
  %1568 = vmatpush.bf16.msra.mxu0 %v1548
  %1569 = vmatpush.bf16.msra.mxu0 %v1546
  %1570 = vmatmul.bf16.gmra.mxu0 %v258
  %v1571 = vpop.f32.mrf.mxu0
  %v1572 = vadd.f32 0.0, %v1571
  %v1573 = vpop.f32.mrf.mxu0
  %1574 = vdwg.mxu0
  %1575 = vmatpush.bf16.msra.mxu0 0
  %1576 = vmatpush.bf16.msra.mxu0 0
  %1577 = vmatpush.bf16.msra.mxu0 0
  %1578 = vmatpush.bf16.msra.mxu0 0
  %1579 = vmatpush.bf16.msra.mxu0 %v1553
  %1580 = vmatpush.bf16.msra.mxu0 %v1551
  %1581 = vmatpush.bf16.msra.mxu0 %v1549
  %1582 = vmatpush.bf16.msra.mxu0 %v1547
  %1583 = vmatmul.bf16.gmra.mxu0 %v258
  %v1584 = vpop.f32.mrf.mxu0
  %v1585 = vadd.f32 0.0, %v1584
  %v1586 = vpop.f32.mrf.mxu0
  %1587 = vdwg.mxu0
  %v1588 = vadd.f32 %v1512, %v1572
  %v1589 = vadd.f32 %v1513, %v1585
  %v1590 = vxor.u32 %v1588, 2147483648
  %v1591 = vxor.u32 %v1589, 2147483648
  %v1592 = vmul.f32 %v1590, 1.442695
  %v1593 = vpow.pop %v1592
  %v1594 = vmul.f32 %v1591, 1.442695
  %v1595 = vpow.pop %v1594
  %v1596 = vadd.f32 %v1593, 1.0
  %v1597 = vadd.f32 %v1595, 1.0
  %v1598 = vrcp.pop %v1596
  %v1599 = vmul.f32 %v1596, %v1598
  %v1600 = vsub.f32 1.0, %v1599
  %v1601 = vmul.f32 %v1598, %v1600
  %v1602 = vadd.f32 %v1598, %v1601
  %vm1603 = vweird.f32 %v1596
  %vm1604 = vweird.f32 %v1598
  %vm1605 = vmor %vm1603, %vm1604
  %v1606 = vsel %vm1605, %v1598, %v1602
  %v1607 = vand.u32 2147483647, %v1596
  %vm1608 = vcmp.eq.f32.partialorder %v1607, 8.507059e+37
  %v1609 = vand.u32 %v1596, 2147483648
  %v1610 = vor.u32 1.1754944e-38, %v1609
  %v1611 = vsel %vm1608, %v1610, %v1606
  %v1612 = vmul.f32 1.0, %v1611
  %v1613 = vrcp.pop %v1597
  %v1614 = vmul.f32 %v1597, %v1613
  %v1615 = vsub.f32 1.0, %v1614
  %v1616 = vmul.f32 %v1613, %v1615
  %v1617 = vadd.f32 %v1613, %v1616
  %vm1618 = vweird.f32 %v1597
  %vm1619 = vweird.f32 %v1613
  %vm1620 = vmor %vm1618, %vm1619
  %v1621 = vsel %vm1620, %v1613, %v1617
  %v1622 = vand.u32 2147483647, %v1597
  %vm1623 = vcmp.eq.f32.partialorder %v1622, 8.507059e+37
  %v1624 = vand.u32 %v1597, 2147483648
  %v1625 = vor.u32 1.1754944e-38, %v1624
  %v1626 = vsel %vm1623, %v1625, %v1621
  %v1627 = vmul.f32 1.0, %v1626
  %v1628 = vtanh.pop %v1589
  %v1629 = vmul.f32 %v1612, 0.0
  %1631 = vrot.lane.b32.xlu0 %v1628, 64
  %v1632 = vpop.permute.xlu0 %1631
  %v1634 = vmul.f32 %v1612, %v1632
  %1636 = vrot.lane.b32.xlu0 %v1634, 64
  %v1637 = vpop.permute.xlu0 %1636
  %v1639 = vadd.f32 %v1629, %v1637
  %v1640 = vtanh.pop %v1639
  %1642 = vrot.lane.b32.xlu0 %v1640, 64
  %v1643 = vpop.permute.xlu0 %1642
  %v1645 = vmul.f32 %v1627, %v1643
  %1646 = vst.msk [vmem:[#allocation3] sm:$0xff] %vm344, %v1645
  %1647 = vst.msk [vmem:[#allocation3 + $0x38] sm:$0xff] %vm346, %v1645
  %v1648 = vld [vmem:[#allocation2 + $0x10] sm:$0xff]
  %v1649 = vld [vmem:[#allocation2 + $0x18] sm:$0xff]
  %v1650 = vld [vmem:[#allocation2 + $0x60] sm:$0xff]
  %v1651 = vld [vmem:[#allocation2 + $0x68] sm:$0xff]
  %v1652 = vsel %vm82, %v1648, %v1650
  %v1653 = vsel %vm83, %v1649, %v1651
  %v1654 = vpack.c.bf16 %v1645, %v1645
  %v1655 = vld [vmem:[%s6] sm:$0xff]
  %v1656 = vld [vmem:[%s6 + $0x8] sm:$0xff]
  %v1657 = vld [vmem:[%s6 + $0x10] sm:$0xff]
  %v1658 = vld [vmem:[%s6 + $0x18] sm:$0xff]
  %v1659 = vld [vmem:[%s6 + $0x20] sm:$0xff]
  %v1660 = vld [vmem:[%s6 + $0x28] sm:$0xff]
  %v1661 = vld [vmem:[%s6 + $0x30] sm:$0xff]
  %v1662 = vld [vmem:[%s6 + $0x38] sm:$0xff]
  %v1671 = vunpack.c.l.b16 %v1655
  %v1672 = vunpack.c.h.b16 %v1655
  %v1673 = vunpack.c.l.b16 %v1656
  %v1674 = vunpack.c.h.b16 %v1656
  %v1675 = vunpack.c.l.b16 %v1657
  %v1676 = vunpack.c.h.b16 %v1657
  %v1677 = vunpack.c.l.b16 %v1658
  %v1678 = vunpack.c.h.b16 %v1658
  %v1679 = vunpack.c.l.b16 %v1659
  %v1680 = vunpack.c.h.b16 %v1659
  %v1681 = vunpack.c.l.b16 %v1660
  %v1682 = vunpack.c.h.b16 %v1660
  %v1683 = vunpack.c.l.b16 %v1661
  %v1684 = vunpack.c.h.b16 %v1661
  %v1685 = vunpack.c.l.b16 %v1662
  %v1686 = vunpack.c.h.b16 %v1662
  %v1687 = vpack.c.b16 %v1673, %v1671
  %v1688 = vpack.c.b16 %v1674, %v1672
  %v1689 = vpack.c.b16 %v1677, %v1675
  %v1690 = vpack.c.b16 %v1678, %v1676
  %v1691 = vpack.c.b16 %v1681, %v1679
  %v1692 = vpack.c.b16 %v1682, %v1680
  %v1693 = vpack.c.b16 %v1685, %v1683
  %v1694 = vpack.c.b16 %v1686, %v1684
  %v1704 = vsel %vm256, %v1654, 0
  %1706 = vmatpush.bf16.msra.mxu0 0
  %1707 = vmatpush.bf16.msra.mxu0 0
  %1708 = vmatpush.bf16.msra.mxu0 0
  %1709 = vmatpush.bf16.msra.mxu0 0
  %1710 = vmatpush.bf16.msra.mxu0 %v1693
  %1711 = vmatpush.bf16.msra.mxu0 %v1691
  %1712 = vmatpush.bf16.msra.mxu0 %v1689
  %1713 = vmatpush.bf16.msra.mxu0 %v1687
  %1714 = vmatmul.bf16.gmra.mxu0 %v1704
  %v1715 = vpop.f32.mrf.mxu0
  %v1716 = vadd.f32 0.0, %v1715
  %v1717 = vpop.f32.mrf.mxu0
  %1718 = vdwg.mxu0
  %1719 = vmatpush.bf16.msra.mxu0 0
  %1720 = vmatpush.bf16.msra.mxu0 0
  %1721 = vmatpush.bf16.msra.mxu0 0
  %1722 = vmatpush.bf16.msra.mxu0 0
  %1723 = vmatpush.bf16.msra.mxu0 %v1694
  %1724 = vmatpush.bf16.msra.mxu0 %v1692
  %1725 = vmatpush.bf16.msra.mxu0 %v1690
  %1726 = vmatpush.bf16.msra.mxu0 %v1688
  %1727 = vmatmul.bf16.gmra.mxu0 %v1704
  %v1728 = vpop.f32.mrf.mxu0
  %v1729 = vadd.f32 0.0, %v1728
  %v1730 = vpop.f32.mrf.mxu0
  %1731 = vdwg.mxu0
  %v1732 = vadd.f32 %v1652, %v1716
  %v1733 = vadd.f32 %v1653, %v1729
  %v1734 = vxor.u32 %v1732, 2147483648
  %v1735 = vxor.u32 %v1733, 2147483648
  %v1736 = vmul.f32 %v1734, 1.442695
  %v1737 = vpow.pop %v1736
  %v1738 = vmul.f32 %v1735, 1.442695
  %v1739 = vpow.pop %v1738
  %v1740 = vadd.f32 %v1737, 1.0
  %v1741 = vadd.f32 %v1739, 1.0
  %v1742 = vrcp.pop %v1740
  %v1743 = vmul.f32 %v1740, %v1742
  %v1744 = vsub.f32 1.0, %v1743
  %v1745 = vmul.f32 %v1742, %v1744
  %v1746 = vadd.f32 %v1742, %v1745
  %vm1747 = vweird.f32 %v1740
  %vm1748 = vweird.f32 %v1742
  %vm1749 = vmor %vm1747, %vm1748
  %v1750 = vsel %vm1749, %v1742, %v1746
  %v1751 = vand.u32 2147483647, %v1740
  %vm1752 = vcmp.eq.f32.partialorder %v1751, 8.507059e+37
  %v1753 = vand.u32 %v1740, 2147483648
  %v1754 = vor.u32 1.1754944e-38, %v1753
  %v1755 = vsel %vm1752, %v1754, %v1750
  %v1756 = vmul.f32 1.0, %v1755
  %v1757 = vrcp.pop %v1741
  %v1758 = vmul.f32 %v1741, %v1757
  %v1759 = vsub.f32 1.0, %v1758
  %v1760 = vmul.f32 %v1757, %v1759
  %v1761 = vadd.f32 %v1757, %v1760
  %vm1762 = vweird.f32 %v1741
  %vm1763 = vweird.f32 %v1757
  %vm1764 = vmor %vm1762, %vm1763
  %v1765 = vsel %vm1764, %v1757, %v1761
  %v1766 = vand.u32 2147483647, %v1741
  %vm1767 = vcmp.eq.f32.partialorder %v1766, 8.507059e+37
  %v1768 = vand.u32 %v1741, 2147483648
  %v1769 = vor.u32 1.1754944e-38, %v1768
  %v1770 = vsel %vm1767, %v1769, %v1765
  %v1771 = vmul.f32 1.0, %v1770
  %v1772 = vtanh.pop %v1733
  %v1773 = vmul.f32 %v1756, %v1639
  %1775 = vrot.lane.b32.xlu0 %v1772, 64
  %v1776 = vpop.permute.xlu0 %1775
  %v1778 = vmul.f32 %v1756, %v1776
  %1780 = vrot.lane.b32.xlu0 %v1778, 64
  %v1781 = vpop.permute.xlu0 %1780
  %v1783 = vadd.f32 %v1773, %v1781
  %v1784 = vtanh.pop %v1783
  %1786 = vrot.lane.b32.xlu0 %v1784, 64
  %v1787 = vpop.permute.xlu0 %1786
  %v1789 = vmul.f32 %v1771, %v1787
  %1790 = vst.msk [vmem:[#allocation3 + $0x8] sm:$0xff] %vm344, %v1789
  %1791 = vst.msk [vmem:[#allocation3 + $0x30] sm:$0xff] %vm346, %v1789
  %v1792 = vld [vmem:[#allocation2 + $0x20] sm:$0xff]
  %v1793 = vld [vmem:[#allocation2 + $0x28] sm:$0xff]
  %v1794 = vld [vmem:[#allocation2 + $0x50] sm:$0xff]
  %v1795 = vld [vmem:[#allocation2 + $0x58] sm:$0xff]
  %v1796 = vsel %vm82, %v1792, %v1794
  %v1797 = vsel %vm83, %v1793, %v1795
  %v1798 = vpack.c.bf16 %v1789, %v1789
  %v1799 = vld [vmem:[%s6] sm:$0xff]
  %v1800 = vld [vmem:[%s6 + $0x8] sm:$0xff]
  %v1801 = vld [vmem:[%s6 + $0x10] sm:$0xff]
  %v1802 = vld [vmem:[%s6 + $0x18] sm:$0xff]
  %v1803 = vld [vmem:[%s6 + $0x20] sm:$0xff]
  %v1804 = vld [vmem:[%s6 + $0x28] sm:$0xff]
  %v1805 = vld [vmem:[%s6 + $0x30] sm:$0xff]
  %v1806 = vld [vmem:[%s6 + $0x38] sm:$0xff]
  %v1815 = vunpack.c.l.b16 %v1799
  %v1816 = vunpack.c.h.b16 %v1799
  %v1817 = vunpack.c.l.b16 %v1800
  %v1818 = vunpack.c.h.b16 %v1800
  %v1819 = vunpack.c.l.b16 %v1801
  %v1820 = vunpack.c.h.b16 %v1801
  %v1821 = vunpack.c.l.b16 %v1802
  %v1822 = vunpack.c.h.b16 %v1802
  %v1823 = vunpack.c.l.b16 %v1803
  %v1824 = vunpack.c.h.b16 %v1803
  %v1825 = vunpack.c.l.b16 %v1804
  %v1826 = vunpack.c.h.b16 %v1804
  %v1827 = vunpack.c.l.b16 %v1805
  %v1828 = vunpack.c.h.b16 %v1805
  %v1829 = vunpack.c.l.b16 %v1806
  %v1830 = vunpack.c.h.b16 %v1806
  %v1831 = vpack.c.b16 %v1817, %v1815
  %v1832 = vpack.c.b16 %v1818, %v1816
  %v1833 = vpack.c.b16 %v1821, %v1819
  %v1834 = vpack.c.b16 %v1822, %v1820
  %v1835 = vpack.c.b16 %v1825, %v1823
  %v1836 = vpack.c.b16 %v1826, %v1824
  %v1837 = vpack.c.b16 %v1829, %v1827
  %v1838 = vpack.c.b16 %v1830, %v1828
  %v1848 = vsel %vm256, %v1798, 0
  %1850 = vmatpush.bf16.msra.mxu0 0
  %1851 = vmatpush.bf16.msra.mxu0 0
  %1852 = vmatpush.bf16.msra.mxu0 0
  %1853 = vmatpush.bf16.msra.mxu0 0
  %1854 = vmatpush.bf16.msra.mxu0 %v1837
  %1855 = vmatpush.bf16.msra.mxu0 %v1835
  %1856 = vmatpush.bf16.msra.mxu0 %v1833
  %1857 = vmatpush.bf16.msra.mxu0 %v1831
  %1858 = vmatmul.bf16.gmra.mxu0 %v1848
  %v1859 = vpop.f32.mrf.mxu0
  %v1860 = vadd.f32 0.0, %v1859
  %v1861 = vpop.f32.mrf.mxu0
  %1862 = vdwg.mxu0
  %1863 = vmatpush.bf16.msra.mxu0 0
  %1864 = vmatpush.bf16.msra.mxu0 0
  %1865 = vmatpush.bf16.msra.mxu0 0
  %1866 = vmatpush.bf16.msra.mxu0 0
  %1867 = vmatpush.bf16.msra.mxu0 %v1838
  %1868 = vmatpush.bf16.msra.mxu0 %v1836
  %1869 = vmatpush.bf16.msra.mxu0 %v1834
  %1870 = vmatpush.bf16.msra.mxu0 %v1832
  %1871 = vmatmul.bf16.gmra.mxu0 %v1848
  %v1872 = vpop.f32.mrf.mxu0
  %v1873 = vadd.f32 0.0, %v1872
  %v1874 = vpop.f32.mrf.mxu0
  %1875 = vdwg.mxu0
  %v1876 = vadd.f32 %v1796, %v1860
  %v1877 = vadd.f32 %v1797, %v1873
  %v1878 = vxor.u32 %v1876, 2147483648
  %v1879 = vxor.u32 %v1877, 2147483648
  %v1880 = vmul.f32 %v1878, 1.442695
  %v1881 = vpow.pop %v1880
  %v1882 = vmul.f32 %v1879, 1.442695
  %v1883 = vpow.pop %v1882
  %v1884 = vadd.f32 %v1881, 1.0
  %v1885 = vadd.f32 %v1883, 1.0
  %v1886 = vrcp.pop %v1884
  %v1887 = vmul.f32 %v1884, %v1886
  %v1888 = vsub.f32 1.0, %v1887
  %v1889 = vmul.f32 %v1886, %v1888
  %v1890 = vadd.f32 %v1886, %v1889
  %vm1891 = vweird.f32 %v1884
  %vm1892 = vweird.f32 %v1886
  %vm1893 = vmor %vm1891, %vm1892
  %v1894 = vsel %vm1893, %v1886, %v1890
  %v1895 = vand.u32 2147483647, %v1884
  %vm1896 = vcmp.eq.f32.partialorder %v1895, 8.507059e+37
  %v1897 = vand.u32 %v1884, 2147483648
  %v1898 = vor.u32 1.1754944e-38, %v1897
  %v1899 = vsel %vm1896, %v1898, %v1894
  %v1900 = vmul.f32 1.0, %v1899
  %v1901 = vrcp.pop %v1885
  %v1902 = vmul.f32 %v1885, %v1901
  %v1903 = vsub.f32 1.0, %v1902
  %v1904 = vmul.f32 %v1901, %v1903
  %v1905 = vadd.f32 %v1901, %v1904
  %vm1906 = vweird.f32 %v1885
  %vm1907 = vweird.f32 %v1901
  %vm1908 = vmor %vm1906, %vm1907
  %v1909 = vsel %vm1908, %v1901, %v1905
  %v1910 = vand.u32 2147483647, %v1885
  %vm1911 = vcmp.eq.f32.partialorder %v1910, 8.507059e+37
  %v1912 = vand.u32 %v1885, 2147483648
  %v1913 = vor.u32 1.1754944e-38, %v1912
  %v1914 = vsel %vm1911, %v1913, %v1909
  %v1915 = vmul.f32 1.0, %v1914
  %v1916 = vtanh.pop %v1877
  %v1917 = vmul.f32 %v1900, %v1783
  %1919 = vrot.lane.b32.xlu0 %v1916, 64
  %v1920 = vpop.permute.xlu0 %1919
  %v1922 = vmul.f32 %v1900, %v1920
  %1924 = vrot.lane.b32.xlu0 %v1922, 64
  %v1925 = vpop.permute.xlu0 %1924
  %v1927 = vadd.f32 %v1917, %v1925
  %v1928 = vtanh.pop %v1927
  %1930 = vrot.lane.b32.xlu0 %v1928, 64
  %v1931 = vpop.permute.xlu0 %1930
  %v1933 = vmul.f32 %v1915, %v1931
  %1934 = vst.msk [vmem:[#allocation3 + $0x10] sm:$0xff] %vm344, %v1933
  %1935 = vst.msk [vmem:[#allocation3 + $0x28] sm:$0xff] %vm346, %v1933
  %v1936 = vld [vmem:[#allocation2 + $0x30] sm:$0xff]
  %v1937 = vld [vmem:[#allocation2 + $0x38] sm:$0xff]
  %v1938 = vld [vmem:[#allocation2 + $0x40] sm:$0xff]
  %v1939 = vld [vmem:[#allocation2 + $0x48] sm:$0xff]
  %v1940 = vsel %vm82, %v1936, %v1938
  %v1941 = vsel %vm83, %v1937, %v1939
  %v1942 = vpack.c.bf16 %v1933, %v1933
  %v1943 = vld [vmem:[%s6] sm:$0xff]
  %v1944 = vld [vmem:[%s6 + $0x8] sm:$0xff]
  %v1945 = vld [vmem:[%s6 + $0x10] sm:$0xff]
  %v1946 = vld [vmem:[%s6 + $0x18] sm:$0xff]
  %v1947 = vld [vmem:[%s6 + $0x20] sm:$0xff]
  %v1948 = vld [vmem:[%s6 + $0x28] sm:$0xff]
  %v1949 = vld [vmem:[%s6 + $0x30] sm:$0xff]
  %v1950 = vld [vmem:[%s6 + $0x38] sm:$0xff]
  %v1959 = vunpack.c.l.b16 %v1943
  %v1960 = vunpack.c.h.b16 %v1943
  %v1961 = vunpack.c.l.b16 %v1944
  %v1962 = vunpack.c.h.b16 %v1944
  %v1963 = vunpack.c.l.b16 %v1945
  %v1964 = vunpack.c.h.b16 %v1945
  %v1965 = vunpack.c.l.b16 %v1946
  %v1966 = vunpack.c.h.b16 %v1946
  %v1967 = vunpack.c.l.b16 %v1947
  %v1968 = vunpack.c.h.b16 %v1947
  %v1969 = vunpack.c.l.b16 %v1948
  %v1970 = vunpack.c.h.b16 %v1948
  %v1971 = vunpack.c.l.b16 %v1949
  %v1972 = vunpack.c.h.b16 %v1949
  %v1973 = vunpack.c.l.b16 %v1950
  %v1974 = vunpack.c.h.b16 %v1950
  %v1975 = vpack.c.b16 %v1961, %v1959
  %v1976 = vpack.c.b16 %v1962, %v1960
  %v1977 = vpack.c.b16 %v1965, %v1963
  %v1978 = vpack.c.b16 %v1966, %v1964
  %v1979 = vpack.c.b16 %v1969, %v1967
  %v1980 = vpack.c.b16 %v1970, %v1968
  %v1981 = vpack.c.b16 %v1973, %v1971
  %v1982 = vpack.c.b16 %v1974, %v1972
  %v1992 = vsel %vm256, %v1942, 0
  %1994 = vmatpush.bf16.msra.mxu0 0
  %1995 = vmatpush.bf16.msra.mxu0 0
  %1996 = vmatpush.bf16.msra.mxu0 0
  %1997 = vmatpush.bf16.msra.mxu0 0
  %1998 = vmatpush.bf16.msra.mxu0 %v1981
  %1999 = vmatpush.bf16.msra.mxu0 %v1979
  %2000 = vmatpush.bf16.msra.mxu0 %v1977
  %2001 = vmatpush.bf16.msra.mxu0 %v1975
  %2002 = vmatmul.bf16.gmra.mxu0 %v1992
  %v2003 = vpop.f32.mrf.mxu0
  %v2004 = vadd.f32 0.0, %v2003
  %v2005 = vpop.f32.mrf.mxu0
  %2006 = vdwg.mxu0
  %2007 = vmatpush.bf16.msra.mxu0 0
  %2008 = vmatpush.bf16.msra.mxu0 0
  %2009 = vmatpush.bf16.msra.mxu0 0
  %2010 = vmatpush.bf16.msra.mxu0 0
  %2011 = vmatpush.bf16.msra.mxu0 %v1982
  %2012 = vmatpush.bf16.msra.mxu0 %v1980
  %2013 = vmatpush.bf16.msra.mxu0 %v1978
  %2014 = vmatpush.bf16.msra.mxu0 %v1976
  %2015 = vmatmul.bf16.gmra.mxu0 %v1992
  %v2016 = vpop.f32.mrf.mxu0
  %v2017 = vadd.f32 0.0, %v2016
  %v2018 = vpop.f32.mrf.mxu0
  %2019 = vdwg.mxu0
  %v2020 = vadd.f32 %v1940, %v2004
  %v2021 = vadd.f32 %v1941, %v2017
  %v2022 = vxor.u32 %v2020, 2147483648
  %v2023 = vxor.u32 %v2021, 2147483648
  %v2024 = vmul.f32 %v2022, 1.442695
  %v2025 = vpow.pop %v2024
  %v2026 = vmul.f32 %v2023, 1.442695
  %v2027 = vpow.pop %v2026
  %v2028 = vadd.f32 %v2025, 1.0
  %v2029 = vadd.f32 %v2027, 1.0
  %v2030 = vrcp.pop %v2028
  %v2031 = vmul.f32 %v2028, %v2030
  %v2032 = vsub.f32 1.0, %v2031
  %v2033 = vmul.f32 %v2030, %v2032
  %v2034 = vadd.f32 %v2030, %v2033
  %vm2035 = vweird.f32 %v2028
  %vm2036 = vweird.f32 %v2030
  %vm2037 = vmor %vm2035, %vm2036
  %v2038 = vsel %vm2037, %v2030, %v2034
  %v2039 = vand.u32 2147483647, %v2028
  %vm2040 = vcmp.eq.f32.partialorder %v2039, 8.507059e+37
  %v2041 = vand.u32 %v2028, 2147483648
  %v2042 = vor.u32 1.1754944e-38, %v2041
  %v2043 = vsel %vm2040, %v2042, %v2038
  %v2044 = vmul.f32 1.0, %v2043
  %v2045 = vrcp.pop %v2029
  %v2046 = vmul.f32 %v2029, %v2045
  %v2047 = vsub.f32 1.0, %v2046
  %v2048 = vmul.f32 %v2045, %v2047
  %v2049 = vadd.f32 %v2045, %v2048
  %vm2050 = vweird.f32 %v2029
  %vm2051 = vweird.f32 %v2045
  %vm2052 = vmor %vm2050, %vm2051
  %v2053 = vsel %vm2052, %v2045, %v2049
  %v2054 = vand.u32 2147483647, %v2029
  %vm2055 = vcmp.eq.f32.partialorder %v2054, 8.507059e+37
  %v2056 = vand.u32 %v2029, 2147483648
  %v2057 = vor.u32 1.1754944e-38, %v2056
  %v2058 = vsel %vm2055, %v2057, %v2053
  %v2059 = vmul.f32 1.0, %v2058
  %v2060 = vtanh.pop %v2021
  %v2061 = vmul.f32 %v2044, %v1927
  %2063 = vrot.lane.b32.xlu0 %v2060, 64
  %v2064 = vpop.permute.xlu0 %2063
  %v2066 = vmul.f32 %v2044, %v2064
  %2068 = vrot.lane.b32.xlu0 %v2066, 64
  %v2069 = vpop.permute.xlu0 %2068
  %v2071 = vadd.f32 %v2061, %v2069
  %v2072 = vtanh.pop %v2071
  %2074 = vrot.lane.b32.xlu0 %v2072, 64
  %v2075 = vpop.permute.xlu0 %2074
  %v2077 = vmul.f32 %v2059, %v2075
  %2078 = vst.msk [vmem:[#allocation3 + $0x18] sm:$0xff] %vm344, %v2077
  %2079 = vst.msk [vmem:[#allocation3 + $0x20] sm:$0xff] %vm346, %v2077
  %v2080 = vld [vmem:[#allocation2 + $0x40] sm:$0xff]
  %v2081 = vld [vmem:[#allocation2 + $0x48] sm:$0xff]
  %v2082 = vld [vmem:[#allocation2 + $0x30] sm:$0xff]
  %v2083 = vld [vmem:[#allocation2 + $0x38] sm:$0xff]
  %v2084 = vsel %vm82, %v2080, %v2082
  %v2085 = vsel %vm83, %v2081, %v2083
  %v2086 = vpack.c.bf16 %v2077, %v2077
  %v2087 = vld [vmem:[%s6] sm:$0xff]
  %v2088 = vld [vmem:[%s6 + $0x8] sm:$0xff]
  %v2089 = vld [vmem:[%s6 + $0x10] sm:$0xff]
  %v2090 = vld [vmem:[%s6 + $0x18] sm:$0xff]
  %v2091 = vld [vmem:[%s6 + $0x20] sm:$0xff]
  %v2092 = vld [vmem:[%s6 + $0x28] sm:$0xff]
  %v2093 = vld [vmem:[%s6 + $0x30] sm:$0xff]
  %v2094 = vld [vmem:[%s6 + $0x38] sm:$0xff]
  %v2103 = vunpack.c.l.b16 %v2087
  %v2104 = vunpack.c.h.b16 %v2087
  %v2105 = vunpack.c.l.b16 %v2088
  %v2106 = vunpack.c.h.b16 %v2088
  %v2107 = vunpack.c.l.b16 %v2089
  %v2108 = vunpack.c.h.b16 %v2089
  %v2109 = vunpack.c.l.b16 %v2090
  %v2110 = vunpack.c.h.b16 %v2090
  %v2111 = vunpack.c.l.b16 %v2091
  %v2112 = vunpack.c.h.b16 %v2091
  %v2113 = vunpack.c.l.b16 %v2092
  %v2114 = vunpack.c.h.b16 %v2092
  %v2115 = vunpack.c.l.b16 %v2093
  %v2116 = vunpack.c.h.b16 %v2093
  %v2117 = vunpack.c.l.b16 %v2094
  %v2118 = vunpack.c.h.b16 %v2094
  %v2119 = vpack.c.b16 %v2105, %v2103
  %v2120 = vpack.c.b16 %v2106, %v2104
  %v2121 = vpack.c.b16 %v2109, %v2107
  %v2122 = vpack.c.b16 %v2110, %v2108
  %v2123 = vpack.c.b16 %v2113, %v2111
  %v2124 = vpack.c.b16 %v2114, %v2112
  %v2125 = vpack.c.b16 %v2117, %v2115
  %v2126 = vpack.c.b16 %v2118, %v2116
  %v2136 = vsel %vm256, %v2086, 0
  %2138 = vmatpush.bf16.msra.mxu0 0
  %2139 = vmatpush.bf16.msra.mxu0 0
  %2140 = vmatpush.bf16.msra.mxu0 0
  %2141 = vmatpush.bf16.msra.mxu0 0
  %2142 = vmatpush.bf16.msra.mxu0 %v2125
  %2143 = vmatpush.bf16.msra.mxu0 %v2123
  %2144 = vmatpush.bf16.msra.mxu0 %v2121
  %2145 = vmatpush.bf16.msra.mxu0 %v2119
  %2146 = vmatmul.bf16.gmra.mxu0 %v2136
  %v2147 = vpop.f32.mrf.mxu0
  %v2148 = vadd.f32 0.0, %v2147
  %v2149 = vpop.f32.mrf.mxu0
  %2150 = vdwg.mxu0
  %2151 = vmatpush.bf16.msra.mxu0 0
  %2152 = vmatpush.bf16.msra.mxu0 0
  %2153 = vmatpush.bf16.msra.mxu0 0
  %2154 = vmatpush.bf16.msra.mxu0 0
  %2155 = vmatpush.bf16.msra.mxu0 %v2126
  %2156 = vmatpush.bf16.msra.mxu0 %v2124
  %2157 = vmatpush.bf16.msra.mxu0 %v2122
  %2158 = vmatpush.bf16.msra.mxu0 %v2120
  %2159 = vmatmul.bf16.gmra.mxu0 %v2136
  %v2160 = vpop.f32.mrf.mxu0
  %v2161 = vadd.f32 0.0, %v2160
  %v2162 = vpop.f32.mrf.mxu0
  %2163 = vdwg.mxu0
  %v2164 = vadd.f32 %v2084, %v2148
  %v2165 = vadd.f32 %v2085, %v2161
  %v2166 = vxor.u32 %v2164, 2147483648
  %v2167 = vxor.u32 %v2165, 2147483648
  %v2168 = vmul.f32 %v2166, 1.442695
  %v2169 = vpow.pop %v2168
  %v2170 = vmul.f32 %v2167, 1.442695
  %v2171 = vpow.pop %v2170
  %v2172 = vadd.f32 %v2169, 1.0
  %v2173 = vadd.f32 %v2171, 1.0
  %v2174 = vrcp.pop %v2172
  %v2175 = vmul.f32 %v2172, %v2174
  %v2176 = vsub.f32 1.0, %v2175
  %v2177 = vmul.f32 %v2174, %v2176
  %v2178 = vadd.f32 %v2174, %v2177
  %vm2179 = vweird.f32 %v2172
  %vm2180 = vweird.f32 %v2174
  %vm2181 = vmor %vm2179, %vm2180
  %v2182 = vsel %vm2181, %v2174, %v2178
  %v2183 = vand.u32 2147483647, %v2172
  %vm2184 = vcmp.eq.f32.partialorder %v2183, 8.507059e+37
  %v2185 = vand.u32 %v2172, 2147483648
  %v2186 = vor.u32 1.1754944e-38, %v2185
  %v2187 = vsel %vm2184, %v2186, %v2182
  %v2188 = vmul.f32 1.0, %v2187
  %v2189 = vrcp.pop %v2173
  %v2190 = vmul.f32 %v2173, %v2189
  %v2191 = vsub.f32 1.0, %v2190
  %v2192 = vmul.f32 %v2189, %v2191
  %v2193 = vadd.f32 %v2189, %v2192
  %vm2194 = vweird.f32 %v2173
  %vm2195 = vweird.f32 %v2189
  %vm2196 = vmor %vm2194, %vm2195
  %v2197 = vsel %vm2196, %v2189, %v2193
  %v2198 = vand.u32 2147483647, %v2173
  %vm2199 = vcmp.eq.f32.partialorder %v2198, 8.507059e+37
  %v2200 = vand.u32 %v2173, 2147483648
  %v2201 = vor.u32 1.1754944e-38, %v2200
  %v2202 = vsel %vm2199, %v2201, %v2197
  %v2203 = vmul.f32 1.0, %v2202
  %v2204 = vtanh.pop %v2165
  %v2205 = vmul.f32 %v2188, %v2071
  %2207 = vrot.lane.b32.xlu0 %v2204, 64
  %v2208 = vpop.permute.xlu0 %2207
  %v2210 = vmul.f32 %v2188, %v2208
  %2212 = vrot.lane.b32.xlu0 %v2210, 64
  %v2213 = vpop.permute.xlu0 %2212
  %v2215 = vadd.f32 %v2205, %v2213
  %v2216 = vtanh.pop %v2215
  %2218 = vrot.lane.b32.xlu0 %v2216, 64
  %v2219 = vpop.permute.xlu0 %2218
  %v2221 = vmul.f32 %v2203, %v2219
  %2222 = vst.msk [vmem:[#allocation3 + $0x20] sm:$0xff] %vm344, %v2221
  %2223 = vst.msk [vmem:[#allocation3 + $0x18] sm:$0xff] %vm346, %v2221
  %v2224 = vld [vmem:[#allocation2 + $0x50] sm:$0xff]
  %v2225 = vld [vmem:[#allocation2 + $0x58] sm:$0xff]
  %v2226 = vld [vmem:[#allocation2 + $0x20] sm:$0xff]
  %v2227 = vld [vmem:[#allocation2 + $0x28] sm:$0xff]
  %v2228 = vsel %vm82, %v2224, %v2226
  %v2229 = vsel %vm83, %v2225, %v2227
  %v2230 = vpack.c.bf16 %v2221, %v2221
  %v2231 = vld [vmem:[%s6] sm:$0xff]
  %v2232 = vld [vmem:[%s6 + $0x8] sm:$0xff]
  %v2233 = vld [vmem:[%s6 + $0x10] sm:$0xff]
  %v2234 = vld [vmem:[%s6 + $0x18] sm:$0xff]
  %v2235 = vld [vmem:[%s6 + $0x20] sm:$0xff]
  %v2236 = vld [vmem:[%s6 + $0x28] sm:$0xff]
  %v2237 = vld [vmem:[%s6 + $0x30] sm:$0xff]
  %v2238 = vld [vmem:[%s6 + $0x38] sm:$0xff]
  %v2247 = vunpack.c.l.b16 %v2231
  %v2248 = vunpack.c.h.b16 %v2231
  %v2249 = vunpack.c.l.b16 %v2232
  %v2250 = vunpack.c.h.b16 %v2232
  %v2251 = vunpack.c.l.b16 %v2233
  %v2252 = vunpack.c.h.b16 %v2233
  %v2253 = vunpack.c.l.b16 %v2234
  %v2254 = vunpack.c.h.b16 %v2234
  %v2255 = vunpack.c.l.b16 %v2235
  %v2256 = vunpack.c.h.b16 %v2235
  %v2257 = vunpack.c.l.b16 %v2236
  %v2258 = vunpack.c.h.b16 %v2236
  %v2259 = vunpack.c.l.b16 %v2237
  %v2260 = vunpack.c.h.b16 %v2237
  %v2261 = vunpack.c.l.b16 %v2238
  %v2262 = vunpack.c.h.b16 %v2238
  %v2263 = vpack.c.b16 %v2249, %v2247
  %v2264 = vpack.c.b16 %v2250, %v2248
  %v2265 = vpack.c.b16 %v2253, %v2251
  %v2266 = vpack.c.b16 %v2254, %v2252
  %v2267 = vpack.c.b16 %v2257, %v2255
  %v2268 = vpack.c.b16 %v2258, %v2256
  %v2269 = vpack.c.b16 %v2261, %v2259
  %v2270 = vpack.c.b16 %v2262, %v2260
  %v2280 = vsel %vm256, %v2230, 0
  %2282 = vmatpush.bf16.msra.mxu0 0
  %2283 = vmatpush.bf16.msra.mxu0 0
  %2284 = vmatpush.bf16.msra.mxu0 0
  %2285 = vmatpush.bf16.msra.mxu0 0
  %2286 = vmatpush.bf16.msra.mxu0 %v2269
  %2287 = vmatpush.bf16.msra.mxu0 %v2267
  %2288 = vmatpush.bf16.msra.mxu0 %v2265
  %2289 = vmatpush.bf16.msra.mxu0 %v2263
  %2290 = vmatmul.bf16.gmra.mxu0 %v2280
  %v2291 = vpop.f32.mrf.mxu0
  %v2292 = vadd.f32 0.0, %v2291
  %v2293 = vpop.f32.mrf.mxu0
  %2294 = vdwg.mxu0
  %2295 = vmatpush.bf16.msra.mxu0 0
  %2296 = vmatpush.bf16.msra.mxu0 0
  %2297 = vmatpush.bf16.msra.mxu0 0
  %2298 = vmatpush.bf16.msra.mxu0 0
  %2299 = vmatpush.bf16.msra.mxu0 %v2270
  %2300 = vmatpush.bf16.msra.mxu0 %v2268
  %2301 = vmatpush.bf16.msra.mxu0 %v2266
  %2302 = vmatpush.bf16.msra.mxu0 %v2264
  %2303 = vmatmul.bf16.gmra.mxu0 %v2280
  %v2304 = vpop.f32.mrf.mxu0
  %v2305 = vadd.f32 0.0, %v2304
  %v2306 = vpop.f32.mrf.mxu0
  %2307 = vdwg.mxu0
  %v2308 = vadd.f32 %v2228, %v2292
  %v2309 = vadd.f32 %v2229, %v2305
  %v2310 = vxor.u32 %v2308, 2147483648
  %v2311 = vxor.u32 %v2309, 2147483648
  %v2312 = vmul.f32 %v2310, 1.442695
  %v2313 = vpow.pop %v2312
  %v2314 = vmul.f32 %v2311, 1.442695
  %v2315 = vpow.pop %v2314
  %v2316 = vadd.f32 %v2313, 1.0
  %v2317 = vadd.f32 %v2315, 1.0
  %v2318 = vrcp.pop %v2316
  %v2319 = vmul.f32 %v2316, %v2318
  %v2320 = vsub.f32 1.0, %v2319
  %v2321 = vmul.f32 %v2318, %v2320
  %v2322 = vadd.f32 %v2318, %v2321
  %vm2323 = vweird.f32 %v2316
  %vm2324 = vweird.f32 %v2318
  %vm2325 = vmor %vm2323, %vm2324
  %v2326 = vsel %vm2325, %v2318, %v2322
  %v2327 = vand.u32 2147483647, %v2316
  %vm2328 = vcmp.eq.f32.partialorder %v2327, 8.507059e+37
  %v2329 = vand.u32 %v2316, 2147483648
  %v2330 = vor.u32 1.1754944e-38, %v2329
  %v2331 = vsel %vm2328, %v2330, %v2326
  %v2332 = vmul.f32 1.0, %v2331
  %v2333 = vrcp.pop %v2317
  %v2334 = vmul.f32 %v2317, %v2333
  %v2335 = vsub.f32 1.0, %v2334
  %v2336 = vmul.f32 %v2333, %v2335
  %v2337 = vadd.f32 %v2333, %v2336
  %vm2338 = vweird.f32 %v2317
  %vm2339 = vweird.f32 %v2333
  %vm2340 = vmor %vm2338, %vm2339
  %v2341 = vsel %vm2340, %v2333, %v2337
  %v2342 = vand.u32 2147483647, %v2317
  %vm2343 = vcmp.eq.f32.partialorder %v2342, 8.507059e+37
  %v2344 = vand.u32 %v2317, 2147483648
  %v2345 = vor.u32 1.1754944e-38, %v2344
  %v2346 = vsel %vm2343, %v2345, %v2341
  %v2347 = vmul.f32 1.0, %v2346
  %v2348 = vtanh.pop %v2309
  %v2349 = vmul.f32 %v2332, %v2215
  %2351 = vrot.lane.b32.xlu0 %v2348, 64
  %v2352 = vpop.permute.xlu0 %2351
  %v2354 = vmul.f32 %v2332, %v2352
  %2356 = vrot.lane.b32.xlu0 %v2354, 64
  %v2357 = vpop.permute.xlu0 %2356
  %v2359 = vadd.f32 %v2349, %v2357
  %v2360 = vtanh.pop %v2359
  %2362 = vrot.lane.b32.xlu0 %v2360, 64
  %v2363 = vpop.permute.xlu0 %2362
  %v2365 = vmul.f32 %v2347, %v2363
  %2366 = vst.msk [vmem:[#allocation3 + $0x28] sm:$0xff] %vm344, %v2365
  %2367 = vst.msk [vmem:[#allocation3 + $0x10] sm:$0xff] %vm346, %v2365
  %v2368 = vld [vmem:[#allocation2 + $0x60] sm:$0xff]
  %v2369 = vld [vmem:[#allocation2 + $0x68] sm:$0xff]
  %v2370 = vld [vmem:[#allocation2 + $0x10] sm:$0xff]
  %v2371 = vld [vmem:[#allocation2 + $0x18] sm:$0xff]
  %v2372 = vsel %vm82, %v2368, %v2370
  %v2373 = vsel %vm83, %v2369, %v2371
  %v2374 = vpack.c.bf16 %v2365, %v2365
  %v2375 = vld [vmem:[%s6] sm:$0xff]
  %v2376 = vld [vmem:[%s6 + $0x8] sm:$0xff]
  %v2377 = vld [vmem:[%s6 + $0x10] sm:$0xff]
  %v2378 = vld [vmem:[%s6 + $0x18] sm:$0xff]
  %v2379 = vld [vmem:[%s6 + $0x20] sm:$0xff]
  %v2380 = vld [vmem:[%s6 + $0x28] sm:$0xff]
  %v2381 = vld [vmem:[%s6 + $0x30] sm:$0xff]
  %v2382 = vld [vmem:[%s6 + $0x38] sm:$0xff]
  %v2391 = vunpack.c.l.b16 %v2375
  %v2392 = vunpack.c.h.b16 %v2375
  %v2393 = vunpack.c.l.b16 %v2376
  %v2394 = vunpack.c.h.b16 %v2376
  %v2395 = vunpack.c.l.b16 %v2377
  %v2396 = vunpack.c.h.b16 %v2377
  %v2397 = vunpack.c.l.b16 %v2378
  %v2398 = vunpack.c.h.b16 %v2378
  %v2399 = vunpack.c.l.b16 %v2379
  %v2400 = vunpack.c.h.b16 %v2379
  %v2401 = vunpack.c.l.b16 %v2380
  %v2402 = vunpack.c.h.b16 %v2380
  %v2403 = vunpack.c.l.b16 %v2381
  %v2404 = vunpack.c.h.b16 %v2381
  %v2405 = vunpack.c.l.b16 %v2382
  %v2406 = vunpack.c.h.b16 %v2382
  %v2407 = vpack.c.b16 %v2393, %v2391
  %v2408 = vpack.c.b16 %v2394, %v2392
  %v2409 = vpack.c.b16 %v2397, %v2395
  %v2410 = vpack.c.b16 %v2398, %v2396
  %v2411 = vpack.c.b16 %v2401, %v2399
  %v2412 = vpack.c.b16 %v2402, %v2400
  %v2413 = vpack.c.b16 %v2405, %v2403
  %v2414 = vpack.c.b16 %v2406, %v2404
  %v2424 = vsel %vm256, %v2374, 0
  %2426 = vmatpush.bf16.msra.mxu0 0
  %2427 = vmatpush.bf16.msra.mxu0 0
  %2428 = vmatpush.bf16.msra.mxu0 0
  %2429 = vmatpush.bf16.msra.mxu0 0
  %2430 = vmatpush.bf16.msra.mxu0 %v2413
  %2431 = vmatpush.bf16.msra.mxu0 %v2411
  %2432 = vmatpush.bf16.msra.mxu0 %v2409
  %2433 = vmatpush.bf16.msra.mxu0 %v2407
  %2434 = vmatmul.bf16.gmra.mxu0 %v2424
  %v2435 = vpop.f32.mrf.mxu0
  %v2436 = vadd.f32 0.0, %v2435
  %v2437 = vpop.f32.mrf.mxu0
  %2438 = vdwg.mxu0
  %2439 = vmatpush.bf16.msra.mxu0 0
  %2440 = vmatpush.bf16.msra.mxu0 0
  %2441 = vmatpush.bf16.msra.mxu0 0
  %2442 = vmatpush.bf16.msra.mxu0 0
  %2443 = vmatpush.bf16.msra.mxu0 %v2414
  %2444 = vmatpush.bf16.msra.mxu0 %v2412
  %2445 = vmatpush.bf16.msra.mxu0 %v2410
  %2446 = vmatpush.bf16.msra.mxu0 %v2408
  %2447 = vmatmul.bf16.gmra.mxu0 %v2424
  %v2448 = vpop.f32.mrf.mxu0
  %v2449 = vadd.f32 0.0, %v2448
  %v2450 = vpop.f32.mrf.mxu0
  %2451 = vdwg.mxu0
  %v2452 = vadd.f32 %v2372, %v2436
  %v2453 = vadd.f32 %v2373, %v2449
  %v2454 = vxor.u32 %v2452, 2147483648
  %v2455 = vxor.u32 %v2453, 2147483648
  %v2456 = vmul.f32 %v2454, 1.442695
  %v2457 = vpow.pop %v2456
  %v2458 = vmul.f32 %v2455, 1.442695
  %v2459 = vpow.pop %v2458
  %v2460 = vadd.f32 %v2457, 1.0
  %v2461 = vadd.f32 %v2459, 1.0
  %v2462 = vrcp.pop %v2460
  %v2463 = vmul.f32 %v2460, %v2462
  %v2464 = vsub.f32 1.0, %v2463
  %v2465 = vmul.f32 %v2462, %v2464
  %v2466 = vadd.f32 %v2462, %v2465
  %vm2467 = vweird.f32 %v2460
  %vm2468 = vweird.f32 %v2462
  %vm2469 = vmor %vm2467, %vm2468
  %v2470 = vsel %vm2469, %v2462, %v2466
  %v2471 = vand.u32 2147483647, %v2460
  %vm2472 = vcmp.eq.f32.partialorder %v2471, 8.507059e+37
  %v2473 = vand.u32 %v2460, 2147483648
  %v2474 = vor.u32 1.1754944e-38, %v2473
  %v2475 = vsel %vm2472, %v2474, %v2470
  %v2476 = vmul.f32 1.0, %v2475
  %v2477 = vrcp.pop %v2461
  %v2478 = vmul.f32 %v2461, %v2477
  %v2479 = vsub.f32 1.0, %v2478
  %v2480 = vmul.f32 %v2477, %v2479
  %v2481 = vadd.f32 %v2477, %v2480
  %vm2482 = vweird.f32 %v2461
  %vm2483 = vweird.f32 %v2477
  %vm2484 = vmor %vm2482, %vm2483
  %v2485 = vsel %vm2484, %v2477, %v2481
  %v2486 = vand.u32 2147483647, %v2461
  %vm2487 = vcmp.eq.f32.partialorder %v2486, 8.507059e+37
  %v2488 = vand.u32 %v2461, 2147483648
  %v2489 = vor.u32 1.1754944e-38, %v2488
  %v2490 = vsel %vm2487, %v2489, %v2485
  %v2491 = vmul.f32 1.0, %v2490
  %v2492 = vtanh.pop %v2453
  %v2493 = vmul.f32 %v2476, %v2359
  %2495 = vrot.lane.b32.xlu0 %v2492, 64
  %v2496 = vpop.permute.xlu0 %2495
  %v2498 = vmul.f32 %v2476, %v2496
  %2500 = vrot.lane.b32.xlu0 %v2498, 64
  %v2501 = vpop.permute.xlu0 %2500
  %v2503 = vadd.f32 %v2493, %v2501
  %v2504 = vtanh.pop %v2503
  %2506 = vrot.lane.b32.xlu0 %v2504, 64
  %v2507 = vpop.permute.xlu0 %2506
  %v2509 = vmul.f32 %v2491, %v2507
  %2510 = vst.msk [vmem:[#allocation3 + $0x30] sm:$0xff] %vm344, %v2509
  %2511 = vst.msk [vmem:[#allocation3 + $0x8] sm:$0xff] %vm346, %v2509
  %v2512 = vld [vmem:[#allocation2 + $0x70] sm:$0xff]
  %v2513 = vld [vmem:[#allocation2 + $0x78] sm:$0xff]
  %v2514 = vld [vmem:[#allocation2] sm:$0xff]
  %v2515 = vld [vmem:[#allocation2 + $0x8] sm:$0xff]
  %v2516 = vsel %vm82, %v2512, %v2514
  %v2517 = vsel %vm83, %v2513, %v2515
  %v2518 = vpack.c.bf16 %v2509, %v2509
  %v2519 = vld [vmem:[%s6] sm:$0xff]
  %v2520 = vld [vmem:[%s6 + $0x8] sm:$0xff]
  %v2521 = vld [vmem:[%s6 + $0x10] sm:$0xff]
  %v2522 = vld [vmem:[%s6 + $0x18] sm:$0xff]
  %v2523 = vld [vmem:[%s6 + $0x20] sm:$0xff]
  %v2524 = vld [vmem:[%s6 + $0x28] sm:$0xff]
  %v2525 = vld [vmem:[%s6 + $0x30] sm:$0xff]
  %v2526 = vld [vmem:[%s6 + $0x38] sm:$0xff]
  %v2535 = vunpack.c.l.b16 %v2519
  %v2536 = vunpack.c.h.b16 %v2519
  %v2537 = vunpack.c.l.b16 %v2520
  %v2538 = vunpack.c.h.b16 %v2520
  %v2539 = vunpack.c.l.b16 %v2521
  %v2540 = vunpack.c.h.b16 %v2521
  %v2541 = vunpack.c.l.b16 %v2522
  %v2542 = vunpack.c.h.b16 %v2522
  %v2543 = vunpack.c.l.b16 %v2523
  %v2544 = vunpack.c.h.b16 %v2523
  %v2545 = vunpack.c.l.b16 %v2524
  %v2546 = vunpack.c.h.b16 %v2524
  %v2547 = vunpack.c.l.b16 %v2525
  %v2548 = vunpack.c.h.b16 %v2525
  %v2549 = vunpack.c.l.b16 %v2526
  %v2550 = vunpack.c.h.b16 %v2526
  %v2551 = vpack.c.b16 %v2537, %v2535
  %v2552 = vpack.c.b16 %v2538, %v2536
  %v2553 = vpack.c.b16 %v2541, %v2539
  %v2554 = vpack.c.b16 %v2542, %v2540
  %v2555 = vpack.c.b16 %v2545, %v2543
  %v2556 = vpack.c.b16 %v2546, %v2544
  %v2557 = vpack.c.b16 %v2549, %v2547
  %v2558 = vpack.c.b16 %v2550, %v2548
  %v2568 = vsel %vm256, %v2518, 0
  %2570 = vmatpush.bf16.msra.mxu0 0
  %2571 = vmatpush.bf16.msra.mxu0 0
  %2572 = vmatpush.bf16.msra.mxu0 0
  %2573 = vmatpush.bf16.msra.mxu0 0
  %2574 = vmatpush.bf16.msra.mxu0 %v2557
  %2575 = vmatpush.bf16.msra.mxu0 %v2555
  %2576 = vmatpush.bf16.msra.mxu0 %v2553
  %2577 = vmatpush.bf16.msra.mxu0 %v2551
  %2578 = vmatmul.bf16.gmra.mxu0 %v2568
  %v2579 = vpop.f32.mrf.mxu0
  %v2580 = vadd.f32 0.0, %v2579
  %v2581 = vpop.f32.mrf.mxu0
  %2582 = vdwg.mxu0
  %2583 = vmatpush.bf16.msra.mxu0 0
  %2584 = vmatpush.bf16.msra.mxu0 0
  %2585 = vmatpush.bf16.msra.mxu0 0
  %2586 = vmatpush.bf16.msra.mxu0 0
  %2587 = vmatpush.bf16.msra.mxu0 %v2558
  %2588 = vmatpush.bf16.msra.mxu0 %v2556
  %2589 = vmatpush.bf16.msra.mxu0 %v2554
  %2590 = vmatpush.bf16.msra.mxu0 %v2552
  %2591 = vmatmul.bf16.gmra.mxu0 %v2568
  %v2592 = vpop.f32.mrf.mxu0
  %v2593 = vadd.f32 0.0, %v2592
  %v2594 = vpop.f32.mrf.mxu0
  %2595 = vdwg.mxu0
  %v2596 = vadd.f32 %v2516, %v2580
  %v2597 = vadd.f32 %v2517, %v2593
  %v2598 = vxor.u32 %v2596, 2147483648
  %v2599 = vxor.u32 %v2597, 2147483648
  %v2600 = vmul.f32 %v2598, 1.442695
  %v2601 = vpow.pop %v2600
  %v2602 = vmul.f32 %v2599, 1.442695
  %v2603 = vpow.pop %v2602
  %v2604 = vadd.f32 %v2601, 1.0
  %v2605 = vadd.f32 %v2603, 1.0
  %v2606 = vrcp.pop %v2604
  %v2607 = vmul.f32 %v2604, %v2606
  %v2608 = vsub.f32 1.0, %v2607
  %v2609 = vmul.f32 %v2606, %v2608
  %v2610 = vadd.f32 %v2606, %v2609
  %vm2611 = vweird.f32 %v2604
  %vm2612 = vweird.f32 %v2606
  %vm2613 = vmor %vm2611, %vm2612
  %v2614 = vsel %vm2613, %v2606, %v2610
  %v2615 = vand.u32 2147483647, %v2604
  %vm2616 = vcmp.eq.f32.partialorder %v2615, 8.507059e+37
  %v2617 = vand.u32 %v2604, 2147483648
  %v2618 = vor.u32 1.1754944e-38, %v2617
  %v2619 = vsel %vm2616, %v2618, %v2614
  %v2620 = vmul.f32 1.0, %v2619
  %v2621 = vrcp.pop %v2605
  %v2622 = vmul.f32 %v2605, %v2621
  %v2623 = vsub.f32 1.0, %v2622
  %v2624 = vmul.f32 %v2621, %v2623
  %v2625 = vadd.f32 %v2621, %v2624
  %vm2626 = vweird.f32 %v2605
  %vm2627 = vweird.f32 %v2621
  %vm2628 = vmor %vm2626, %vm2627
  %v2629 = vsel %vm2628, %v2621, %v2625
  %v2630 = vand.u32 2147483647, %v2605
  %vm2631 = vcmp.eq.f32.partialorder %v2630, 8.507059e+37
  %v2632 = vand.u32 %v2605, 2147483648
  %v2633 = vor.u32 1.1754944e-38, %v2632
  %v2634 = vsel %vm2631, %v2633, %v2629
  %v2635 = vmul.f32 1.0, %v2634
  %v2636 = vtanh.pop %v2597
  %v2637 = vmul.f32 %v2620, %v2503
  %2639 = vrot.lane.b32.xlu0 %v2636, 64
  %v2640 = vpop.permute.xlu0 %2639
  %v2642 = vmul.f32 %v2620, %v2640
  %2644 = vrot.lane.b32.xlu0 %v2642, 64
  %v2645 = vpop.permute.xlu0 %2644
  %v2647 = vadd.f32 %v2637, %v2645
  %v2648 = vtanh.pop %v2647
  %2650 = vrot.lane.b32.xlu0 %v2648, 64
  %v2651 = vpop.permute.xlu0 %2650
  %v2653 = vmul.f32 %v2635, %v2651
  %2654 = vst.msk [vmem:[#allocation3 + $0x38] sm:$0xff] %vm344, %v2653
  %2655 = vst.msk [vmem:[#allocation3] sm:$0xff] %vm346, %v2653
  %v2656 = vld [vmem:[#allocation3] sm:$0xff]
  %v2657 = vld [vmem:[#allocation3 + $0x8] sm:$0xff]
  %v2658 = vld [vmem:[#allocation3 + $0x10] sm:$0xff]
  %v2659 = vld [vmem:[#allocation3 + $0x18] sm:$0xff]
  %v2660 = vld [vmem:[#allocation3 + $0x20] sm:$0xff]
  %v2661 = vld [vmem:[#allocation3 + $0x28] sm:$0xff]
  %v2662 = vld [vmem:[#allocation3 + $0x30] sm:$0xff]
  %v2663 = vld [vmem:[#allocation3 + $0x38] sm:$0xff]
  %v2664 = vpack.c.bf16 %v2657, %v2656
  %v2665 = vpack.c.bf16 %v2659, %v2658
  %v2666 = vpack.c.bf16 %v2661, %v2660
  %v2667 = vpack.c.bf16 %v2663, %v2662
  %v2668 = vld [vmem:[%s7] sm:$0xf]
  %v2669 = vld [vmem:[%s7 + $0x4] sm:$0xf]
  %v2670 = vld [vmem:[%s7 + $0x8] sm:$0xf]
  %v2671 = vld [vmem:[%s7 + $0xc] sm:$0xf]
  %v2672 = vld [vmem:[%s7 + $0x10] sm:$0xf]
  %v2673 = vld [vmem:[%s7 + $0x14] sm:$0xf]
  %v2674 = vld [vmem:[%s7 + $0x18] sm:$0xf]
  %v2675 = vld [vmem:[%s7 + $0x1c] sm:$0xf]
  %v2676 = vld [vmem:[#allocation4] sm:$0x1]
  %v2678 = vperm.slane %v2676, 0
  %v2688 = vunpack.c.l.b16 %v2668
  %v2689 = vunpack.c.l.b16 %v2669
  %v2690 = vunpack.c.l.b16 %v2670
  %v2691 = vunpack.c.l.b16 %v2671
  %v2692 = vunpack.c.l.b16 %v2672
  %v2693 = vunpack.c.l.b16 %v2673
  %v2694 = vunpack.c.l.b16 %v2674
  %v2695 = vunpack.c.l.b16 %v2675
  %v2696 = vpack.c.b16 %v2689, %v2688
  %v2697 = vpack.c.b16 %v2691, %v2690
  %v2698 = vpack.c.b16 %v2693, %v2692
  %v2699 = vpack.c.b16 %v2695, %v2694
  %v2705 = vsel %vm256, %v2664, 0
  %v2708 = vsel %vm256, %v2665, 0
  %v2711 = vsel %vm256, %v2666, 0
  %v2714 = vsel %vm256, %v2667, 0
  %2716 = vmatpush.bf16.msra.mxu0 0
  %2717 = vmatpush.bf16.msra.mxu0 0
  %2718 = vmatpush.bf16.msra.mxu0 0
  %2719 = vmatpush.bf16.msra.mxu0 0
  %2720 = vmatpush.bf16.msra.mxu0 %v2699
  %2721 = vmatpush.bf16.msra.mxu0 %v2698
  %2722 = vmatpush.bf16.msra.mxu0 %v2697
  %2723 = vmatpush.bf16.msra.mxu0 %v2696
  %2724 = vmatmul.bf16.gmra.mxu0 %v2705
  %v2725 = vpop.f32.mrf.mxu0
  %v2726 = vadd.f32 %v2678, %v2725
  %v2727 = vpop.f32.mrf.mxu0
  %v2728 = vadd.f32 %v2678, %v2727
  %2729 = vmatmul.bf16.gmra.mxu0 %v2708
  %v2730 = vpop.f32.mrf.mxu0
  %v2731 = vadd.f32 %v2678, %v2730
  %v2732 = vpop.f32.mrf.mxu0
  %v2733 = vadd.f32 %v2678, %v2732
  %2734 = vmatmul.bf16.gmra.mxu0 %v2711
  %v2735 = vpop.f32.mrf.mxu0
  %v2736 = vadd.f32 %v2678, %v2735
  %v2737 = vpop.f32.mrf.mxu0
  %v2738 = vadd.f32 %v2678, %v2737
  %2739 = vmatmul.bf16.gmra.mxu0 %v2714
  %v2740 = vpop.f32.mrf.mxu0
  %v2741 = vadd.f32 %v2678, %v2740
  %v2742 = vpop.f32.mrf.mxu0
  %v2743 = vadd.f32 %v2678, %v2742
  %2744 = vdwg.mxu0
  %v2745 = vmax.f32 %v2726, %v2728
  %v2746 = vmax.f32 %v2745, %v2731
  %v2747 = vmax.f32 %v2746, %v2733
  %v2748 = vmax.f32 %v2747, %v2736
  %v2749 = vmax.f32 %v2748, %v2738
  %v2750 = vmax.f32 %v2749, %v2741
  %v2751 = vmax.f32 %v2750, %v2743
  %v2752 = vsub.f32 %v2726, %v2751
  %v2753 = vmul.f32 %v2752, 1.442695
  %v2754 = vpow.pop %v2753
  %v2755 = vsub.f32 %v2728, %v2751
  %v2756 = vmul.f32 %v2755, 1.442695
  %v2757 = vpow.pop %v2756
  %v2758 = vsub.f32 %v2731, %v2751
  %v2759 = vmul.f32 %v2758, 1.442695
  %v2760 = vpow.pop %v2759
  %v2761 = vsub.f32 %v2733, %v2751
  %v2762 = vmul.f32 %v2761, 1.442695
  %v2763 = vpow.pop %v2762
  %v2764 = vsub.f32 %v2736, %v2751
  %v2765 = vmul.f32 %v2764, 1.442695
  %v2766 = vpow.pop %v2765
  %v2767 = vsub.f32 %v2738, %v2751
  %v2768 = vmul.f32 %v2767, 1.442695
  %v2769 = vpow.pop %v2768
  %v2770 = vsub.f32 %v2741, %v2751
  %v2771 = vmul.f32 %v2770, 1.442695
  %v2772 = vpow.pop %v2771
  %v2773 = vsub.f32 %v2743, %v2751
  %v2774 = vmul.f32 %v2773, 1.442695
  %v2775 = vpow.pop %v2774
  %v2776 = vadd.f32 %v2754, %v2757
  %v2777 = vadd.f32 %v2776, %v2760
  %v2778 = vadd.f32 %v2777, %v2763
  %v2779 = vadd.f32 %v2778, %v2766
  %v2780 = vadd.f32 %v2779, %v2769
  %v2781 = vadd.f32 %v2780, %v2772
  %v2782 = vadd.f32 %v2781, %v2775
  %v2783 = vrcp.pop %v2782
  %v2784 = vmul.f32 %v2754, %v2783
  %2786 = vset.pattern.permute.xlu0 0
  %2787 = vperm.xlu0 %2786, %v2784
  %v2788 = vpop.permute.xlu0 %2787
  %v2790 = vmul.f32 %v2788, %v2656
  %v2791 = vmul.f32 %v2757, %v2783
  %2793 = vset.pattern.permute.xlu0 0
  %2794 = vperm.xlu0 %2793, %v2791
  %v2795 = vpop.permute.xlu0 %2794
  %v2797 = vmul.f32 %v2795, %v2657
  %v2798 = vadd.f32 %v2790, %v2797
  %v2799 = vmul.f32 %v2760, %v2783
  %2801 = vset.pattern.permute.xlu0 0
  %2802 = vperm.xlu0 %2801, %v2799
  %v2803 = vpop.permute.xlu0 %2802
  %v2805 = vmul.f32 %v2803, %v2658
  %v2806 = vadd.f32 %v2798, %v2805
  %v2807 = vmul.f32 %v2763, %v2783
  %2809 = vset.pattern.permute.xlu0 0
  %2810 = vperm.xlu0 %2809, %v2807
  %v2811 = vpop.permute.xlu0 %2810
  %v2813 = vmul.f32 %v2811, %v2659
  %v2814 = vadd.f32 %v2806, %v2813
  %v2815 = vmul.f32 %v2766, %v2783
  %2817 = vset.pattern.permute.xlu0 0
  %2818 = vperm.xlu0 %2817, %v2815
  %v2819 = vpop.permute.xlu0 %2818
  %v2821 = vmul.f32 %v2819, %v2660
  %v2822 = vadd.f32 %v2814, %v2821
  %v2823 = vmul.f32 %v2769, %v2783
  %2825 = vset.pattern.permute.xlu0 0
  %2826 = vperm.xlu0 %2825, %v2823
  %v2827 = vpop.permute.xlu0 %2826
  %v2829 = vmul.f32 %v2827, %v2661
  %v2830 = vadd.f32 %v2822, %v2829
  %v2831 = vmul.f32 %v2772, %v2783
  %2833 = vset.pattern.permute.xlu0 0
  %2834 = vperm.xlu0 %2833, %v2831
  %v2835 = vpop.permute.xlu0 %2834
  %v2837 = vmul.f32 %v2835, %v2662
  %v2838 = vadd.f32 %v2830, %v2837
  %v2839 = vmul.f32 %v2775, %v2783
  %2841 = vset.pattern.permute.xlu0 0
  %2842 = vperm.xlu0 %2841, %v2839
  %v2843 = vpop.permute.xlu0 %2842
  %v2845 = vmul.f32 %v2843, %v2663
  %v2846 = vadd.f32 %v2838, %v2845
  %v2847 = vpack.c.bf16 %v2846, %v2846
  %v2848 = vld [vmem:[%s9] sm:$0xf]
  %v2849 = vld [vmem:[%s9 + $0x4] sm:$0xf]
  %v2850 = vld [vmem:[%s9 + $0x8] sm:$0xf]
  %v2851 = vld [vmem:[%s9 + $0xc] sm:$0xf]
  %v2852 = vld [vmem:[%s9 + $0x10] sm:$0xf]
  %v2853 = vld [vmem:[%s9 + $0x14] sm:$0xf]
  %v2854 = vld [vmem:[%s9 + $0x18] sm:$0xf]
  %v2855 = vld [vmem:[%s9 + $0x1c] sm:$0xf]
  %v2856 = vld [vmem:[%s10] sm:$0x1]
  %v2858 = vperm.slane %v2856, 0
  %v2868 = vunpack.c.l.b16 %v2848
  %v2869 = vunpack.c.l.b16 %v2849
  %v2870 = vunpack.c.l.b16 %v2850
  %v2871 = vunpack.c.l.b16 %v2851
  %v2872 = vunpack.c.l.b16 %v2852
  %v2873 = vunpack.c.l.b16 %v2853
  %v2874 = vunpack.c.l.b16 %v2854
  %v2875 = vunpack.c.l.b16 %v2855
  %v2876 = vpack.c.b16 %v2869, %v2868
  %v2877 = vpack.c.b16 %v2871, %v2870
  %v2878 = vpack.c.b16 %v2873, %v2872
  %v2879 = vpack.c.b16 %v2875, %v2874
  %v2885 = vsel %vm256, %v2847, 0
  %2887 = vmatpush.bf16.msra.mxu0 0
  %2888 = vmatpush.bf16.msra.mxu0 0
  %2889 = vmatpush.bf16.msra.mxu0 0
  %2890 = vmatpush.bf16.msra.mxu0 0
  %2891 = vmatpush.bf16.msra.mxu0 %v2879
  %2892 = vmatpush.bf16.msra.mxu0 %v2878
  %2893 = vmatpush.bf16.msra.mxu0 %v2877
  %2894 = vmatpush.bf16.msra.mxu0 %v2876
  %2895 = vmatmul.bf16.gmra.mxu0 %v2885
  %v2896 = vpop.f32.mrf.mxu0
  %v2897 = vadd.f32 %v2858, %v2896
  %v2898 = vpop.f32.mrf.mxu0
  %2899 = vdwg.mxu0
  %v2900 = vmax.f32 %v2897, 0.0
  %v2901 = vpack.c.bf16 %v2900, %v2900
  %v2902 = vld [vmem:[%s11] sm:$0xf]
  %v2903 = vld [vmem:[%s11 + $0x4] sm:$0xf]
  %v2904 = vld [vmem:[%s11 + $0x8] sm:$0xf]
  %v2905 = vld [vmem:[%s11 + $0xc] sm:$0xf]
  %v2906 = vld [vmem:[%s12] sm:$0x1]
  %v2908 = vperm.slane %v2906, 0
  %v2914 = vunpack.c.l.b16 %v2902
  %v2915 = vunpack.c.l.b16 %v2903
  %v2916 = vunpack.c.l.b16 %v2904
  %v2917 = vunpack.c.l.b16 %v2905
  %v2918 = vpack.c.b16 %v2915, %v2914
  %v2919 = vpack.c.b16 %v2917, %v2916
  %v2923 = vsel %vm344, %v2901, 0
  %2925 = vmatpush.bf16.msra.mxu0 0
  %2926 = vmatpush.bf16.msra.mxu0 0
  %2927 = vmatpush.bf16.msra.mxu0 0
  %2928 = vmatpush.bf16.msra.mxu0 0
  %2929 = vmatpush.bf16.msra.mxu0 0
  %2930 = vmatpush.bf16.msra.mxu0 0
  %2931 = vmatpush.bf16.msra.mxu0 %v2919
  %2932 = vmatpush.bf16.msra.mxu0 %v2918
  %2933 = vmatmul.bf16.gmra.mxu0 %v2923
  %v2934 = vpop.f32.mrf.mxu0
  %v2935 = vadd.f32 %v2908, %v2934
  %v2936 = vpop.f32.mrf.mxu0
  %2937 = vdwg.mxu0
  %v2938 = vmax.f32 %v2935, 0.0
  %v2939 = vpack.c.bf16 %v2938, %v2938
  %v2940 = vld [vmem:[%s13] sm:$0xf]
  %v2941 = vld [vmem:[%s13 + $0x4] sm:$0xf]
  %v2942 = vld [vmem:[%s13 + $0x8] sm:$0xf]
  %v2943 = vld [vmem:[%s13 + $0xc] sm:$0xf]
  %v2944 = vld [vmem:[#allocation5] sm:$0x1]
  %v2946 = vperm.slane %v2944, 0
  %v2952 = vunpack.c.l.b16 %v2940
  %v2953 = vunpack.c.l.b16 %v2941
  %v2954 = vunpack.c.l.b16 %v2942
  %v2955 = vunpack.c.l.b16 %v2943
  %v2956 = vpack.c.b16 %v2953, %v2952
  %v2957 = vpack.c.b16 %v2955, %v2954
  %v2961 = vsel %vm344, %v2939, 0
  %2963 = vmatpush.bf16.msra.mxu0 0
  %2964 = vmatpush.bf16.msra.mxu0 0
  %2965 = vmatpush.bf16.msra.mxu0 0
  %2966 = vmatpush.bf16.msra.mxu0 0
  %2967 = vmatpush.bf16.msra.mxu0 0
  %2968 = vmatpush.bf16.msra.mxu0 0
  %2969 = vmatpush.bf16.msra.mxu0 %v2957
  %2970 = vmatpush.bf16.msra.mxu0 %v2956
  %2971 = vmatmul.bf16.gmra.mxu0 %v2961
  %v2972 = vpop.f32.mrf.mxu0
  %v2973 = vadd.f32 %v2946, %v2972
  %v2974 = vpop.f32.mrf.mxu0
  %2975 = vdwg.mxu0
  %v2976 = vxor.u32 %v2973, 2147483648
  %v2977 = vmul.f32 %v2976, 1.442695
  %v2978 = vpow.pop %v2977
  %v2979 = vadd.f32 %v2978, 1.0
  %v2980 = vrcp.pop %v2979
  %v2981 = vmul.f32 %v2979, %v2980
  %v2982 = vsub.f32 1.0, %v2981
  %v2983 = vmul.f32 %v2980, %v2982
  %v2984 = vadd.f32 %v2980, %v2983
  %vm2985 = vweird.f32 %v2979
  %vm2986 = vweird.f32 %v2980
  %vm2987 = vmor %vm2985, %vm2986
  %v2988 = vsel %vm2987, %v2980, %v2984
  %v2989 = vand.u32 2147483647, %v2979
  %vm2990 = vcmp.eq.f32.partialorder %v2989, 8.507059e+37
  %v2991 = vand.u32 %v2979, 2147483648
  %v2992 = vor.u32 1.1754944e-38, %v2991
  %v2993 = vsel %vm2990, %v2992, %v2988
  %v2994 = vmul.f32 1.0, %v2993
  %vm2995 = vcmask 7168
  %2996 = vst.msk [vmem:[%s15] sm:$0xff] %vm2995, %v2994
  // Predicated region
  $region62: #{lstm_network_forward.1} parent=0 // pred_check
    _
  $region63: #{lstm_network_forward.1} parent=0 // pred_check_branch
    %2998 = sbr.rel (0) target = $region65
  $region64: #{lstm_network_forward.1} parent=0 // pred_region
    _
  $region65: #{lstm_network_forward.1} parent=0 // pred_fallthru
    _
  // Predicated region
  $region66: #{lstm_network_forward.1} parent=0 // pred_check
    _
  $region67: #{lstm_network_forward.1} parent=0 // pred_check_branch
    %3000 = sbr.rel (0) target = $region69
  $region68: #{lstm_network_forward.1} parent=0 // pred_region
    _
  $region69: #{lstm_network_forward.1} parent=0 // pred_fallthru
    _

</llo_original>
